<compile_context>
chip_gen: v7x
topology: tpu7x:2x2x1
jax: 0.10.0
libtpu: 0.0.40
codegen_flags: <defaults>
</compile_context>

<pallas_src>
import jax
import jax.numpy as jnp
from jax.experimental import pallas as pl
from jax.experimental.pallas import tpu as pltpu

LN_EPS = 1e-12

# ----------------------------- small model config -----------------------------
VOCAB = 100
VOCAB_PAD = 128      # lane-dense padded vocab for the one-hot embedding matmul
MAX_POS = 32
HIDDEN = 32          # stands in for 768
NUM_HEADS = 2
HEAD_DIM = HIDDEN // NUM_HEADS
FFN = 64
NUM_LAYERS = 2
NUM_LABELS = 21
LOGIT_PAD = 128      # lane-dense padded logits width (sliced to 21 outside)
BATCH = 2
SEQ = 8


# ------------------------------- in-kernel helpers -----------------------------
def _layernorm(x, gamma, beta):
    mu = jnp.mean(x, axis=-1, keepdims=True)
    var = jnp.mean((x - mu) ** 2, axis=-1, keepdims=True)
    return (x - mu) * jax.lax.rsqrt(var + LN_EPS) * gamma + beta


def _gelu(x):
    # TODO(synk): HF BERT default is exact erf-GELU; tanh approximation used here.
    return 0.5 * x * (1.0 + jnp.tanh(0.7978845608028654 * (x + 0.044715 * x * x * x)))


def _encoder_block(x, wqkv, bqkv, wo_h, bo, g1, b1, wi, bi, wf, bf, g2, b2):
    """One BERT encoder layer on one sequence. x: (SEQ, H) f32; weights bf16."""
    xb = x.astype(jnp.bfloat16)

    # Fused QKV projection (attention scale already folded into the Q columns).
    qkv = jnp.dot(xb, wqkv, preferred_element_type=jnp.float32) + bqkv      # (S, 3H)

    # One relayout per layer: (S, 3H) -> (S, 3*NH, HD) -> (3*NH, S, HD).
    qkvh = qkv.reshape(SEQ, 3 * NUM_HEADS, HEAD_DIM)
    qkvh = pltpu.einshape("shd->hsd", qkvh)                                  # (3*NH, S, HD)
    qh = qkvh[0:NUM_HEADS].astype(jnp.bfloat16)                              # (NH, S, HD)
    kh = qkvh[NUM_HEADS:2 * NUM_HEADS].astype(jnp.bfloat16)
    vh = qkvh[2 * NUM_HEADS:3 * NUM_HEADS].astype(jnp.bfloat16)

    # Single batched contraction for all heads (heads in the batch dim).
    scores = jnp.einsum('hqd,hkd->hqk', qh, kh,
                        preferred_element_type=jnp.float32)                 # (NH, S, S)
    scores = scores - jnp.max(scores, axis=-1, keepdims=True)
    p = jnp.exp(scores)
    p = p * pl.reciprocal(jnp.sum(p, axis=-1, keepdims=True), approx=True)
    ctx = jnp.einsum('hqk,hkd->hqd', p.astype(jnp.bfloat16), vh,
                     preferred_element_type=jnp.float32)                    # (NH, S, HD)

    # Output projection as a sum of per-head matmuls (no lane concat).
    attn = jnp.einsum('hqd,hdo->hqo', ctx.astype(jnp.bfloat16), wo_h,
                      preferred_element_type=jnp.float32)                   # (NH, S, H)
    attn = jnp.sum(attn, axis=0) + bo                                       # (S, H)
    h1 = _layernorm(x + attn, g1, b1)

    ff = _gelu(jnp.dot(h1.astype(jnp.bfloat16), wi,
                       preferred_element_type=jnp.float32) + bi)
    ff = jnp.dot(ff.astype(jnp.bfloat16), wf,
                 preferred_element_type=jnp.float32) + bf
    return _layernorm(h1 + ff, g2, b2)


# ------------------------------- fused kernel ----------------------------------
def fused_forward_kernel(ids_ref, wemb_ref, semb_ref, eg_ref, eb_ref,
                         wqkv_ref, bqkv_ref, woh_ref, bo_ref, g1_ref, b1_ref,
                         wi_ref, bi_ref, wf_ref, bf_ref, g2_ref, b2_ref,
                         wp_ref, bp_ref, wc_ref, bc_ref, o_ref):
    # --- embedding gather as a one-hot MXU matmul: (S, 128) @ (128, H) ---
    ids = ids_ref[0]                                                  # (SEQ, 1) i32
    vocab_iota = jax.lax.broadcasted_iota(jnp.int32, (SEQ, VOCAB_PAD), 1)
    one_hot = (vocab_iota == ids).astype(jnp.bfloat16)
    emb = jnp.dot(one_hot, wemb_ref[...],
                  preferred_element_type=jnp.float32) + semb_ref[...]  # (SEQ, H)
    x = _layernorm(emb, eg_ref[...], eb_ref[...])

    # --- encoder layers (static unroll over stacked bf16 weights) ---
    # TODO(synk): no attention mask (module is called with input_ids only);
    # token-type embedding always uses segment 0.
    for l in range(NUM_LAYERS):
        x = _encoder_block(x,
                           wqkv_ref[l], bqkv_ref[l],
                           woh_ref[l], bo_ref[l], g1_ref[l], b1_ref[l],
                           wi_ref[l], bi_ref[l], wf_ref[l], bf_ref[l],
                           g2_ref[l], b2_ref[l])

    # --- pooler + classifier on all rows (row 0 = [CLS]); lane-dense store ---
    pooled = jnp.tanh(jnp.dot(x.astype(jnp.bfloat16), wp_ref[...],
                              preferred_element_type=jnp.float32) + bp_ref[...])
    logits = jnp.dot(pooled.astype(jnp.bfloat16), wc_ref[...],
                     preferred_element_type=jnp.float32) + bc_ref[...]   # (SEQ, 128)
    o_ref[0] = logits                                                    # unmasked vst


# ------------------------------ pallas_call wrapper -----------------------------
def _const_spec(shape):
    nd = len(shape)
    return pl.BlockSpec(shape, lambda b: (0,) * nd)


@jax.jit
def forward(params, input_ids):
    ids3 = input_ids.reshape(BATCH, SEQ, 1).astype(jnp.int32)

    # Position + token-type embedding slab (same for every batch element).
    static_emb = (params['pos_emb'][:SEQ]
                  + params['tok_type_emb'][0][None, :]).astype(jnp.float32)  # (SEQ, H)

    # Fold 1/sqrt(HEAD_DIM) into the Q columns of the fused QKV weight + bias.
    scale = 1.0 / (HEAD_DIM ** 0.5)
    qkv_scale = jnp.concatenate([jnp.full((HIDDEN,), scale, jnp.float32),
                                 jnp.ones((2 * HIDDEN,), jnp.float32)])
    wqkv = (params['wqkv'] * qkv_scale).astype(jnp.bfloat16)
    bqkv = params['bqkv'] * qkv_scale                                  # f32

    # Pre-cast dense weights to bf16 once; pad vocab / logits to 128 lanes.
    wemb_pad = jnp.pad(params['word_emb'],
                       ((0, VOCAB_PAD - VOCAB), (0, 0))).astype(jnp.bfloat16)
    wo_heads = params['wo'].reshape(NUM_LAYERS, NUM_HEADS,
                                    HEAD_DIM, HIDDEN).astype(jnp.bfloat16)
    wi = params['wi'].astype(jnp.bfloat16)
    wf = params['wf'].astype(jnp.bfloat16)
    wp = params['wp'].astype(jnp.bfloat16)
    wc_pad = jnp.pad(params['wc'],
                     ((0, 0), (0, LOGIT_PAD - NUM_LABELS))).astype(jnp.bfloat16)
    bc_pad = jnp.pad(params['bc'], ((0, 0), (0, LOGIT_PAD - NUM_LABELS)))

    args = (ids3, wemb_pad, static_emb,
            params['emb_ln_g'], params['emb_ln_b'],
            wqkv, bqkv, wo_heads, params['bo'],
            params['ln1_g'], params['ln1_b'],
            wi, params['bi'], wf, params['bf'],
            params['ln2_g'], params['ln2_b'],
            wp, params['bp'], wc_pad, bc_pad)

    in_specs = ([pl.BlockSpec((1, SEQ, 1), lambda b: (b, 0, 0))]
                + [_const_spec(a.shape) for a in args[1:]])

    logits_all = pl.pallas_call(
        fused_forward_kernel,
        out_shape=jax.ShapeDtypeStruct((BATCH, SEQ, LOGIT_PAD), jnp.float32),
        grid=(BATCH,),
        in_specs=in_specs,
        out_specs=pl.BlockSpec((1, SEQ, LOGIT_PAD), lambda b: (b, 0, 0)),
        compiler_params=pltpu.CompilerParams(
            dimension_semantics=("parallel",)),
    )(*args)

    # [CLS] row and the real 21 labels are sliced outside the kernel.
    return logits_all[:, 0, :NUM_LABELS]


# ------------------------------ parameter init ----------------------------------
def init_params(key):
    ks = iter(jax.random.split(key, 32))

    def nrm(shape, scale=0.02):
        return (scale * jax.random.normal(next(ks), shape)).astype(jnp.float32)

    return {
        'word_emb': nrm((VOCAB, HIDDEN)),
        'pos_emb': nrm((MAX_POS, HIDDEN)),
        'tok_type_emb': nrm((2, HIDDEN)),
        'emb_ln_g': jnp.ones((1, HIDDEN), jnp.float32),
        'emb_ln_b': jnp.zeros((1, HIDDEN), jnp.float32),
        # stacked per-layer weights, fused QKV projection (H, 3H)
        'wqkv': nrm((NUM_LAYERS, HIDDEN, 3 * HIDDEN)),
        'bqkv': jnp.zeros((NUM_LAYERS, 1, 3 * HIDDEN), jnp.float32),
        'wo': nrm((NUM_LAYERS, HIDDEN, HIDDEN)),
        'bo': jnp.zeros((NUM_LAYERS, 1, HIDDEN), jnp.float32),
        'ln1_g': jnp.ones((NUM_LAYERS, 1, HIDDEN), jnp.float32),
        'ln1_b': jnp.zeros((NUM_LAYERS, 1, HIDDEN), jnp.float32),
        'wi': nrm((NUM_LAYERS, HIDDEN, FFN)),
        'bi': jnp.zeros((NUM_LAYERS, 1, FFN), jnp.float32),
        'wf': nrm((NUM_LAYERS, FFN, HIDDEN)),
        'bf': jnp.zeros((NUM_LAYERS, 1, HIDDEN), jnp.float32),
        'ln2_g': jnp.ones((NUM_LAYERS, 1, HIDDEN), jnp.float32),
        'ln2_b': jnp.zeros((NUM_LAYERS, 1, HIDDEN), jnp.float32),
        # pooler + classifier (linear_2: 768->21 analogue)
        'wp': nrm((HIDDEN, HIDDEN)),
        'bp': jnp.zeros((1, HIDDEN), jnp.float32),
        'wc': nrm((HIDDEN, NUM_LABELS)),
        'bc': jnp.zeros((1, NUM_LABELS), jnp.float32),
    }


# ----------------------------------- main ---------------------------------------
if __name__ == "__main__":
    key = jax.random.PRNGKey(0)
    pkey, dkey = jax.random.split(key)
    params = init_params(pkey)
    input_ids = jax.random.randint(dkey, (BATCH, SEQ), 0, VOCAB, dtype=jnp.int32)

    logits = forward(params, input_ids)
    jax.block_until_ready(logits)
    assert logits.shape == (BATCH, NUM_LABELS)
    assert logits.dtype == jnp.float32
    print("KERNEL_OK")
</pallas_src>

<mosaic_0001>
module attributes {stable_mosaic.version = 11 : i64} {
  func.func @fused_forward_kernel(%arg0: i32, %arg1: memref<1x8x1xi32, #tpu.memory_space<vmem>>, %arg2: memref<128x32xbf16, #tpu.memory_space<vmem>>, %arg3: memref<8x32xf32, #tpu.memory_space<vmem>>, %arg4: memref<1x32xf32, #tpu.memory_space<vmem>>, %arg5: memref<1x32xf32, #tpu.memory_space<vmem>>, %arg6: memref<2x32x96xbf16, #tpu.memory_space<vmem>>, %arg7: memref<2x1x96xf32, #tpu.memory_space<vmem>>, %arg8: memref<2x2x16x32xbf16, #tpu.memory_space<vmem>>, %arg9: memref<2x1x32xf32, #tpu.memory_space<vmem>>, %arg10: memref<2x1x32xf32, #tpu.memory_space<vmem>>, %arg11: memref<2x1x32xf32, #tpu.memory_space<vmem>>, %arg12: memref<2x32x64xbf16, #tpu.memory_space<vmem>>, %arg13: memref<2x1x64xf32, #tpu.memory_space<vmem>>, %arg14: memref<2x64x32xbf16, #tpu.memory_space<vmem>>, %arg15: memref<2x1x32xf32, #tpu.memory_space<vmem>>, %arg16: memref<2x1x32xf32, #tpu.memory_space<vmem>>, %arg17: memref<2x1x32xf32, #tpu.memory_space<vmem>>, %arg18: memref<32x32xbf16, #tpu.memory_space<vmem>>, %arg19: memref<1x32xf32, #tpu.memory_space<vmem>>, %arg20: memref<32x128xbf16, #tpu.memory_space<vmem>>, %arg21: memref<1x128xf32, #tpu.memory_space<vmem>>, %arg22: memref<1x8x128xf32, #tpu.memory_space<vmem>>) attributes {dimension_semantics = [#tpu.dimension_semantics<parallel>], iteration_bounds = array<i64: 2>, scalar_prefetch = 0 : i64, scratch_operands = 0 : i64, tpu.core_type = #tpu.core_type<tc>, window_params = [{transform_indices = @transform_0, window_bounds = array<i64: 1, 8, 1>}, {pipeline_mode = #tpu.pipeline_mode<synchronous>, transform_indices = @transform_1, window_bounds = array<i64: 128, 32>}, {pipeline_mode = #tpu.pipeline_mode<synchronous>, transform_indices = @transform_2, window_bounds = array<i64: 8, 32>}, {pipeline_mode = #tpu.pipeline_mode<synchronous>, transform_indices = @transform_3, window_bounds = array<i64: 1, 32>}, {pipeline_mode = #tpu.pipeline_mode<synchronous>, transform_indices = @transform_4, window_bounds = array<i64: 1, 32>}, {pipeline_mode = #tpu.pipeline_mode<synchronous>, transform_indices = @transform_5, window_bounds = array<i64: 2, 32, 96>}, {pipeline_mode = #tpu.pipeline_mode<synchronous>, transform_indices = @transform_6, window_bounds = array<i64: 2, 1, 96>}, {pipeline_mode = #tpu.pipeline_mode<synchronous>, transform_indices = @transform_7, window_bounds = array<i64: 2, 2, 16, 32>}, {pipeline_mode = #tpu.pipeline_mode<synchronous>, transform_indices = @transform_8, window_bounds = array<i64: 2, 1, 32>}, {pipeline_mode = #tpu.pipeline_mode<synchronous>, transform_indices = @transform_9, window_bounds = array<i64: 2, 1, 32>}, {pipeline_mode = #tpu.pipeline_mode<synchronous>, transform_indices = @transform_10, window_bounds = array<i64: 2, 1, 32>}, {pipeline_mode = #tpu.pipeline_mode<synchronous>, transform_indices = @transform_11, window_bounds = array<i64: 2, 32, 64>}, {pipeline_mode = #tpu.pipeline_mode<synchronous>, transform_indices = @transform_12, window_bounds = array<i64: 2, 1, 64>}, {pipeline_mode = #tpu.pipeline_mode<synchronous>, transform_indices = @transform_13, window_bounds = array<i64: 2, 64, 32>}, {pipeline_mode = #tpu.pipeline_mode<synchronous>, transform_indices = @transform_14, window_bounds = array<i64: 2, 1, 32>}, {pipeline_mode = #tpu.pipeline_mode<synchronous>, transform_indices = @transform_15, window_bounds = array<i64: 2, 1, 32>}, {pipeline_mode = #tpu.pipeline_mode<synchronous>, transform_indices = @transform_16, window_bounds = array<i64: 2, 1, 32>}, {pipeline_mode = #tpu.pipeline_mode<synchronous>, transform_indices = @transform_17, window_bounds = array<i64: 32, 32>}, {pipeline_mode = #tpu.pipeline_mode<synchronous>, transform_indices = @transform_18, window_bounds = array<i64: 1, 32>}, {pipeline_mode = #tpu.pipeline_mode<synchronous>, transform_indices = @transform_19, window_bounds = array<i64: 32, 128>}, {pipeline_mode = #tpu.pipeline_mode<synchronous>, transform_indices = @transform_20, window_bounds = array<i64: 1, 128>}, {transform_indices = @transform_21, window_bounds = array<i64: 1, 8, 128>}]} {
    %c0 = arith.constant 0 : index
    %c0_0 = arith.constant 0 : index
    %c0_1 = arith.constant 0 : index
    %0 = vector.load %arg1[%c0, %c0_0, %c0_1] : memref<1x8x1xi32, #tpu.memory_space<vmem>>, vector<1x8x1xi32>
    %1 = vector.shape_cast %0 : vector<1x8x1xi32> to vector<8x1xi32>
    %2 = tpu.iota {dimensions = array<i32: 1>} : vector<8x128xi32>
    %3 = vector.broadcast %1 : vector<8x1xi32> to vector<8x128xi32>
    %4 = arith.cmpi eq, %2, %3 : vector<8x128xi32>
    %5 = arith.extui %4 : vector<8x128xi1> to vector<8x128xi32>
    %6 = arith.sitofp %5 : vector<8x128xi32> to vector<8x128xf32>
    %7 = arith.truncf %6 : vector<8x128xf32> to vector<8x128xbf16>
    %c0_2 = arith.constant 0 : index
    %c0_3 = arith.constant 0 : index
    %8 = vector.load %arg2[%c0_2, %c0_3] : memref<128x32xbf16, #tpu.memory_space<vmem>>, vector<128x32xbf16>
    %cst = arith.constant dense<0.000000e+00> : vector<8x32xf32>
    %9 = tpu.matmul %7, %8, %cst {dimension_numbers = #tpu.dot_dimension_numbers<[1], [0], [0], [1], [0, 0, 1, 1], [], []>} : vector<8x128xbf16>, vector<128x32xbf16>, vector<8x32xf32> -> vector<8x32xf32>
    %c0_4 = arith.constant 0 : index
    %c0_5 = arith.constant 0 : index
    %10 = vector.load %arg3[%c0_4, %c0_5] : memref<8x32xf32, #tpu.memory_space<vmem>>, vector<8x32xf32>
    %11 = arith.addf %9, %10 : vector<8x32xf32>
    %c0_6 = arith.constant 0 : index
    %c0_7 = arith.constant 0 : index
    %12 = vector.load %arg4[%c0_6, %c0_7] : memref<1x32xf32, #tpu.memory_space<vmem>>, vector<1x32xf32>
    %c0_8 = arith.constant 0 : index
    %c0_9 = arith.constant 0 : index
    %13 = vector.load %arg5[%c0_8, %c0_9] : memref<1x32xf32, #tpu.memory_space<vmem>>, vector<1x32xf32>
    %cst_10 = arith.constant dense<0.000000e+00> : vector<8xf32>
    %14 = vector.multi_reduction <add>, %11, %cst_10 [1] : vector<8x32xf32> to vector<8xf32>
    %15 = vector.shape_cast %14 : vector<8xf32> to vector<8x1xf32>
    %cst_11 = arith.constant 3.200000e+01 : f32
    %16 = vector.broadcast %cst_11 : f32 to vector<8x1xf32>
    %17 = arith.divf %15, %16 : vector<8x1xf32>
    %18 = vector.broadcast %17 : vector<8x1xf32> to vector<8x32xf32>
    %19 = arith.subf %11, %18 : vector<8x32xf32>
    %20 = arith.mulf %19, %19 : vector<8x32xf32>
    %cst_12 = arith.constant dense<0.000000e+00> : vector<8xf32>
    %21 = vector.multi_reduction <add>, %20, %cst_12 [1] : vector<8x32xf32> to vector<8xf32>
    %22 = vector.shape_cast %21 : vector<8xf32> to vector<8x1xf32>
    %cst_13 = arith.constant 3.200000e+01 : f32
    %23 = vector.broadcast %cst_13 : f32 to vector<8x1xf32>
    %24 = arith.divf %22, %23 : vector<8x1xf32>
    %25 = vector.broadcast %17 : vector<8x1xf32> to vector<8x32xf32>
    %26 = arith.subf %11, %25 : vector<8x32xf32>
    %cst_14 = arith.constant 9.99999996E-13 : f32
    %27 = vector.broadcast %cst_14 : f32 to vector<8x1xf32>
    %28 = arith.addf %24, %27 : vector<8x1xf32>
    %29 = math.rsqrt %28 : vector<8x1xf32>
    %30 = vector.broadcast %29 : vector<8x1xf32> to vector<8x32xf32>
    %31 = arith.mulf %26, %30 : vector<8x32xf32>
    %32 = vector.broadcast %12 : vector<1x32xf32> to vector<8x32xf32>
    %33 = arith.mulf %31, %32 : vector<8x32xf32>
    %34 = vector.broadcast %13 : vector<1x32xf32> to vector<8x32xf32>
    %35 = arith.addf %33, %34 : vector<8x32xf32>
    %c0_15 = arith.constant 0 : index
    %c0_16 = arith.constant 0 : index
    %c0_17 = arith.constant 0 : index
    %36 = vector.load %arg6[%c0_15, %c0_16, %c0_17] : memref<2x32x96xbf16, #tpu.memory_space<vmem>>, vector<1x32x96xbf16>
    %37 = vector.shape_cast %36 : vector<1x32x96xbf16> to vector<32x96xbf16>
    %c0_18 = arith.constant 0 : index
    %c0_19 = arith.constant 0 : index
    %c0_20 = arith.constant 0 : index
    %38 = vector.load %arg7[%c0_18, %c0_19, %c0_20] : memref<2x1x96xf32, #tpu.memory_space<vmem>>, vector<1x1x96xf32>
    %39 = vector.shape_cast %38 : vector<1x1x96xf32> to vector<1x96xf32>
    %c0_21 = arith.constant 0 : index
    %c0_22 = arith.constant 0 : index
    %c0_23 = arith.constant 0 : index
    %c0_24 = arith.constant 0 : index
    %40 = vector.load %arg8[%c0_21, %c0_22, %c0_23, %c0_24] : memref<2x2x16x32xbf16, #tpu.memory_space<vmem>>, vector<1x2x16x32xbf16>
    %41 = vector.shape_cast %40 : vector<1x2x16x32xbf16> to vector<2x16x32xbf16>
    %c0_25 = arith.constant 0 : index
    %c0_26 = arith.constant 0 : index
    %c0_27 = arith.constant 0 : index
    %42 = vector.load %arg9[%c0_25, %c0_26, %c0_27] : memref<2x1x32xf32, #tpu.memory_space<vmem>>, vector<1x1x32xf32>
    %43 = vector.shape_cast %42 : vector<1x1x32xf32> to vector<1x32xf32>
    %c0_28 = arith.constant 0 : index
    %c0_29 = arith.constant 0 : index
    %c0_30 = arith.constant 0 : index
    %44 = vector.load %arg10[%c0_28, %c0_29, %c0_30] : memref<2x1x32xf32, #tpu.memory_space<vmem>>, vector<1x1x32xf32>
    %45 = vector.shape_cast %44 : vector<1x1x32xf32> to vector<1x32xf32>
    %c0_31 = arith.constant 0 : index
    %c0_32 = arith.constant 0 : index
    %c0_33 = arith.constant 0 : index
    %46 = vector.load %arg11[%c0_31, %c0_32, %c0_33] : memref<2x1x32xf32, #tpu.memory_space<vmem>>, vector<1x1x32xf32>
    %47 = vector.shape_cast %46 : vector<1x1x32xf32> to vector<1x32xf32>
    %c0_34 = arith.constant 0 : index
    %c0_35 = arith.constant 0 : index
    %c0_36 = arith.constant 0 : index
    %48 = vector.load %arg12[%c0_34, %c0_35, %c0_36] : memref<2x32x64xbf16, #tpu.memory_space<vmem>>, vector<1x32x64xbf16>
    %49 = vector.shape_cast %48 : vector<1x32x64xbf16> to vector<32x64xbf16>
    %c0_37 = arith.constant 0 : index
    %c0_38 = arith.constant 0 : index
    %c0_39 = arith.constant 0 : index
    %50 = vector.load %arg13[%c0_37, %c0_38, %c0_39] : memref<2x1x64xf32, #tpu.memory_space<vmem>>, vector<1x1x64xf32>
    %51 = vector.shape_cast %50 : vector<1x1x64xf32> to vector<1x64xf32>
    %c0_40 = arith.constant 0 : index
    %c0_41 = arith.constant 0 : index
    %c0_42 = arith.constant 0 : index
    %52 = vector.load %arg14[%c0_40, %c0_41, %c0_42] : memref<2x64x32xbf16, #tpu.memory_space<vmem>>, vector<1x64x32xbf16>
    %53 = vector.shape_cast %52 : vector<1x64x32xbf16> to vector<64x32xbf16>
    %c0_43 = arith.constant 0 : index
    %c0_44 = arith.constant 0 : index
    %c0_45 = arith.constant 0 : index
    %54 = vector.load %arg15[%c0_43, %c0_44, %c0_45] : memref<2x1x32xf32, #tpu.memory_space<vmem>>, vector<1x1x32xf32>
    %55 = vector.shape_cast %54 : vector<1x1x32xf32> to vector<1x32xf32>
    %c0_46 = arith.constant 0 : index
    %c0_47 = arith.constant 0 : index
    %c0_48 = arith.constant 0 : index
    %56 = vector.load %arg16[%c0_46, %c0_47, %c0_48] : memref<2x1x32xf32, #tpu.memory_space<vmem>>, vector<1x1x32xf32>
    %57 = vector.shape_cast %56 : vector<1x1x32xf32> to vector<1x32xf32>
    %c0_49 = arith.constant 0 : index
    %c0_50 = arith.constant 0 : index
    %c0_51 = arith.constant 0 : index
    %58 = vector.load %arg17[%c0_49, %c0_50, %c0_51] : memref<2x1x32xf32, #tpu.memory_space<vmem>>, vector<1x1x32xf32>
    %59 = vector.shape_cast %58 : vector<1x1x32xf32> to vector<1x32xf32>
    %60 = arith.truncf %35 : vector<8x32xf32> to vector<8x32xbf16>
    %cst_52 = arith.constant dense<0.000000e+00> : vector<8x96xf32>
    %61 = tpu.matmul %60, %37, %cst_52 {dimension_numbers = #tpu.dot_dimension_numbers<[1], [0], [0], [1], [0, 0, 1, 1], [], []>} : vector<8x32xbf16>, vector<32x96xbf16>, vector<8x96xf32> -> vector<8x96xf32>
    %62 = vector.broadcast %39 : vector<1x96xf32> to vector<8x96xf32>
    %63 = arith.addf %61, %62 : vector<8x96xf32>
    %64 = vector.shape_cast %63 : vector<8x96xf32> to vector<8x6x16xf32>
    %65 = tpu.transpose %64, [1, 0, 2] : vector<8x6x16xf32> -> vector<6x8x16xf32>
    %66 = vector.extract_strided_slice %65 {offsets = [0, 0, 0], sizes = [2, 8, 16], strides = [1, 1, 1]} : vector<6x8x16xf32> to vector<2x8x16xf32>
    %67 = arith.truncf %66 : vector<2x8x16xf32> to vector<2x8x16xbf16>
    %68 = vector.extract_strided_slice %65 {offsets = [2, 0, 0], sizes = [2, 8, 16], strides = [1, 1, 1]} : vector<6x8x16xf32> to vector<2x8x16xf32>
    %69 = arith.truncf %68 : vector<2x8x16xf32> to vector<2x8x16xbf16>
    %70 = vector.extract_strided_slice %65 {offsets = [4, 0, 0], sizes = [2, 8, 16], strides = [1, 1, 1]} : vector<6x8x16xf32> to vector<2x8x16xf32>
    %71 = arith.truncf %70 : vector<2x8x16xf32> to vector<2x8x16xbf16>
    "tpu.trace_start"() <{level = 10 : i32, message = "hqd,hkd->hqk"}> : () -> ()
    %cst_53 = arith.constant dense<0.000000e+00> : vector<2x8x8xf32>
    %72 = tpu.matmul %67, %69, %cst_53 {dimension_numbers = #tpu.dot_dimension_numbers<[2], [2], [1], [1], [0, 0, 0, 1, 1, 1], [0], [0]>} : vector<2x8x16xbf16>, vector<2x8x16xbf16>, vector<2x8x8xf32> -> vector<2x8x8xf32>
    "tpu.trace_stop"() : () -> ()
    %cst_54 = arith.constant dense<0xFF800000> : vector<2x8xf32>
    %73 = vector.multi_reduction <maximumf>, %72, %cst_54 [2] : vector<2x8x8xf32> to vector<2x8xf32>
    %74 = vector.shape_cast %73 : vector<2x8xf32> to vector<2x8x1xf32>
    %75 = vector.broadcast %74 : vector<2x8x1xf32> to vector<2x8x8xf32>
    %76 = arith.subf %72, %75 : vector<2x8x8xf32>
    %77 = math.exp %76 : vector<2x8x8xf32>
    %cst_55 = arith.constant dense<0.000000e+00> : vector<2x8xf32>
    %78 = vector.multi_reduction <add>, %77, %cst_55 [2] : vector<2x8x8xf32> to vector<2x8xf32>
    %79 = vector.shape_cast %78 : vector<2x8xf32> to vector<2x8x1xf32>
    %80 = tpu.reciprocal %79 {approx = true} : vector<2x8x1xf32> -> vector<2x8x1xf32>
    %81 = vector.broadcast %80 : vector<2x8x1xf32> to vector<2x8x8xf32>
    %82 = arith.mulf %77, %81 : vector<2x8x8xf32>
    %83 = arith.truncf %82 : vector<2x8x8xf32> to vector<2x8x8xbf16>
    "tpu.trace_start"() <{level = 10 : i32, message = "hqk,hkd->hqd"}> : () -> ()
    %cst_56 = arith.constant dense<0.000000e+00> : vector<2x8x16xf32>
    %84 = tpu.matmul %83, %71, %cst_56 {dimension_numbers = #tpu.dot_dimension_numbers<[2], [1], [1], [2], [0, 0, 0, 1, 1, 2], [0], [0]>} : vector<2x8x8xbf16>, vector<2x8x16xbf16>, vector<2x8x16xf32> -> vector<2x8x16xf32>
    "tpu.trace_stop"() : () -> ()
    %85 = arith.truncf %84 : vector<2x8x16xf32> to vector<2x8x16xbf16>
    "tpu.trace_start"() <{level = 10 : i32, message = "hqd,hdo->hqo"}> : () -> ()
    %cst_57 = arith.constant dense<0.000000e+00> : vector<2x8x32xf32>
    %86 = tpu.matmul %85, %41, %cst_57 {dimension_numbers = #tpu.dot_dimension_numbers<[2], [1], [1], [2], [0, 0, 0, 1, 1, 2], [0], [0]>} : vector<2x8x16xbf16>, vector<2x16x32xbf16>, vector<2x8x32xf32> -> vector<2x8x32xf32>
    "tpu.trace_stop"() : () -> ()
    %cst_58 = arith.constant dense<0.000000e+00> : vector<8x32xf32>
    %87 = vector.multi_reduction <add>, %86, %cst_58 [0] : vector<2x8x32xf32> to vector<8x32xf32>
    %88 = vector.broadcast %43 : vector<1x32xf32> to vector<8x32xf32>
    %89 = arith.addf %87, %88 : vector<8x32xf32>
    %90 = arith.addf %35, %89 : vector<8x32xf32>
    %cst_59 = arith.constant dense<0.000000e+00> : vector<8xf32>
    %91 = vector.multi_reduction <add>, %90, %cst_59 [1] : vector<8x32xf32> to vector<8xf32>
    %92 = vector.shape_cast %91 : vector<8xf32> to vector<8x1xf32>
    %cst_60 = arith.constant 3.200000e+01 : f32
    %93 = vector.broadcast %cst_60 : f32 to vector<8x1xf32>
    %94 = arith.divf %92, %93 : vector<8x1xf32>
    %95 = vector.broadcast %94 : vector<8x1xf32> to vector<8x32xf32>
    %96 = arith.subf %90, %95 : vector<8x32xf32>
    %97 = arith.mulf %96, %96 : vector<8x32xf32>
    %cst_61 = arith.constant dense<0.000000e+00> : vector<8xf32>
    %98 = vector.multi_reduction <add>, %97, %cst_61 [1] : vector<8x32xf32> to vector<8xf32>
    %99 = vector.shape_cast %98 : vector<8xf32> to vector<8x1xf32>
    %cst_62 = arith.constant 3.200000e+01 : f32
    %100 = vector.broadcast %cst_62 : f32 to vector<8x1xf32>
    %101 = arith.divf %99, %100 : vector<8x1xf32>
    %102 = vector.broadcast %94 : vector<8x1xf32> to vector<8x32xf32>
    %103 = arith.subf %90, %102 : vector<8x32xf32>
    %cst_63 = arith.constant 9.99999996E-13 : f32
    %104 = vector.broadcast %cst_63 : f32 to vector<8x1xf32>
    %105 = arith.addf %101, %104 : vector<8x1xf32>
    %106 = math.rsqrt %105 : vector<8x1xf32>
    %107 = vector.broadcast %106 : vector<8x1xf32> to vector<8x32xf32>
    %108 = arith.mulf %103, %107 : vector<8x32xf32>
    %109 = vector.broadcast %45 : vector<1x32xf32> to vector<8x32xf32>
    %110 = arith.mulf %108, %109 : vector<8x32xf32>
    %111 = vector.broadcast %47 : vector<1x32xf32> to vector<8x32xf32>
    %112 = arith.addf %110, %111 : vector<8x32xf32>
    %113 = arith.truncf %112 : vector<8x32xf32> to vector<8x32xbf16>
    %cst_64 = arith.constant dense<0.000000e+00> : vector<8x64xf32>
    %114 = tpu.matmul %113, %49, %cst_64 {dimension_numbers = #tpu.dot_dimension_numbers<[1], [0], [0], [1], [0, 0, 1, 1], [], []>} : vector<8x32xbf16>, vector<32x64xbf16>, vector<8x64xf32> -> vector<8x64xf32>
    %115 = vector.broadcast %51 : vector<1x64xf32> to vector<8x64xf32>
    %116 = arith.addf %114, %115 : vector<8x64xf32>
    %cst_65 = arith.constant 5.000000e-01 : f32
    %117 = vector.broadcast %cst_65 : f32 to vector<8x64xf32>
    %118 = arith.mulf %117, %116 : vector<8x64xf32>
    %cst_66 = arith.constant 4.471500e-02 : f32
    %119 = vector.broadcast %cst_66 : f32 to vector<8x64xf32>
    %120 = arith.mulf %119, %116 : vector<8x64xf32>
    %121 = arith.mulf %120, %116 : vector<8x64xf32>
    %122 = arith.mulf %121, %116 : vector<8x64xf32>
    %123 = arith.addf %116, %122 : vector<8x64xf32>
    %cst_67 = arith.constant 0.797884583 : f32
    %124 = vector.broadcast %cst_67 : f32 to vector<8x64xf32>
    %125 = arith.mulf %124, %123 : vector<8x64xf32>
    %126 = math.tanh %125 : vector<8x64xf32>
    %cst_68 = arith.constant 1.000000e+00 : f32
    %127 = vector.broadcast %cst_68 : f32 to vector<8x64xf32>
    %128 = arith.addf %127, %126 : vector<8x64xf32>
    %129 = arith.mulf %118, %128 : vector<8x64xf32>
    %130 = arith.truncf %129 : vector<8x64xf32> to vector<8x64xbf16>
    %cst_69 = arith.constant dense<0.000000e+00> : vector<8x32xf32>
    %131 = tpu.matmul %130, %53, %cst_69 {dimension_numbers = #tpu.dot_dimension_numbers<[1], [0], [0], [1], [0, 0, 1, 1], [], []>} : vector<8x64xbf16>, vector<64x32xbf16>, vector<8x32xf32> -> vector<8x32xf32>
    %132 = vector.broadcast %55 : vector<1x32xf32> to vector<8x32xf32>
    %133 = arith.addf %131, %132 : vector<8x32xf32>
    %134 = arith.addf %112, %133 : vector<8x32xf32>
    %cst_70 = arith.constant dense<0.000000e+00> : vector<8xf32>
    %135 = vector.multi_reduction <add>, %134, %cst_70 [1] : vector<8x32xf32> to vector<8xf32>
    %136 = vector.shape_cast %135 : vector<8xf32> to vector<8x1xf32>
    %cst_71 = arith.constant 3.200000e+01 : f32
    %137 = vector.broadcast %cst_71 : f32 to vector<8x1xf32>
    %138 = arith.divf %136, %137 : vector<8x1xf32>
    %139 = vector.broadcast %138 : vector<8x1xf32> to vector<8x32xf32>
    %140 = arith.subf %134, %139 : vector<8x32xf32>
    %141 = arith.mulf %140, %140 : vector<8x32xf32>
    %cst_72 = arith.constant dense<0.000000e+00> : vector<8xf32>
    %142 = vector.multi_reduction <add>, %141, %cst_72 [1] : vector<8x32xf32> to vector<8xf32>
    %143 = vector.shape_cast %142 : vector<8xf32> to vector<8x1xf32>
    %cst_73 = arith.constant 3.200000e+01 : f32
    %144 = vector.broadcast %cst_73 : f32 to vector<8x1xf32>
    %145 = arith.divf %143, %144 : vector<8x1xf32>
    %146 = vector.broadcast %138 : vector<8x1xf32> to vector<8x32xf32>
    %147 = arith.subf %134, %146 : vector<8x32xf32>
    %cst_74 = arith.constant 9.99999996E-13 : f32
    %148 = vector.broadcast %cst_74 : f32 to vector<8x1xf32>
    %149 = arith.addf %145, %148 : vector<8x1xf32>
    %150 = math.rsqrt %149 : vector<8x1xf32>
    %151 = vector.broadcast %150 : vector<8x1xf32> to vector<8x32xf32>
    %152 = arith.mulf %147, %151 : vector<8x32xf32>
    %153 = vector.broadcast %57 : vector<1x32xf32> to vector<8x32xf32>
    %154 = arith.mulf %152, %153 : vector<8x32xf32>
    %155 = vector.broadcast %59 : vector<1x32xf32> to vector<8x32xf32>
    %156 = arith.addf %154, %155 : vector<8x32xf32>
    %c1 = arith.constant 1 : index
    %c0_75 = arith.constant 0 : index
    %c0_76 = arith.constant 0 : index
    %157 = vector.load %arg6[%c1, %c0_75, %c0_76] : memref<2x32x96xbf16, #tpu.memory_space<vmem>>, vector<1x32x96xbf16>
    %158 = vector.shape_cast %157 : vector<1x32x96xbf16> to vector<32x96xbf16>
    %c1_77 = arith.constant 1 : index
    %c0_78 = arith.constant 0 : index
    %c0_79 = arith.constant 0 : index
    %159 = vector.load %arg7[%c1_77, %c0_78, %c0_79] : memref<2x1x96xf32, #tpu.memory_space<vmem>>, vector<1x1x96xf32>
    %160 = vector.shape_cast %159 : vector<1x1x96xf32> to vector<1x96xf32>
    %c1_80 = arith.constant 1 : index
    %c0_81 = arith.constant 0 : index
    %c0_82 = arith.constant 0 : index
    %c0_83 = arith.constant 0 : index
    %161 = vector.load %arg8[%c1_80, %c0_81, %c0_82, %c0_83] : memref<2x2x16x32xbf16, #tpu.memory_space<vmem>>, vector<1x2x16x32xbf16>
    %162 = vector.shape_cast %161 : vector<1x2x16x32xbf16> to vector<2x16x32xbf16>
    %c1_84 = arith.constant 1 : index
    %c0_85 = arith.constant 0 : index
    %c0_86 = arith.constant 0 : index
    %163 = vector.load %arg9[%c1_84, %c0_85, %c0_86] : memref<2x1x32xf32, #tpu.memory_space<vmem>>, vector<1x1x32xf32>
    %164 = vector.shape_cast %163 : vector<1x1x32xf32> to vector<1x32xf32>
    %c1_87 = arith.constant 1 : index
    %c0_88 = arith.constant 0 : index
    %c0_89 = arith.constant 0 : index
    %165 = vector.load %arg10[%c1_87, %c0_88, %c0_89] : memref<2x1x32xf32, #tpu.memory_space<vmem>>, vector<1x1x32xf32>
    %166 = vector.shape_cast %165 : vector<1x1x32xf32> to vector<1x32xf32>
    %c1_90 = arith.constant 1 : index
    %c0_91 = arith.constant 0 : index
    %c0_92 = arith.constant 0 : index
    %167 = vector.load %arg11[%c1_90, %c0_91, %c0_92] : memref<2x1x32xf32, #tpu.memory_space<vmem>>, vector<1x1x32xf32>
    %168 = vector.shape_cast %167 : vector<1x1x32xf32> to vector<1x32xf32>
    %c1_93 = arith.constant 1 : index
    %c0_94 = arith.constant 0 : index
    %c0_95 = arith.constant 0 : index
    %169 = vector.load %arg12[%c1_93, %c0_94, %c0_95] : memref<2x32x64xbf16, #tpu.memory_space<vmem>>, vector<1x32x64xbf16>
    %170 = vector.shape_cast %169 : vector<1x32x64xbf16> to vector<32x64xbf16>
    %c1_96 = arith.constant 1 : index
    %c0_97 = arith.constant 0 : index
    %c0_98 = arith.constant 0 : index
    %171 = vector.load %arg13[%c1_96, %c0_97, %c0_98] : memref<2x1x64xf32, #tpu.memory_space<vmem>>, vector<1x1x64xf32>
    %172 = vector.shape_cast %171 : vector<1x1x64xf32> to vector<1x64xf32>
    %c1_99 = arith.constant 1 : index
    %c0_100 = arith.constant 0 : index
    %c0_101 = arith.constant 0 : index
    %173 = vector.load %arg14[%c1_99, %c0_100, %c0_101] : memref<2x64x32xbf16, #tpu.memory_space<vmem>>, vector<1x64x32xbf16>
    %174 = vector.shape_cast %173 : vector<1x64x32xbf16> to vector<64x32xbf16>
    %c1_102 = arith.constant 1 : index
    %c0_103 = arith.constant 0 : index
    %c0_104 = arith.constant 0 : index
    %175 = vector.load %arg15[%c1_102, %c0_103, %c0_104] : memref<2x1x32xf32, #tpu.memory_space<vmem>>, vector<1x1x32xf32>
    %176 = vector.shape_cast %175 : vector<1x1x32xf32> to vector<1x32xf32>
    %c1_105 = arith.constant 1 : index
    %c0_106 = arith.constant 0 : index
    %c0_107 = arith.constant 0 : index
    %177 = vector.load %arg16[%c1_105, %c0_106, %c0_107] : memref<2x1x32xf32, #tpu.memory_space<vmem>>, vector<1x1x32xf32>
    %178 = vector.shape_cast %177 : vector<1x1x32xf32> to vector<1x32xf32>
    %c1_108 = arith.constant 1 : index
    %c0_109 = arith.constant 0 : index
    %c0_110 = arith.constant 0 : index
    %179 = vector.load %arg17[%c1_108, %c0_109, %c0_110] : memref<2x1x32xf32, #tpu.memory_space<vmem>>, vector<1x1x32xf32>
    %180 = vector.shape_cast %179 : vector<1x1x32xf32> to vector<1x32xf32>
    %181 = arith.truncf %156 : vector<8x32xf32> to vector<8x32xbf16>
    %cst_111 = arith.constant dense<0.000000e+00> : vector<8x96xf32>
    %182 = tpu.matmul %181, %158, %cst_111 {dimension_numbers = #tpu.dot_dimension_numbers<[1], [0], [0], [1], [0, 0, 1, 1], [], []>} : vector<8x32xbf16>, vector<32x96xbf16>, vector<8x96xf32> -> vector<8x96xf32>
    %183 = vector.broadcast %160 : vector<1x96xf32> to vector<8x96xf32>
    %184 = arith.addf %182, %183 : vector<8x96xf32>
    %185 = vector.shape_cast %184 : vector<8x96xf32> to vector<8x6x16xf32>
    %186 = tpu.transpose %185, [1, 0, 2] : vector<8x6x16xf32> -> vector<6x8x16xf32>
    %187 = vector.extract_strided_slice %186 {offsets = [0, 0, 0], sizes = [2, 8, 16], strides = [1, 1, 1]} : vector<6x8x16xf32> to vector<2x8x16xf32>
    %188 = arith.truncf %187 : vector<2x8x16xf32> to vector<2x8x16xbf16>
    %189 = vector.extract_strided_slice %186 {offsets = [2, 0, 0], sizes = [2, 8, 16], strides = [1, 1, 1]} : vector<6x8x16xf32> to vector<2x8x16xf32>
    %190 = arith.truncf %189 : vector<2x8x16xf32> to vector<2x8x16xbf16>
    %191 = vector.extract_strided_slice %186 {offsets = [4, 0, 0], sizes = [2, 8, 16], strides = [1, 1, 1]} : vector<6x8x16xf32> to vector<2x8x16xf32>
    %192 = arith.truncf %191 : vector<2x8x16xf32> to vector<2x8x16xbf16>
    "tpu.trace_start"() <{level = 10 : i32, message = "hqd,hkd->hqk"}> : () -> ()
    %cst_112 = arith.constant dense<0.000000e+00> : vector<2x8x8xf32>
    %193 = tpu.matmul %188, %190, %cst_112 {dimension_numbers = #tpu.dot_dimension_numbers<[2], [2], [1], [1], [0, 0, 0, 1, 1, 1], [0], [0]>} : vector<2x8x16xbf16>, vector<2x8x16xbf16>, vector<2x8x8xf32> -> vector<2x8x8xf32>
    "tpu.trace_stop"() : () -> ()
    %cst_113 = arith.constant dense<0xFF800000> : vector<2x8xf32>
    %194 = vector.multi_reduction <maximumf>, %193, %cst_113 [2] : vector<2x8x8xf32> to vector<2x8xf32>
    %195 = vector.shape_cast %194 : vector<2x8xf32> to vector<2x8x1xf32>
    %196 = vector.broadcast %195 : vector<2x8x1xf32> to vector<2x8x8xf32>
    %197 = arith.subf %193, %196 : vector<2x8x8xf32>
    %198 = math.exp %197 : vector<2x8x8xf32>
    %cst_114 = arith.constant dense<0.000000e+00> : vector<2x8xf32>
    %199 = vector.multi_reduction <add>, %198, %cst_114 [2] : vector<2x8x8xf32> to vector<2x8xf32>
    %200 = vector.shape_cast %199 : vector<2x8xf32> to vector<2x8x1xf32>
    %201 = tpu.reciprocal %200 {approx = true} : vector<2x8x1xf32> -> vector<2x8x1xf32>
    %202 = vector.broadcast %201 : vector<2x8x1xf32> to vector<2x8x8xf32>
    %203 = arith.mulf %198, %202 : vector<2x8x8xf32>
    %204 = arith.truncf %203 : vector<2x8x8xf32> to vector<2x8x8xbf16>
    "tpu.trace_start"() <{level = 10 : i32, message = "hqk,hkd->hqd"}> : () -> ()
    %cst_115 = arith.constant dense<0.000000e+00> : vector<2x8x16xf32>
    %205 = tpu.matmul %204, %192, %cst_115 {dimension_numbers = #tpu.dot_dimension_numbers<[2], [1], [1], [2], [0, 0, 0, 1, 1, 2], [0], [0]>} : vector<2x8x8xbf16>, vector<2x8x16xbf16>, vector<2x8x16xf32> -> vector<2x8x16xf32>
    "tpu.trace_stop"() : () -> ()
    %206 = arith.truncf %205 : vector<2x8x16xf32> to vector<2x8x16xbf16>
    "tpu.trace_start"() <{level = 10 : i32, message = "hqd,hdo->hqo"}> : () -> ()
    %cst_116 = arith.constant dense<0.000000e+00> : vector<2x8x32xf32>
    %207 = tpu.matmul %206, %162, %cst_116 {dimension_numbers = #tpu.dot_dimension_numbers<[2], [1], [1], [2], [0, 0, 0, 1, 1, 2], [0], [0]>} : vector<2x8x16xbf16>, vector<2x16x32xbf16>, vector<2x8x32xf32> -> vector<2x8x32xf32>
    "tpu.trace_stop"() : () -> ()
    %cst_117 = arith.constant dense<0.000000e+00> : vector<8x32xf32>
    %208 = vector.multi_reduction <add>, %207, %cst_117 [0] : vector<2x8x32xf32> to vector<8x32xf32>
    %209 = vector.broadcast %164 : vector<1x32xf32> to vector<8x32xf32>
    %210 = arith.addf %208, %209 : vector<8x32xf32>
    %211 = arith.addf %156, %210 : vector<8x32xf32>
    %cst_118 = arith.constant dense<0.000000e+00> : vector<8xf32>
    %212 = vector.multi_reduction <add>, %211, %cst_118 [1] : vector<8x32xf32> to vector<8xf32>
    %213 = vector.shape_cast %212 : vector<8xf32> to vector<8x1xf32>
    %cst_119 = arith.constant 3.200000e+01 : f32
    %214 = vector.broadcast %cst_119 : f32 to vector<8x1xf32>
    %215 = arith.divf %213, %214 : vector<8x1xf32>
    %216 = vector.broadcast %215 : vector<8x1xf32> to vector<8x32xf32>
    %217 = arith.subf %211, %216 : vector<8x32xf32>
    %218 = arith.mulf %217, %217 : vector<8x32xf32>
    %cst_120 = arith.constant dense<0.000000e+00> : vector<8xf32>
    %219 = vector.multi_reduction <add>, %218, %cst_120 [1] : vector<8x32xf32> to vector<8xf32>
    %220 = vector.shape_cast %219 : vector<8xf32> to vector<8x1xf32>
    %cst_121 = arith.constant 3.200000e+01 : f32
    %221 = vector.broadcast %cst_121 : f32 to vector<8x1xf32>
    %222 = arith.divf %220, %221 : vector<8x1xf32>
    %223 = vector.broadcast %215 : vector<8x1xf32> to vector<8x32xf32>
    %224 = arith.subf %211, %223 : vector<8x32xf32>
    %cst_122 = arith.constant 9.99999996E-13 : f32
    %225 = vector.broadcast %cst_122 : f32 to vector<8x1xf32>
    %226 = arith.addf %222, %225 : vector<8x1xf32>
    %227 = math.rsqrt %226 : vector<8x1xf32>
    %228 = vector.broadcast %227 : vector<8x1xf32> to vector<8x32xf32>
    %229 = arith.mulf %224, %228 : vector<8x32xf32>
    %230 = vector.broadcast %166 : vector<1x32xf32> to vector<8x32xf32>
    %231 = arith.mulf %229, %230 : vector<8x32xf32>
    %232 = vector.broadcast %168 : vector<1x32xf32> to vector<8x32xf32>
    %233 = arith.addf %231, %232 : vector<8x32xf32>
    %234 = arith.truncf %233 : vector<8x32xf32> to vector<8x32xbf16>
    %cst_123 = arith.constant dense<0.000000e+00> : vector<8x64xf32>
    %235 = tpu.matmul %234, %170, %cst_123 {dimension_numbers = #tpu.dot_dimension_numbers<[1], [0], [0], [1], [0, 0, 1, 1], [], []>} : vector<8x32xbf16>, vector<32x64xbf16>, vector<8x64xf32> -> vector<8x64xf32>
    %236 = vector.broadcast %172 : vector<1x64xf32> to vector<8x64xf32>
    %237 = arith.addf %235, %236 : vector<8x64xf32>
    %cst_124 = arith.constant 5.000000e-01 : f32
    %238 = vector.broadcast %cst_124 : f32 to vector<8x64xf32>
    %239 = arith.mulf %238, %237 : vector<8x64xf32>
    %cst_125 = arith.constant 4.471500e-02 : f32
    %240 = vector.broadcast %cst_125 : f32 to vector<8x64xf32>
    %241 = arith.mulf %240, %237 : vector<8x64xf32>
    %242 = arith.mulf %241, %237 : vector<8x64xf32>
    %243 = arith.mulf %242, %237 : vector<8x64xf32>
    %244 = arith.addf %237, %243 : vector<8x64xf32>
    %cst_126 = arith.constant 0.797884583 : f32
    %245 = vector.broadcast %cst_126 : f32 to vector<8x64xf32>
    %246 = arith.mulf %245, %244 : vector<8x64xf32>
    %247 = math.tanh %246 : vector<8x64xf32>
    %cst_127 = arith.constant 1.000000e+00 : f32
    %248 = vector.broadcast %cst_127 : f32 to vector<8x64xf32>
    %249 = arith.addf %248, %247 : vector<8x64xf32>
    %250 = arith.mulf %239, %249 : vector<8x64xf32>
    %251 = arith.truncf %250 : vector<8x64xf32> to vector<8x64xbf16>
    %cst_128 = arith.constant dense<0.000000e+00> : vector<8x32xf32>
    %252 = tpu.matmul %251, %174, %cst_128 {dimension_numbers = #tpu.dot_dimension_numbers<[1], [0], [0], [1], [0, 0, 1, 1], [], []>} : vector<8x64xbf16>, vector<64x32xbf16>, vector<8x32xf32> -> vector<8x32xf32>
    %253 = vector.broadcast %176 : vector<1x32xf32> to vector<8x32xf32>
    %254 = arith.addf %252, %253 : vector<8x32xf32>
    %255 = arith.addf %233, %254 : vector<8x32xf32>
    %cst_129 = arith.constant dense<0.000000e+00> : vector<8xf32>
    %256 = vector.multi_reduction <add>, %255, %cst_129 [1] : vector<8x32xf32> to vector<8xf32>
    %257 = vector.shape_cast %256 : vector<8xf32> to vector<8x1xf32>
    %cst_130 = arith.constant 3.200000e+01 : f32
    %258 = vector.broadcast %cst_130 : f32 to vector<8x1xf32>
    %259 = arith.divf %257, %258 : vector<8x1xf32>
    %260 = vector.broadcast %259 : vector<8x1xf32> to vector<8x32xf32>
    %261 = arith.subf %255, %260 : vector<8x32xf32>
    %262 = arith.mulf %261, %261 : vector<8x32xf32>
    %cst_131 = arith.constant dense<0.000000e+00> : vector<8xf32>
    %263 = vector.multi_reduction <add>, %262, %cst_131 [1] : vector<8x32xf32> to vector<8xf32>
    %264 = vector.shape_cast %263 : vector<8xf32> to vector<8x1xf32>
    %cst_132 = arith.constant 3.200000e+01 : f32
    %265 = vector.broadcast %cst_132 : f32 to vector<8x1xf32>
    %266 = arith.divf %264, %265 : vector<8x1xf32>
    %267 = vector.broadcast %259 : vector<8x1xf32> to vector<8x32xf32>
    %268 = arith.subf %255, %267 : vector<8x32xf32>
    %cst_133 = arith.constant 9.99999996E-13 : f32
    %269 = vector.broadcast %cst_133 : f32 to vector<8x1xf32>
    %270 = arith.addf %266, %269 : vector<8x1xf32>
    %271 = math.rsqrt %270 : vector<8x1xf32>
    %272 = vector.broadcast %271 : vector<8x1xf32> to vector<8x32xf32>
    %273 = arith.mulf %268, %272 : vector<8x32xf32>
    %274 = vector.broadcast %178 : vector<1x32xf32> to vector<8x32xf32>
    %275 = arith.mulf %273, %274 : vector<8x32xf32>
    %276 = vector.broadcast %180 : vector<1x32xf32> to vector<8x32xf32>
    %277 = arith.addf %275, %276 : vector<8x32xf32>
    %278 = arith.truncf %277 : vector<8x32xf32> to vector<8x32xbf16>
    %c0_134 = arith.constant 0 : index
    %c0_135 = arith.constant 0 : index
    %279 = vector.load %arg18[%c0_134, %c0_135] : memref<32x32xbf16, #tpu.memory_space<vmem>>, vector<32x32xbf16>
    %cst_136 = arith.constant dense<0.000000e+00> : vector<8x32xf32>
    %280 = tpu.matmul %278, %279, %cst_136 {dimension_numbers = #tpu.dot_dimension_numbers<[1], [0], [0], [1], [0, 0, 1, 1], [], []>} : vector<8x32xbf16>, vector<32x32xbf16>, vector<8x32xf32> -> vector<8x32xf32>
    %c0_137 = arith.constant 0 : index
    %c0_138 = arith.constant 0 : index
    %281 = vector.load %arg19[%c0_137, %c0_138] : memref<1x32xf32, #tpu.memory_space<vmem>>, vector<1x32xf32>
    %282 = vector.broadcast %281 : vector<1x32xf32> to vector<8x32xf32>
    %283 = arith.addf %280, %282 : vector<8x32xf32>
    %284 = math.tanh %283 : vector<8x32xf32>
    %285 = arith.truncf %284 : vector<8x32xf32> to vector<8x32xbf16>
    %c0_139 = arith.constant 0 : index
    %c0_140 = arith.constant 0 : index
    %286 = vector.load %arg20[%c0_139, %c0_140] : memref<32x128xbf16, #tpu.memory_space<vmem>>, vector<32x128xbf16>
    %cst_141 = arith.constant dense<0.000000e+00> : vector<8x128xf32>
    %287 = tpu.matmul %285, %286, %cst_141 {dimension_numbers = #tpu.dot_dimension_numbers<[1], [0], [0], [1], [0, 0, 1, 1], [], []>} : vector<8x32xbf16>, vector<32x128xbf16>, vector<8x128xf32> -> vector<8x128xf32>
    %c0_142 = arith.constant 0 : index
    %c0_143 = arith.constant 0 : index
    %288 = vector.load %arg21[%c0_142, %c0_143] : memref<1x128xf32, #tpu.memory_space<vmem>>, vector<1x128xf32>
    %289 = vector.broadcast %288 : vector<1x128xf32> to vector<8x128xf32>
    %290 = arith.addf %287, %289 : vector<8x128xf32>
    %c0_144 = arith.constant 0 : index
    %c0_145 = arith.constant 0 : index
    %c0_146 = arith.constant 0 : index
    %291 = vector.load %arg22[%c0_144, %c0_145, %c0_146] : memref<1x8x128xf32, #tpu.memory_space<vmem>>, vector<1x8x128xf32>
    %292 = vector.shape_cast %291 : vector<1x8x128xf32> to vector<8x128xf32>
    %293 = vector.shape_cast %290 : vector<8x128xf32> to vector<1x8x128xf32>
    tpu.vector_store %arg22[%c0_144, %c0_145, %c0_146], %293 {strides = array<i32>} : memref<1x8x128xf32, #tpu.memory_space<vmem>>, vector<1x8x128xf32>,
    return
  }
  func.func @transform_0(%arg0: i32) -> (i32, i32, i32) {
    %c0_i32 = arith.constant 0 : i32
    %c0_i32_0 = arith.constant 0 : i32
    %c0_i32_1 = arith.constant 0 : i32
    return %arg0, %c0_i32, %c0_i32_0 : i32, i32, i32
  }
  func.func @transform_1(%arg0: i32) -> (i32, i32) {
    %c0_i32 = arith.constant 0 : i32
    %c0_i32_0 = arith.constant 0 : i32
    %c0_i32_1 = arith.constant 0 : i32
    return %c0_i32, %c0_i32_0 : i32, i32
  }
  func.func @transform_2(%arg0: i32) -> (i32, i32) {
    %c0_i32 = arith.constant 0 : i32
    %c0_i32_0 = arith.constant 0 : i32
    %c0_i32_1 = arith.constant 0 : i32
    return %c0_i32, %c0_i32_0 : i32, i32
  }
  func.func @transform_3(%arg0: i32) -> (i32, i32) {
    %c0_i32 = arith.constant 0 : i32
    %c0_i32_0 = arith.constant 0 : i32
    %c0_i32_1 = arith.constant 0 : i32
    return %c0_i32, %c0_i32_0 : i32, i32
  }
  func.func @transform_4(%arg0: i32) -> (i32, i32) {
    %c0_i32 = arith.constant 0 : i32
    %c0_i32_0 = arith.constant 0 : i32
    %c0_i32_1 = arith.constant 0 : i32
    return %c0_i32, %c0_i32_0 : i32, i32
  }
  func.func @transform_5(%arg0: i32) -> (i32, i32, i32) {
    %c0_i32 = arith.constant 0 : i32
    %c0_i32_0 = arith.constant 0 : i32
    %c0_i32_1 = arith.constant 0 : i32
    %c0_i32_2 = arith.constant 0 : i32
    return %c0_i32, %c0_i32_0, %c0_i32_1 : i32, i32, i32
  }
  func.func @transform_6(%arg0: i32) -> (i32, i32, i32) {
    %c0_i32 = arith.constant 0 : i32
    %c0_i32_0 = arith.constant 0 : i32
    %c0_i32_1 = arith.constant 0 : i32
    %c0_i32_2 = arith.constant 0 : i32
    return %c0_i32, %c0_i32_0, %c0_i32_1 : i32, i32, i32
  }
  func.func @transform_7(%arg0: i32) -> (i32, i32, i32, i32) {
    %c0_i32 = arith.constant 0 : i32
    %c0_i32_0 = arith.constant 0 : i32
    %c0_i32_1 = arith.constant 0 : i32
    %c0_i32_2 = arith.constant 0 : i32
    %c0_i32_3 = arith.constant 0 : i32
    return %c0_i32, %c0_i32_0, %c0_i32_1, %c0_i32_2 : i32, i32, i32, i32
  }
  func.func @transform_8(%arg0: i32) -> (i32, i32, i32) {
    %c0_i32 = arith.constant 0 : i32
    %c0_i32_0 = arith.constant 0 : i32
    %c0_i32_1 = arith.constant 0 : i32
    %c0_i32_2 = arith.constant 0 : i32
    return %c0_i32, %c0_i32_0, %c0_i32_1 : i32, i32, i32
  }
  func.func @transform_9(%arg0: i32) -> (i32, i32, i32) {
    %c0_i32 = arith.constant 0 : i32
    %c0_i32_0 = arith.constant 0 : i32
    %c0_i32_1 = arith.constant 0 : i32
    %c0_i32_2 = arith.constant 0 : i32
    return %c0_i32, %c0_i32_0, %c0_i32_1 : i32, i32, i32
  }
  func.func @transform_10(%arg0: i32) -> (i32, i32, i32) {
    %c0_i32 = arith.constant 0 : i32
    %c0_i32_0 = arith.constant 0 : i32
    %c0_i32_1 = arith.constant 0 : i32
    %c0_i32_2 = arith.constant 0 : i32
    return %c0_i32, %c0_i32_0, %c0_i32_1 : i32, i32, i32
  }
  func.func @transform_11(%arg0: i32) -> (i32, i32, i32) {
    %c0_i32 = arith.constant 0 : i32
    %c0_i32_0 = arith.constant 0 : i32
    %c0_i32_1 = arith.constant 0 : i32
    %c0_i32_2 = arith.constant 0 : i32
    return %c0_i32, %c0_i32_0, %c0_i32_1 : i32, i32, i32
  }
  func.func @transform_12(%arg0: i32) -> (i32, i32, i32) {
    %c0_i32 = arith.constant 0 : i32
    %c0_i32_0 = arith.constant 0 : i32
    %c0_i32_1 = arith.constant 0 : i32
    %c0_i32_2 = arith.constant 0 : i32
    return %c0_i32, %c0_i32_0, %c0_i32_1 : i32, i32, i32
  }
  func.func @transform_13(%arg0: i32) -> (i32, i32, i32) {
    %c0_i32 = arith.constant 0 : i32
    %c0_i32_0 = arith.constant 0 : i32
    %c0_i32_1 = arith.constant 0 : i32
    %c0_i32_2 = arith.constant 0 : i32
    return %c0_i32, %c0_i32_0, %c0_i32_1 : i32, i32, i32
  }
  func.func @transform_14(%arg0: i32) -> (i32, i32, i32) {
    %c0_i32 = arith.constant 0 : i32
    %c0_i32_0 = arith.constant 0 : i32
    %c0_i32_1 = arith.constant 0 : i32
    %c0_i32_2 = arith.constant 0 : i32
    return %c0_i32, %c0_i32_0, %c0_i32_1 : i32, i32, i32
  }
  func.func @transform_15(%arg0: i32) -> (i32, i32, i32) {
    %c0_i32 = arith.constant 0 : i32
    %c0_i32_0 = arith.constant 0 : i32
    %c0_i32_1 = arith.constant 0 : i32
    %c0_i32_2 = arith.constant 0 : i32
    return %c0_i32, %c0_i32_0, %c0_i32_1 : i32, i32, i32
  }
  func.func @transform_16(%arg0: i32) -> (i32, i32, i32) {
    %c0_i32 = arith.constant 0 : i32
    %c0_i32_0 = arith.constant 0 : i32
    %c0_i32_1 = arith.constant 0 : i32
    %c0_i32_2 = arith.constant 0 : i32
    return %c0_i32, %c0_i32_0, %c0_i32_1 : i32, i32, i32
  }
  func.func @transform_17(%arg0: i32) -> (i32, i32) {
    %c0_i32 = arith.constant 0 : i32
    %c0_i32_0 = arith.constant 0 : i32
    %c0_i32_1 = arith.constant 0 : i32
    return %c0_i32, %c0_i32_0 : i32, i32
  }
  func.func @transform_18(%arg0: i32) -> (i32, i32) {
    %c0_i32 = arith.constant 0 : i32
    %c0_i32_0 = arith.constant 0 : i32
    %c0_i32_1 = arith.constant 0 : i32
    return %c0_i32, %c0_i32_0 : i32, i32
  }
  func.func @transform_19(%arg0: i32) -> (i32, i32) {
    %c0_i32 = arith.constant 0 : i32
    %c0_i32_0 = arith.constant 0 : i32
    %c0_i32_1 = arith.constant 0 : i32
    return %c0_i32, %c0_i32_0 : i32, i32
  }
  func.func @transform_20(%arg0: i32) -> (i32, i32) {
    %c0_i32 = arith.constant 0 : i32
    %c0_i32_0 = arith.constant 0 : i32
    %c0_i32_1 = arith.constant 0 : i32
    return %c0_i32, %c0_i32_0 : i32, i32
  }
  func.func @transform_21(%arg0: i32) -> (i32, i32, i32) {
    %c0_i32 = arith.constant 0 : i32
    %c0_i32_0 = arith.constant 0 : i32
    %c0_i32_1 = arith.constant 0 : i32
    return %arg0, %c0_i32, %c0_i32_0 : i32, i32, i32
  }
}

</mosaic_0001>

<llo_original>
// kernel: forward.1
$region0: #{forward.1}
  #allocation0 [shape = 'u32[]', space=smem, size = 0x4, offset = 0x4, fixed_abs, tag = 'smem constant byte address 0x4 - core index']
  #allocation1 [shape = 'u32[144,128]{1,0:T(1,128)}', space=vmem, size = 0x12000, scoped, tag = 'internal scratch']
  %s0 = inlined_call_operand.vmem [shape: s32[2,8,1], index: 0, kind: input, shape index: {}]
  %s1 = inlined_call_operand.vmem [shape: bf16[128,32], index: 1, kind: input, shape index: {}]
  %s2 = inlined_call_operand.vmem [shape: f32[8,32], index: 2, kind: input, shape index: {}]
  %s3 = inlined_call_operand.vmem [shape: f32[1,32], index: 3, kind: input, shape index: {}]
  %s4 = inlined_call_operand.vmem [shape: f32[1,32], index: 4, kind: input, shape index: {}]
  %s5 = inlined_call_operand.vmem [shape: bf16[2,32,96], index: 5, kind: input, shape index: {}]
  %s6 = inlined_call_operand.vmem [shape: f32[2,1,96], index: 6, kind: input, shape index: {}]
  %s7 = inlined_call_operand.vmem [shape: bf16[2,2,16,32], index: 7, kind: input, shape index: {}]
  %s8 = inlined_call_operand.vmem [shape: f32[2,1,32], index: 8, kind: input, shape index: {}]
  %s9 = inlined_call_operand.vmem [shape: f32[2,1,32], index: 9, kind: input, shape index: {}]
  %s10 = inlined_call_operand.vmem [shape: f32[2,1,32], index: 10, kind: input, shape index: {}]
  %s11 = inlined_call_operand.vmem [shape: bf16[2,32,64], index: 11, kind: input, shape index: {}]
  %s12 = inlined_call_operand.vmem [shape: f32[2,1,64], index: 12, kind: input, shape index: {}]
  %s13 = inlined_call_operand.vmem [shape: bf16[2,64,32], index: 13, kind: input, shape index: {}]
  %s14 = inlined_call_operand.vmem [shape: f32[2,1,32], index: 14, kind: input, shape index: {}]
  %s15 = inlined_call_operand.vmem [shape: f32[2,1,32], index: 15, kind: input, shape index: {}]
  %s16 = inlined_call_operand.vmem [shape: f32[2,1,32], index: 16, kind: input, shape index: {}]
  %s17 = inlined_call_operand.vmem [shape: bf16[32,32], index: 17, kind: input, shape index: {}]
  %s18 = inlined_call_operand.vmem [shape: f32[1,32], index: 18, kind: input, shape index: {}]
  %s19 = inlined_call_operand.vmem [shape: bf16[32,128], index: 19, kind: input, shape index: {}]
  %s20 = inlined_call_operand.vmem [shape: f32[1,128], index: 20, kind: input, shape index: {}]
  %s21 = inlined_call_operand.vmem [shape: f32[2,8,128], index: 21, kind: output, shape index: {}]
  %s22 = sld [smem:[#allocation0]]
  $region117: #{forward.1} parent=0
    _
  %s24 = ssub.s32 1, %s22
  %s25 = scalar_select 0, %s24, %s22
  loop: start=0, step=1, limit=4
  $region2: #{forward.1} parent=0 // loop_pre_header
    _
  $region3: #{forward.1} parent=0 // loop_header
    %s27 = sphi 0, %s31
    %p28 = scmp.ge.s32.totalorder %s27, 4
    %s37 = sphi 0, %s39
    %s40 = sphi 0, %s37
    %s41 = sphi 0, %s40
    %s57 = sphi 0, %s41
    %s61 = sphi 0, %s61
    %s63 = sphi 0, %s61
    %s64 = sphi 0, %s63
    %s78 = sphi 0, %s64
    %s82 = sphi 0, %s82
    %s84 = sphi 0, %s82
    %s85 = sphi 0, %s84
    %s99 = sphi 0, %s85
    %s103 = sphi 0, %s103
    %s105 = sphi 0, %s103
    %s106 = sphi 0, %s105
    %s120 = sphi 0, %s106
    %s124 = sphi 0, %s124
    %s126 = sphi 0, %s124
    %s127 = sphi 0, %s126
    %s141 = sphi 0, %s127
    %s145 = sphi 0, %s145
    %s147 = sphi 0, %s145
    %s148 = sphi 0, %s147
    %s162 = sphi 0, %s148
    %s166 = sphi 0, %s166
    %s168 = sphi 0, %s166
    %s169 = sphi 0, %s168
    %s183 = sphi 0, %s169
    %s187 = sphi 0, %s187
    %s189 = sphi 0, %s187
    %s190 = sphi 0, %s189
    %s204 = sphi 0, %s190
    %s208 = sphi 0, %s208
    %s210 = sphi 0, %s208
    %s211 = sphi 0, %s210
    %s225 = sphi 0, %s211
    %s229 = sphi 0, %s229
    %s231 = sphi 0, %s229
    %s232 = sphi 0, %s231
    %s246 = sphi 0, %s232
    %s250 = sphi 0, %s250
    %s252 = sphi 0, %s250
    %s253 = sphi 0, %s252
    %s267 = sphi 0, %s253
    %s271 = sphi 0, %s271
    %s273 = sphi 0, %s271
    %s274 = sphi 0, %s273
    %s288 = sphi 0, %s274
    %s292 = sphi 0, %s292
    %s294 = sphi 0, %s292
    %s295 = sphi 0, %s294
    %s309 = sphi 0, %s295
    %s313 = sphi 0, %s313
    %s315 = sphi 0, %s313
    %s316 = sphi 0, %s315
    %s330 = sphi 0, %s316
    %s334 = sphi 0, %s334
    %s336 = sphi 0, %s334
    %s337 = sphi 0, %s336
    %s351 = sphi 0, %s337
    %s355 = sphi 0, %s355
    %s357 = sphi 0, %s355
    %s358 = sphi 0, %s357
    %s372 = sphi 0, %s358
    %s376 = sphi 0, %s376
    %s378 = sphi 0, %s376
    %s379 = sphi 0, %s378
    %s393 = sphi 0, %s379
    %s397 = sphi 0, %s397
    %s399 = sphi 0, %s397
    %s400 = sphi 0, %s399
    %s414 = sphi 0, %s400
    %s418 = sphi 0, %s418
    %s420 = sphi 0, %s418
    %s421 = sphi 0, %s420
    %s435 = sphi 0, %s421
    %s439 = sphi 0, %s439
    %s441 = sphi 0, %s439
    %s442 = sphi 0, %s441
    %s456 = sphi 0, %s442
    %s460 = sphi 0, %s460
    %s462 = sphi 0, %s460
    %s463 = sphi 0, %s462
    %s477 = sphi 0, %s463
    %s483 = sphi 0, %s485
    %s486 = sphi 0, %s483
    %s487 = sphi 0, %s486
    %s503 = sphi 0, %s487
  $region4: #{forward.1} parent=0 // loop_header_branch
    %30 = sbr.rel (%p28) target = $region8
  $region5: #{forward.1} parent=0 // loop_body
    %s32 = ssub.s32 %s27, 1
    %s33 = ssub.s32 %s27, 2
    %s34 = sadd.s32 %s27, 1
    %s35 = ssub.s32 %s27, %s34
    %p36 = scmp.eq.s32.totalorder %s35, 0
    %s38 = sadd.s32 %s37, 1
    %s39 = scalar_select %p36, %s37, %s38
    %p42 = pneg %p36
    %p43 = scmp.eq.s32.totalorder %s27, 1
    %p44 = por %p42, %p43
    %p45 = scmp.ne.s32.totalorder %s37, %s40
    %p46 = scmp.eq.s32.totalorder %s27, 0
    %p47 = por %p45, %p46
    %p48 = scmp.ne.s32.totalorder %s37, %s40
    %p49 = scmp.eq.s32.totalorder %s32, 1
    %p50 = por %p48, %p49
    %p51 = scmp.ne.s32.totalorder %s40, %s41
    %p52 = scmp.eq.s32.totalorder %s32, 0
    %p53 = por %p51, %p52
    %p54 = scmp.ne.s32.totalorder %s40, %s41
    %p55 = scmp.eq.s32.totalorder %s33, 1
    %p56 = por %p54, %p55
    %p58 = scmp.ne.s32.totalorder %s41, %s57
    %p59 = scmp.eq.s32.totalorder %s33, 0
    %p60 = por %p58, %p59
    %s62 = sadd.s32 %s61, 1
    %p65 = scmp.eq.s32.totalorder %s27, 1
    %p66 = scmp.ne.s32.totalorder %s61, %s63
    %p67 = scmp.eq.s32.totalorder %s27, 0
    %p68 = por %p66, %p67
    %p69 = scmp.ne.s32.totalorder %s61, %s63
    %p70 = scmp.eq.s32.totalorder %s32, 1
    %p71 = por %p69, %p70
    %p72 = scmp.ne.s32.totalorder %s63, %s64
    %p73 = scmp.eq.s32.totalorder %s32, 0
    %p74 = por %p72, %p73
    %p75 = scmp.ne.s32.totalorder %s63, %s64
    %p76 = scmp.eq.s32.totalorder %s33, 1
    %p77 = por %p75, %p76
    %p79 = scmp.ne.s32.totalorder %s64, %s78
    %p80 = scmp.eq.s32.totalorder %s33, 0
    %p81 = por %p79, %p80
    %s83 = sadd.s32 %s82, 1
    %p86 = scmp.eq.s32.totalorder %s27, 1
    %p87 = scmp.ne.s32.totalorder %s82, %s84
    %p88 = scmp.eq.s32.totalorder %s27, 0
    %p89 = por %p87, %p88
    %p90 = scmp.ne.s32.totalorder %s82, %s84
    %p91 = scmp.eq.s32.totalorder %s32, 1
    %p92 = por %p90, %p91
    %p93 = scmp.ne.s32.totalorder %s84, %s85
    %p94 = scmp.eq.s32.totalorder %s32, 0
    %p95 = por %p93, %p94
    %p96 = scmp.ne.s32.totalorder %s84, %s85
    %p97 = scmp.eq.s32.totalorder %s33, 1
    %p98 = por %p96, %p97
    %p100 = scmp.ne.s32.totalorder %s85, %s99
    %p101 = scmp.eq.s32.totalorder %s33, 0
    %p102 = por %p100, %p101
    %s104 = sadd.s32 %s103, 1
    %p107 = scmp.eq.s32.totalorder %s27, 1
    %p108 = scmp.ne.s32.totalorder %s103, %s105
    %p109 = scmp.eq.s32.totalorder %s27, 0
    %p110 = por %p108, %p109
    %p111 = scmp.ne.s32.totalorder %s103, %s105
    %p112 = scmp.eq.s32.totalorder %s32, 1
    %p113 = por %p111, %p112
    %p114 = scmp.ne.s32.totalorder %s105, %s106
    %p115 = scmp.eq.s32.totalorder %s32, 0
    %p116 = por %p114, %p115
    %p117 = scmp.ne.s32.totalorder %s105, %s106
    %p118 = scmp.eq.s32.totalorder %s33, 1
    %p119 = por %p117, %p118
    %p121 = scmp.ne.s32.totalorder %s106, %s120
    %p122 = scmp.eq.s32.totalorder %s33, 0
    %p123 = por %p121, %p122
    %s125 = sadd.s32 %s124, 1
    %p128 = scmp.eq.s32.totalorder %s27, 1
    %p129 = scmp.ne.s32.totalorder %s124, %s126
    %p130 = scmp.eq.s32.totalorder %s27, 0
    %p131 = por %p129, %p130
    %p132 = scmp.ne.s32.totalorder %s124, %s126
    %p133 = scmp.eq.s32.totalorder %s32, 1
    %p134 = por %p132, %p133
    %p135 = scmp.ne.s32.totalorder %s126, %s127
    %p136 = scmp.eq.s32.totalorder %s32, 0
    %p137 = por %p135, %p136
    %p138 = scmp.ne.s32.totalorder %s126, %s127
    %p139 = scmp.eq.s32.totalorder %s33, 1
    %p140 = por %p138, %p139
    %p142 = scmp.ne.s32.totalorder %s127, %s141
    %p143 = scmp.eq.s32.totalorder %s33, 0
    %p144 = por %p142, %p143
    %s146 = sadd.s32 %s145, 1
    %p149 = scmp.eq.s32.totalorder %s27, 1
    %p150 = scmp.ne.s32.totalorder %s145, %s147
    %p151 = scmp.eq.s32.totalorder %s27, 0
    %p152 = por %p150, %p151
    %p153 = scmp.ne.s32.totalorder %s145, %s147
    %p154 = scmp.eq.s32.totalorder %s32, 1
    %p155 = por %p153, %p154
    %p156 = scmp.ne.s32.totalorder %s147, %s148
    %p157 = scmp.eq.s32.totalorder %s32, 0
    %p158 = por %p156, %p157
    %p159 = scmp.ne.s32.totalorder %s147, %s148
    %p160 = scmp.eq.s32.totalorder %s33, 1
    %p161 = por %p159, %p160
    %p163 = scmp.ne.s32.totalorder %s148, %s162
    %p164 = scmp.eq.s32.totalorder %s33, 0
    %p165 = por %p163, %p164
    %s167 = sadd.s32 %s166, 1
    %p170 = scmp.eq.s32.totalorder %s27, 1
    %p171 = scmp.ne.s32.totalorder %s166, %s168
    %p172 = scmp.eq.s32.totalorder %s27, 0
    %p173 = por %p171, %p172
    %p174 = scmp.ne.s32.totalorder %s166, %s168
    %p175 = scmp.eq.s32.totalorder %s32, 1
    %p176 = por %p174, %p175
    %p177 = scmp.ne.s32.totalorder %s168, %s169
    %p178 = scmp.eq.s32.totalorder %s32, 0
    %p179 = por %p177, %p178
    %p180 = scmp.ne.s32.totalorder %s168, %s169
    %p181 = scmp.eq.s32.totalorder %s33, 1
    %p182 = por %p180, %p181
    %p184 = scmp.ne.s32.totalorder %s169, %s183
    %p185 = scmp.eq.s32.totalorder %s33, 0
    %p186 = por %p184, %p185
    %s188 = sadd.s32 %s187, 1
    %p191 = scmp.eq.s32.totalorder %s27, 1
    %p192 = scmp.ne.s32.totalorder %s187, %s189
    %p193 = scmp.eq.s32.totalorder %s27, 0
    %p194 = por %p192, %p193
    %p195 = scmp.ne.s32.totalorder %s187, %s189
    %p196 = scmp.eq.s32.totalorder %s32, 1
    %p197 = por %p195, %p196
    %p198 = scmp.ne.s32.totalorder %s189, %s190
    %p199 = scmp.eq.s32.totalorder %s32, 0
    %p200 = por %p198, %p199
    %p201 = scmp.ne.s32.totalorder %s189, %s190
    %p202 = scmp.eq.s32.totalorder %s33, 1
    %p203 = por %p201, %p202
    %p205 = scmp.ne.s32.totalorder %s190, %s204
    %p206 = scmp.eq.s32.totalorder %s33, 0
    %p207 = por %p205, %p206
    %s209 = sadd.s32 %s208, 1
    %p212 = scmp.eq.s32.totalorder %s27, 1
    %p213 = scmp.ne.s32.totalorder %s208, %s210
    %p214 = scmp.eq.s32.totalorder %s27, 0
    %p215 = por %p213, %p214
    %p216 = scmp.ne.s32.totalorder %s208, %s210
    %p217 = scmp.eq.s32.totalorder %s32, 1
    %p218 = por %p216, %p217
    %p219 = scmp.ne.s32.totalorder %s210, %s211
    %p220 = scmp.eq.s32.totalorder %s32, 0
    %p221 = por %p219, %p220
    %p222 = scmp.ne.s32.totalorder %s210, %s211
    %p223 = scmp.eq.s32.totalorder %s33, 1
    %p224 = por %p222, %p223
    %p226 = scmp.ne.s32.totalorder %s211, %s225
    %p227 = scmp.eq.s32.totalorder %s33, 0
    %p228 = por %p226, %p227
    %s230 = sadd.s32 %s229, 1
    %p233 = scmp.eq.s32.totalorder %s27, 1
    %p234 = scmp.ne.s32.totalorder %s229, %s231
    %p235 = scmp.eq.s32.totalorder %s27, 0
    %p236 = por %p234, %p235
    %p237 = scmp.ne.s32.totalorder %s229, %s231
    %p238 = scmp.eq.s32.totalorder %s32, 1
    %p239 = por %p237, %p238
    %p240 = scmp.ne.s32.totalorder %s231, %s232
    %p241 = scmp.eq.s32.totalorder %s32, 0
    %p242 = por %p240, %p241
    %p243 = scmp.ne.s32.totalorder %s231, %s232
    %p244 = scmp.eq.s32.totalorder %s33, 1
    %p245 = por %p243, %p244
    %p247 = scmp.ne.s32.totalorder %s232, %s246
    %p248 = scmp.eq.s32.totalorder %s33, 0
    %p249 = por %p247, %p248
    %s251 = sadd.s32 %s250, 1
    %p254 = scmp.eq.s32.totalorder %s27, 1
    %p255 = scmp.ne.s32.totalorder %s250, %s252
    %p256 = scmp.eq.s32.totalorder %s27, 0
    %p257 = por %p255, %p256
    %p258 = scmp.ne.s32.totalorder %s250, %s252
    %p259 = scmp.eq.s32.totalorder %s32, 1
    %p260 = por %p258, %p259
    %p261 = scmp.ne.s32.totalorder %s252, %s253
    %p262 = scmp.eq.s32.totalorder %s32, 0
    %p263 = por %p261, %p262
    %p264 = scmp.ne.s32.totalorder %s252, %s253
    %p265 = scmp.eq.s32.totalorder %s33, 1
    %p266 = por %p264, %p265
    %p268 = scmp.ne.s32.totalorder %s253, %s267
    %p269 = scmp.eq.s32.totalorder %s33, 0
    %p270 = por %p268, %p269
    %s272 = sadd.s32 %s271, 1
    %p275 = scmp.eq.s32.totalorder %s27, 1
    %p276 = scmp.ne.s32.totalorder %s271, %s273
    %p277 = scmp.eq.s32.totalorder %s27, 0
    %p278 = por %p276, %p277
    %p279 = scmp.ne.s32.totalorder %s271, %s273
    %p280 = scmp.eq.s32.totalorder %s32, 1
    %p281 = por %p279, %p280
    %p282 = scmp.ne.s32.totalorder %s273, %s274
    %p283 = scmp.eq.s32.totalorder %s32, 0
    %p284 = por %p282, %p283
    %p285 = scmp.ne.s32.totalorder %s273, %s274
    %p286 = scmp.eq.s32.totalorder %s33, 1
    %p287 = por %p285, %p286
    %p289 = scmp.ne.s32.totalorder %s274, %s288
    %p290 = scmp.eq.s32.totalorder %s33, 0
    %p291 = por %p289, %p290
    %s293 = sadd.s32 %s292, 1
    %p296 = scmp.eq.s32.totalorder %s27, 1
    %p297 = scmp.ne.s32.totalorder %s292, %s294
    %p298 = scmp.eq.s32.totalorder %s27, 0
    %p299 = por %p297, %p298
    %p300 = scmp.ne.s32.totalorder %s292, %s294
    %p301 = scmp.eq.s32.totalorder %s32, 1
    %p302 = por %p300, %p301
    %p303 = scmp.ne.s32.totalorder %s294, %s295
    %p304 = scmp.eq.s32.totalorder %s32, 0
    %p305 = por %p303, %p304
    %p306 = scmp.ne.s32.totalorder %s294, %s295
    %p307 = scmp.eq.s32.totalorder %s33, 1
    %p308 = por %p306, %p307
    %p310 = scmp.ne.s32.totalorder %s295, %s309
    %p311 = scmp.eq.s32.totalorder %s33, 0
    %p312 = por %p310, %p311
    %s314 = sadd.s32 %s313, 1
    %p317 = scmp.eq.s32.totalorder %s27, 1
    %p318 = scmp.ne.s32.totalorder %s313, %s315
    %p319 = scmp.eq.s32.totalorder %s27, 0
    %p320 = por %p318, %p319
    %p321 = scmp.ne.s32.totalorder %s313, %s315
    %p322 = scmp.eq.s32.totalorder %s32, 1
    %p323 = por %p321, %p322
    %p324 = scmp.ne.s32.totalorder %s315, %s316
    %p325 = scmp.eq.s32.totalorder %s32, 0
    %p326 = por %p324, %p325
    %p327 = scmp.ne.s32.totalorder %s315, %s316
    %p328 = scmp.eq.s32.totalorder %s33, 1
    %p329 = por %p327, %p328
    %p331 = scmp.ne.s32.totalorder %s316, %s330
    %p332 = scmp.eq.s32.totalorder %s33, 0
    %p333 = por %p331, %p332
    %s335 = sadd.s32 %s334, 1
    %p338 = scmp.eq.s32.totalorder %s27, 1
    %p339 = scmp.ne.s32.totalorder %s334, %s336
    %p340 = scmp.eq.s32.totalorder %s27, 0
    %p341 = por %p339, %p340
    %p342 = scmp.ne.s32.totalorder %s334, %s336
    %p343 = scmp.eq.s32.totalorder %s32, 1
    %p344 = por %p342, %p343
    %p345 = scmp.ne.s32.totalorder %s336, %s337
    %p346 = scmp.eq.s32.totalorder %s32, 0
    %p347 = por %p345, %p346
    %p348 = scmp.ne.s32.totalorder %s336, %s337
    %p349 = scmp.eq.s32.totalorder %s33, 1
    %p350 = por %p348, %p349
    %p352 = scmp.ne.s32.totalorder %s337, %s351
    %p353 = scmp.eq.s32.totalorder %s33, 0
    %p354 = por %p352, %p353
    %s356 = sadd.s32 %s355, 1
    %p359 = scmp.eq.s32.totalorder %s27, 1
    %p360 = scmp.ne.s32.totalorder %s355, %s357
    %p361 = scmp.eq.s32.totalorder %s27, 0
    %p362 = por %p360, %p361
    %p363 = scmp.ne.s32.totalorder %s355, %s357
    %p364 = scmp.eq.s32.totalorder %s32, 1
    %p365 = por %p363, %p364
    %p366 = scmp.ne.s32.totalorder %s357, %s358
    %p367 = scmp.eq.s32.totalorder %s32, 0
    %p368 = por %p366, %p367
    %p369 = scmp.ne.s32.totalorder %s357, %s358
    %p370 = scmp.eq.s32.totalorder %s33, 1
    %p371 = por %p369, %p370
    %p373 = scmp.ne.s32.totalorder %s358, %s372
    %p374 = scmp.eq.s32.totalorder %s33, 0
    %p375 = por %p373, %p374
    %s377 = sadd.s32 %s376, 1
    %p380 = scmp.eq.s32.totalorder %s27, 1
    %p381 = scmp.ne.s32.totalorder %s376, %s378
    %p382 = scmp.eq.s32.totalorder %s27, 0
    %p383 = por %p381, %p382
    %p384 = scmp.ne.s32.totalorder %s376, %s378
    %p385 = scmp.eq.s32.totalorder %s32, 1
    %p386 = por %p384, %p385
    %p387 = scmp.ne.s32.totalorder %s378, %s379
    %p388 = scmp.eq.s32.totalorder %s32, 0
    %p389 = por %p387, %p388
    %p390 = scmp.ne.s32.totalorder %s378, %s379
    %p391 = scmp.eq.s32.totalorder %s33, 1
    %p392 = por %p390, %p391
    %p394 = scmp.ne.s32.totalorder %s379, %s393
    %p395 = scmp.eq.s32.totalorder %s33, 0
    %p396 = por %p394, %p395
    %s398 = sadd.s32 %s397, 1
    %p401 = scmp.eq.s32.totalorder %s27, 1
    %p402 = scmp.ne.s32.totalorder %s397, %s399
    %p403 = scmp.eq.s32.totalorder %s27, 0
    %p404 = por %p402, %p403
    %p405 = scmp.ne.s32.totalorder %s397, %s399
    %p406 = scmp.eq.s32.totalorder %s32, 1
    %p407 = por %p405, %p406
    %p408 = scmp.ne.s32.totalorder %s399, %s400
    %p409 = scmp.eq.s32.totalorder %s32, 0
    %p410 = por %p408, %p409
    %p411 = scmp.ne.s32.totalorder %s399, %s400
    %p412 = scmp.eq.s32.totalorder %s33, 1
    %p413 = por %p411, %p412
    %p415 = scmp.ne.s32.totalorder %s400, %s414
    %p416 = scmp.eq.s32.totalorder %s33, 0
    %p417 = por %p415, %p416
    %s419 = sadd.s32 %s418, 1
    %p422 = scmp.eq.s32.totalorder %s27, 1
    %p423 = scmp.ne.s32.totalorder %s418, %s420
    %p424 = scmp.eq.s32.totalorder %s27, 0
    %p425 = por %p423, %p424
    %p426 = scmp.ne.s32.totalorder %s418, %s420
    %p427 = scmp.eq.s32.totalorder %s32, 1
    %p428 = por %p426, %p427
    %p429 = scmp.ne.s32.totalorder %s420, %s421
    %p430 = scmp.eq.s32.totalorder %s32, 0
    %p431 = por %p429, %p430
    %p432 = scmp.ne.s32.totalorder %s420, %s421
    %p433 = scmp.eq.s32.totalorder %s33, 1
    %p434 = por %p432, %p433
    %p436 = scmp.ne.s32.totalorder %s421, %s435
    %p437 = scmp.eq.s32.totalorder %s33, 0
    %p438 = por %p436, %p437
    %s440 = sadd.s32 %s439, 1
    %p443 = scmp.eq.s32.totalorder %s27, 1
    %p444 = scmp.ne.s32.totalorder %s439, %s441
    %p445 = scmp.eq.s32.totalorder %s27, 0
    %p446 = por %p444, %p445
    %p447 = scmp.ne.s32.totalorder %s439, %s441
    %p448 = scmp.eq.s32.totalorder %s32, 1
    %p449 = por %p447, %p448
    %p450 = scmp.ne.s32.totalorder %s441, %s442
    %p451 = scmp.eq.s32.totalorder %s32, 0
    %p452 = por %p450, %p451
    %p453 = scmp.ne.s32.totalorder %s441, %s442
    %p454 = scmp.eq.s32.totalorder %s33, 1
    %p455 = por %p453, %p454
    %p457 = scmp.ne.s32.totalorder %s442, %s456
    %p458 = scmp.eq.s32.totalorder %s33, 0
    %p459 = por %p457, %p458
    %s461 = sadd.s32 %s460, 1
    %p464 = scmp.eq.s32.totalorder %s27, 1
    %p465 = scmp.ne.s32.totalorder %s460, %s462
    %p466 = scmp.eq.s32.totalorder %s27, 0
    %p467 = por %p465, %p466
    %p468 = scmp.ne.s32.totalorder %s460, %s462
    %p469 = scmp.eq.s32.totalorder %s32, 1
    %p470 = por %p468, %p469
    %p471 = scmp.ne.s32.totalorder %s462, %s463
    %p472 = scmp.eq.s32.totalorder %s32, 0
    %p473 = por %p471, %p472
    %p474 = scmp.ne.s32.totalorder %s462, %s463
    %p475 = scmp.eq.s32.totalorder %s33, 1
    %p476 = por %p474, %p475
    %p478 = scmp.ne.s32.totalorder %s463, %s477
    %p479 = scmp.eq.s32.totalorder %s33, 0
    %p480 = por %p478, %p479
    %s481 = ssub.s32 %s27, %s34
    %p482 = scmp.eq.s32.totalorder %s481, 0
    %s484 = sadd.s32 %s483, 1
    %s485 = scalar_select %p482, %s483, %s484
    %p488 = pneg %p482
    %p489 = scmp.eq.s32.totalorder %s27, 1
    %p490 = por %p488, %p489
    %p491 = scmp.ne.s32.totalorder %s483, %s486
    %p492 = scmp.eq.s32.totalorder %s27, 0
    %p493 = por %p491, %p492
    %p494 = scmp.ne.s32.totalorder %s483, %s486
    %p495 = scmp.eq.s32.totalorder %s32, 1
    %p496 = por %p494, %p495
    %p497 = scmp.ne.s32.totalorder %s486, %s487
    %p498 = scmp.eq.s32.totalorder %s32, 0
    %p499 = por %p497, %p498
    %p500 = scmp.ne.s32.totalorder %s486, %s487
    %p501 = scmp.eq.s32.totalorder %s33, 1
    %p502 = por %p500, %p501
    %p504 = scmp.ne.s32.totalorder %s487, %s503
    %p505 = scmp.eq.s32.totalorder %s33, 0
    %p506 = por %p504, %p505
    %p507 = scmp.le.s32.totalorder 1, %s27
    %p508 = scmp.lt.s32.totalorder %s27, 3
    %p509 = pnand %p507, %p508
    %p510 = pneg %p509
    // Predicated region
    $region9: #{forward.1} parent=5 // pred_check
      _
    $region10: #{forward.1} parent=5 // pred_check_branch
      %512 = sbr.rel (%p509) target = $region12
    $region11: #{forward.1} parent=5 // pred_region
      %s513 = ssub.s32 %s27, 1
      // Predicated region
      $region13: #{forward.1} parent=11 // pred_check
        %p514 = pneg %p74
      $region14: #{forward.1} parent=11 // pred_check_branch
        %516 = sbr.rel (%p514) target = $region16
      $region15: #{forward.1} parent=11 // pred_region
        _
      $region16: #{forward.1} parent=11 // pred_fallthru
        _
      // Predicated region
      $region17: #{forward.1} parent=11 // pred_check
        %p517 = pneg %p95
      $region18: #{forward.1} parent=11 // pred_check_branch
        %519 = sbr.rel (%p517) target = $region20
      $region19: #{forward.1} parent=11 // pred_region
        _
      $region20: #{forward.1} parent=11 // pred_fallthru
        _
      // Predicated region
      $region21: #{forward.1} parent=11 // pred_check
        %p520 = pneg %p116
      $region22: #{forward.1} parent=11 // pred_check_branch
        %522 = sbr.rel (%p520) target = $region24
      $region23: #{forward.1} parent=11 // pred_region
        _
      $region24: #{forward.1} parent=11 // pred_fallthru
        _
      // Predicated region
      $region25: #{forward.1} parent=11 // pred_check
        %p523 = pneg %p137
      $region26: #{forward.1} parent=11 // pred_check_branch
        %525 = sbr.rel (%p523) target = $region28
      $region27: #{forward.1} parent=11 // pred_region
        _
      $region28: #{forward.1} parent=11 // pred_fallthru
        _
      // Predicated region
      $region29: #{forward.1} parent=11 // pred_check
        %p526 = pneg %p158
      $region30: #{forward.1} parent=11 // pred_check_branch
        %528 = sbr.rel (%p526) target = $region32
      $region31: #{forward.1} parent=11 // pred_region
        _
      $region32: #{forward.1} parent=11 // pred_fallthru
        _
      // Predicated region
      $region33: #{forward.1} parent=11 // pred_check
        %p529 = pneg %p179
      $region34: #{forward.1} parent=11 // pred_check_branch
        %531 = sbr.rel (%p529) target = $region36
      $region35: #{forward.1} parent=11 // pred_region
        _
      $region36: #{forward.1} parent=11 // pred_fallthru
        _
      // Predicated region
      $region37: #{forward.1} parent=11 // pred_check
        %p532 = pneg %p200
      $region38: #{forward.1} parent=11 // pred_check_branch
        %534 = sbr.rel (%p532) target = $region40
      $region39: #{forward.1} parent=11 // pred_region
        _
      $region40: #{forward.1} parent=11 // pred_fallthru
        _
      // Predicated region
      $region41: #{forward.1} parent=11 // pred_check
        %p535 = pneg %p221
      $region42: #{forward.1} parent=11 // pred_check_branch
        %537 = sbr.rel (%p535) target = $region44
      $region43: #{forward.1} parent=11 // pred_region
        _
      $region44: #{forward.1} parent=11 // pred_fallthru
        _
      // Predicated region
      $region45: #{forward.1} parent=11 // pred_check
        %p538 = pneg %p242
      $region46: #{forward.1} parent=11 // pred_check_branch
        %540 = sbr.rel (%p538) target = $region48
      $region47: #{forward.1} parent=11 // pred_region
        _
      $region48: #{forward.1} parent=11 // pred_fallthru
        _
      // Predicated region
      $region49: #{forward.1} parent=11 // pred_check
        %p541 = pneg %p263
      $region50: #{forward.1} parent=11 // pred_check_branch
        %543 = sbr.rel (%p541) target = $region52
      $region51: #{forward.1} parent=11 // pred_region
        _
      $region52: #{forward.1} parent=11 // pred_fallthru
        _
      // Predicated region
      $region53: #{forward.1} parent=11 // pred_check
        %p544 = pneg %p284
      $region54: #{forward.1} parent=11 // pred_check_branch
        %546 = sbr.rel (%p544) target = $region56
      $region55: #{forward.1} parent=11 // pred_region
        _
      $region56: #{forward.1} parent=11 // pred_fallthru
        _
      // Predicated region
      $region57: #{forward.1} parent=11 // pred_check
        %p547 = pneg %p305
      $region58: #{forward.1} parent=11 // pred_check_branch
        %549 = sbr.rel (%p547) target = $region60
      $region59: #{forward.1} parent=11 // pred_region
        _
      $region60: #{forward.1} parent=11 // pred_fallthru
        _
      // Predicated region
      $region61: #{forward.1} parent=11 // pred_check
        %p550 = pneg %p326
      $region62: #{forward.1} parent=11 // pred_check_branch
        %552 = sbr.rel (%p550) target = $region64
      $region63: #{forward.1} parent=11 // pred_region
        _
      $region64: #{forward.1} parent=11 // pred_fallthru
        _
      // Predicated region
      $region65: #{forward.1} parent=11 // pred_check
        %p553 = pneg %p347
      $region66: #{forward.1} parent=11 // pred_check_branch
        %555 = sbr.rel (%p553) target = $region68
      $region67: #{forward.1} parent=11 // pred_region
        _
      $region68: #{forward.1} parent=11 // pred_fallthru
        _
      // Predicated region
      $region69: #{forward.1} parent=11 // pred_check
        %p556 = pneg %p368
      $region70: #{forward.1} parent=11 // pred_check_branch
        %558 = sbr.rel (%p556) target = $region72
      $region71: #{forward.1} parent=11 // pred_region
        _
      $region72: #{forward.1} parent=11 // pred_fallthru
        _
      // Predicated region
      $region73: #{forward.1} parent=11 // pred_check
        %p559 = pneg %p389
      $region74: #{forward.1} parent=11 // pred_check_branch
        %561 = sbr.rel (%p559) target = $region76
      $region75: #{forward.1} parent=11 // pred_region
        _
      $region76: #{forward.1} parent=11 // pred_fallthru
        _
      // Predicated region
      $region77: #{forward.1} parent=11 // pred_check
        %p562 = pneg %p410
      $region78: #{forward.1} parent=11 // pred_check_branch
        %564 = sbr.rel (%p562) target = $region80
      $region79: #{forward.1} parent=11 // pred_region
        _
      $region80: #{forward.1} parent=11 // pred_fallthru
        _
      // Predicated region
      $region81: #{forward.1} parent=11 // pred_check
        %p565 = pneg %p431
      $region82: #{forward.1} parent=11 // pred_check_branch
        %567 = sbr.rel (%p565) target = $region84
      $region83: #{forward.1} parent=11 // pred_region
        _
      $region84: #{forward.1} parent=11 // pred_fallthru
        _
      // Predicated region
      $region85: #{forward.1} parent=11 // pred_check
        %p568 = pneg %p452
      $region86: #{forward.1} parent=11 // pred_check_branch
        %570 = sbr.rel (%p568) target = $region88
      $region87: #{forward.1} parent=11 // pred_region
        _
      $region88: #{forward.1} parent=11 // pred_fallthru
        _
      // Predicated region
      $region89: #{forward.1} parent=11 // pred_check
        %p571 = pneg %p473
      $region90: #{forward.1} parent=11 // pred_check_branch
        %573 = sbr.rel (%p571) target = $region92
      $region91: #{forward.1} parent=11 // pred_region
        _
      $region92: #{forward.1} parent=11 // pred_fallthru
        _
    $region12: #{forward.1} parent=5 // pred_fallthru
      _
    %p574 = scmp.lt.s32.totalorder %s27, 2
    // Predicated region
    $region93: #{forward.1} parent=5 // pred_check
      %p575 = pneg %p574
    $region94: #{forward.1} parent=5 // pred_check_branch
      %577 = sbr.rel (%p575) target = $region96
    $region95: #{forward.1} parent=5 // pred_region
      // Predicated region
      $region97: #{forward.1} parent=95 // pred_check
        %p578 = pneg %p47
      $region98: #{forward.1} parent=95 // pred_check_branch
        %580 = sbr.rel (%p578) target = $region100
      $region99: #{forward.1} parent=95 // pred_region
        %p581 = scmp.lt.s32.totalorder %s27, 1
        %s582 = scalar_select %p581, %s27, 1
        %s583 = smul.addr %s582, 8
        %s584 = scalar_lea.vmem %s0, %s583
      $region100: #{forward.1} parent=95 // pred_fallthru
        _
    $region96: #{forward.1} parent=5 // pred_fallthru
      _
    %p585 = scmp.le.s32.totalorder 1, %s27
    %p586 = scmp.lt.s32.totalorder %s27, 3
    %p587 = pnand %p585, %p586
    %p588 = pneg %p587
    // Predicated region
    $region101: #{forward.1} parent=5 // pred_check
      _
    $region102: #{forward.1} parent=5 // pred_check_branch
      %590 = sbr.rel (%p587) target = $region104
    $region103: #{forward.1} parent=5 // pred_region
      %s591 = ssub.s32 %s27, 1
      %p592 = scmp.lt.s32.totalorder %s32, 1
      %s593 = scalar_select %p592, %s32, 1
      %s594 = smul.addr %s593, 8
      %s595 = scalar_lea.vmem %s0, %s594
      %p596 = pneg %p53
      %p597 = pneg %p50
      %p598 = pneg %p74
      %p599 = pneg %p71
      %p600 = pneg %p95
      %p601 = pneg %p92
      %p602 = pneg %p116
      %p603 = pneg %p113
      %p604 = pneg %p137
      %p605 = pneg %p134
      %p606 = pneg %p158
      %p607 = pneg %p155
      %p608 = pneg %p179
      %p609 = pneg %p176
      %p610 = pneg %p200
      %p611 = pneg %p197
      %p612 = pneg %p221
      %p613 = pneg %p218
      %p614 = pneg %p242
      %p615 = pneg %p239
      %p616 = pneg %p263
      %p617 = pneg %p260
      %p618 = pneg %p284
      %p619 = pneg %p281
      %p620 = pneg %p305
      %p621 = pneg %p302
      %p622 = pneg %p326
      %p623 = pneg %p323
      %p624 = pneg %p347
      %p625 = pneg %p344
      %p626 = pneg %p368
      %p627 = pneg %p365
      %p628 = pneg %p389
      %p629 = pneg %p386
      %p630 = pneg %p410
      %p631 = pneg %p407
      %p632 = pneg %p431
      %p633 = pneg %p428
      %p634 = pneg %p452
      %p635 = pneg %p449
      %p636 = pneg %p473
      %p637 = pneg %p470
      %p638 = pneg %p499
      %p639 = pneg %p496
      %p640 = scmp.lt.s32.totalorder %s32, 1
      %s641 = scalar_select %p640, %s32, 1
      %s642 = smul.addr %s641, 8
      %s643 = scalar_lea.vmem %s21, %s642
      %p644 = scmp.lt.s32.totalorder %s32, 1
      %s645 = scalar_select %p644, %s32, 1
      %s646 = smul.addr %s645, 8
      %s647 = scalar_lea.vmem %s0, %s646
      %p648 = scmp.lt.s32.totalorder %s32, 1
      %s649 = scalar_select %p648, %s32, 1
      %s650 = smul.addr %s649, 8
      %s651 = scalar_lea.vmem %s21, %s650
      %v653 = vld [vmem:[%s647] sm:$0xff]
      %v654 = vlaneseq
      %v655 = vand.u32 %v654, 127
      %656 = vset.pattern.permute.xlu0 0
      %657 = vperm.xlu0 %656, %v653
      %v658 = vpop.permute.xlu0 %657
      %vm659 = vcmp.eq.s32.totalorder %v655, %v658
      %v660 = vsel %vm659, 1, 0
      %v661 = vcvt.s32.f32 %v660
      %v662 = vpack.c.bf16 %v661, %v661
      %v663 = vld [vmem:[%s1] sm:$0xf]
      %v664 = vld [vmem:[%s1 + $0x4] sm:$0xf]
      %v665 = vld [vmem:[%s1 + $0x8] sm:$0xf]
      %v666 = vld [vmem:[%s1 + $0xc] sm:$0xf]
      %v667 = vld [vmem:[%s1 + $0x10] sm:$0xf]
      %v668 = vld [vmem:[%s1 + $0x14] sm:$0xf]
      %v669 = vld [vmem:[%s1 + $0x18] sm:$0xf]
      %v670 = vld [vmem:[%s1 + $0x1c] sm:$0xf]
      %v671 = vld [vmem:[%s1 + $0x20] sm:$0xf]
      %v672 = vld [vmem:[%s1 + $0x24] sm:$0xf]
      %v673 = vld [vmem:[%s1 + $0x28] sm:$0xf]
      %v674 = vld [vmem:[%s1 + $0x2c] sm:$0xf]
      %v675 = vld [vmem:[%s1 + $0x30] sm:$0xf]
      %v676 = vld [vmem:[%s1 + $0x34] sm:$0xf]
      %v677 = vld [vmem:[%s1 + $0x38] sm:$0xf]
      %v678 = vld [vmem:[%s1 + $0x3c] sm:$0xf]
      %v679 = vld [vmem:[%s2] sm:$0xff]
      %v696 = vunpack.c.l.b16 %v663
      %v697 = vunpack.c.l.b16 %v664
      %v698 = vunpack.c.l.b16 %v665
      %v699 = vunpack.c.l.b16 %v666
      %v700 = vunpack.c.l.b16 %v667
      %v701 = vunpack.c.l.b16 %v668
      %v702 = vunpack.c.l.b16 %v669
      %v703 = vunpack.c.l.b16 %v670
      %v704 = vunpack.c.l.b16 %v671
      %v705 = vunpack.c.l.b16 %v672
      %v706 = vunpack.c.l.b16 %v673
      %v707 = vunpack.c.l.b16 %v674
      %v708 = vunpack.c.l.b16 %v675
      %v709 = vunpack.c.l.b16 %v676
      %v710 = vunpack.c.l.b16 %v677
      %v711 = vunpack.c.l.b16 %v678
      %v712 = vpack.c.b16 %v697, %v696
      %v713 = vpack.c.b16 %v699, %v698
      %v714 = vpack.c.b16 %v701, %v700
      %v715 = vpack.c.b16 %v703, %v702
      %v716 = vpack.c.b16 %v705, %v704
      %v717 = vpack.c.b16 %v707, %v706
      %v718 = vpack.c.b16 %v709, %v708
      %v719 = vpack.c.b16 %v711, %v710
      %728 = vmatprep.subr.bf16.mxu0 0
      %729 = vmatpush1.bf16.msra.mxu0 %v712
      %730 = vmatprep.subr.bf16.mxu0 0
      %731 = vmatpush1.bf16.msra.mxu0 %v713
      %732 = vmatprep.subr.bf16.mxu0 0
      %733 = vmatpush1.bf16.msra.mxu0 %v714
      %734 = vmatprep.subr.bf16.mxu0 0
      %735 = vmatpush1.bf16.msra.mxu0 %v715
      %736 = vmatprep.subr.bf16.mxu0 0
      %737 = vmatpush1.bf16.msra.mxu0 %v716
      %738 = vmatprep.subr.bf16.mxu0 0
      %739 = vmatpush1.bf16.msra.mxu0 %v717
      %740 = vmatprep.subr.bf16.mxu0 0
      %741 = vmatpush1.bf16.msra.mxu0 %v718
      %742 = vmatprep.subr.bf16.mxu0 0
      %743 = vmatpush1.bf16.msra.mxu0 %v719
      %744 = vmatprep.subr.bf16.mxu0 0
      %745 = vmatpush1.bf16.msra.mxu0 0
      %746 = vmatprep.subr.bf16.mxu0 0
      %747 = vmatpush1.bf16.msra.mxu0 0
      %748 = vmatprep.subr.bf16.mxu0 0
      %749 = vmatpush1.bf16.msra.mxu0 0
      %750 = vmatprep.subr.bf16.mxu0 0
      %751 = vmatpush1.bf16.msra.mxu0 0
      %752 = vmatprep.subr.bf16.mxu0 0
      %753 = vmatpush1.bf16.msra.mxu0 0
      %754 = vmatprep.subr.bf16.mxu0 0
      %755 = vmatpush1.bf16.msra.mxu0 0
      %756 = vmatprep.subr.bf16.mxu0 0
      %757 = vmatpush1.bf16.msra.mxu0 0
      %758 = vmatprep.subr.bf16.mxu0 0
      %759 = vmatpush1.bf16.msra.mxu0 0
      %760 = vmatprep.mubr.bf16.mxu0 0
      %761 = vmatmul.mubr.bf16.gmra.mrb[0].mxu0 %v662
      %v762 = vpop.f32.mrb[0].mxu0
      %v763 = vadd.f32 %v679, %v762
      %v764 = vpop.f32.mrb[0].mxu0
      %v765 = vpop.f32.mrb[0].mxu0
      %v766 = vpop.f32.mrb[0].mxu0
      %767 = vdwg.mxu0
      %v768 = vld [vmem:[%s3] sm:$0x1]
      %v769 = vld [vmem:[%s4] sm:$0x1]
      %vm770 = vcmask 261120
      %v771 = vsel %vm770, %v763, 0.0
      %772 = vadd.xlane.f32.xlu0 %v771
      %v773 = vpop.xlane.xlu0 %772
      %v774 = vrcp.pop 32.0
      %v775 = vmul.f32 %v773, %v774
      %v776 = vsub.f32 %v763, %v775
      %v777 = vmul.f32 %v776, %v776
      %v778 = vsel %vm770, %v777, 0.0
      %779 = vadd.xlane.f32.xlu0 %v778
      %v780 = vpop.xlane.xlu0 %779
      %v781 = vmul.f32 %v780, %v774
      %v782 = vadd.f32 %v781, 1e-12
      %v783 = vrsqrt.pop %v782
      %v784 = vmul.f32 %v776, %v783
      %v786 = vlaneseq
      %v787 = vshrl.u32 %v786, 7
      %v788 = vsub.s32 0, %v787
      %v789 = vrot.slane %v768, %v788
      %v791 = vmul.f32 %v784, %v789
      %v793 = vlaneseq
      %v794 = vshrl.u32 %v793, 7
      %v795 = vsub.s32 0, %v794
      %v796 = vrot.slane %v769, %v795
      %v798 = vadd.f32 %v791, %v796
      %v799 = vld [vmem:[%s5] sm:$0xf]
      %v800 = vld [vmem:[%s5 + $0x4] sm:$0xf]
      %v801 = vld [vmem:[%s5 + $0x8] sm:$0xf]
      %v802 = vld [vmem:[%s5 + $0xc] sm:$0xf]
      %v803 = vld [vmem:[%s6] sm:$0x1]
      %v804 = vld [vmem:[%s7] sm:$0xf]
      %v805 = vld [vmem:[%s7 + $0x4] sm:$0xf]
      %v806 = vld [vmem:[%s7 + $0x8] sm:$0xf]
      %v807 = vld [vmem:[%s7 + $0xc] sm:$0xf]
      %v808 = vld [vmem:[%s8] sm:$0x1]
      %v809 = vld [vmem:[%s9] sm:$0x1]
      %v810 = vld [vmem:[%s10] sm:$0x1]
      %v811 = vld [vmem:[%s11] sm:$0xf]
      %v812 = vld [vmem:[%s11 + $0x4] sm:$0xf]
      %v813 = vld [vmem:[%s11 + $0x8] sm:$0xf]
      %v814 = vld [vmem:[%s11 + $0xc] sm:$0xf]
      %v815 = vld [vmem:[%s12] sm:$0x1]
      %v816 = vld [vmem:[%s13] sm:$0xf]
      %v817 = vld [vmem:[%s13 + $0x4] sm:$0xf]
      %v818 = vld [vmem:[%s13 + $0x8] sm:$0xf]
      %v819 = vld [vmem:[%s13 + $0xc] sm:$0xf]
      %v820 = vld [vmem:[%s13 + $0x10] sm:$0xf]
      %v821 = vld [vmem:[%s13 + $0x14] sm:$0xf]
      %v822 = vld [vmem:[%s13 + $0x18] sm:$0xf]
      %v823 = vld [vmem:[%s13 + $0x1c] sm:$0xf]
      %v824 = vld [vmem:[%s14] sm:$0x1]
      %v825 = vld [vmem:[%s15] sm:$0x1]
      %v826 = vld [vmem:[%s16] sm:$0x1]
      %v827 = vpack.c.bf16 %v798, %v798
      %v829 = vlaneseq
      %v830 = vshrl.u32 %v829, 7
      %v831 = vsub.s32 0, %v830
      %v832 = vrot.slane %v803, %v831
      %v838 = vunpack.c.l.b16 %v799
      %v839 = vunpack.c.l.b16 %v800
      %v840 = vunpack.c.l.b16 %v801
      %v841 = vunpack.c.l.b16 %v802
      %v842 = vpack.c.b16 %v839, %v838
      %v843 = vpack.c.b16 %v841, %v840
      %v847 = vsel %vm770, %v827, 0
      %849 = vmatprep.subr.bf16.mxu0 0
      %850 = vmatpush1.bf16.msra.mxu0 %v842
      %851 = vmatprep.subr.bf16.mxu0 0
      %852 = vmatpush1.bf16.msra.mxu0 %v843
      %853 = vmatprep.subr.bf16.mxu0 0
      %854 = vmatpush1.bf16.msra.mxu0 0
      %855 = vmatprep.subr.bf16.mxu0 0
      %856 = vmatpush1.bf16.msra.mxu0 0
      %857 = vmatprep.subr.bf16.mxu0 0
      %858 = vmatpush1.bf16.msra.mxu0 0
      %859 = vmatprep.subr.bf16.mxu0 0
      %860 = vmatpush1.bf16.msra.mxu0 0
      %861 = vmatprep.subr.bf16.mxu0 0
      %862 = vmatpush1.bf16.msra.mxu0 0
      %863 = vmatprep.subr.bf16.mxu0 0
      %864 = vmatpush1.bf16.msra.mxu0 0
      %865 = vmatprep.subr.bf16.mxu0 0
      %866 = vmatpush1.bf16.msra.mxu0 0
      %867 = vmatprep.subr.bf16.mxu0 0
      %868 = vmatpush1.bf16.msra.mxu0 0
      %869 = vmatprep.subr.bf16.mxu0 0
      %870 = vmatpush1.bf16.msra.mxu0 0
      %871 = vmatprep.subr.bf16.mxu0 0
      %872 = vmatpush1.bf16.msra.mxu0 0
      %873 = vmatprep.subr.bf16.mxu0 0
      %874 = vmatpush1.bf16.msra.mxu0 0
      %875 = vmatprep.subr.bf16.mxu0 0
      %876 = vmatpush1.bf16.msra.mxu0 0
      %877 = vmatprep.subr.bf16.mxu0 0
      %878 = vmatpush1.bf16.msra.mxu0 0
      %879 = vmatprep.subr.bf16.mxu0 0
      %880 = vmatpush1.bf16.msra.mxu0 0
      %881 = vmatprep.mubr.bf16.mxu0 0
      %882 = vmatmul.mubr.bf16.gmra.mrb[0].mxu0 %v847
      %v883 = vpop.f32.mrb[0].mxu0
      %v884 = vadd.f32 %v832, %v883
      %v885 = vpop.f32.mrb[0].mxu0
      %v886 = vpop.f32.mrb[0].mxu0
      %v887 = vpop.f32.mrb[0].mxu0
      %888 = vdwg.mxu0
      %890 = vrot.lane.b32.xlu0 %v884, 112
      %v891 = vpop.permute.xlu0 %890
      %893 = vrot.lane.b32.xlu0 %v884, 96
      %v894 = vpop.permute.xlu0 %893
      %896 = vrot.lane.b32.xlu0 %v884, 80
      %v897 = vpop.permute.xlu0 %896
      %899 = vrot.lane.b32.xlu0 %v884, 64
      %v900 = vpop.permute.xlu0 %899
      %902 = vrot.lane.b32.xlu0 %v884, 48
      %v903 = vpop.permute.xlu0 %902
      %v905 = vcombine.low %v884, %v894
      %v906 = vcombine.high %v884, %v894
      %v908 = vunpack.c.l.s4 1983009808
      %v909 = vunpack.c.0.s8 %v908
      %v910 = vlaneseq
      %v911 = vshrl.u32 %v910, 7
      %v912 = vsub.s32 %v909, %v911
      %v913 = vrot.slane %v905, %v912
      %v915 = vunpack.c.l.s4 1983009808
      %v916 = vunpack.c.0.s8 %v915
      %v917 = vlaneseq
      %v918 = vshrl.u32 %v917, 7
      %v919 = vsub.s32 %v916, %v918
      %v920 = vrot.slane %v906, %v919
      %v921 = vcombine.low %v891, %v897
      %v922 = vcombine.high %v891, %v897
      %v924 = vunpack.c.l.s4 1983009808
      %v925 = vunpack.c.0.s8 %v924
      %v926 = vlaneseq
      %v927 = vshrl.u32 %v926, 7
      %v928 = vsub.s32 %v925, %v927
      %v929 = vrot.slane %v921, %v928
      %v931 = vunpack.c.l.s4 1983009808
      %v932 = vunpack.c.0.s8 %v931
      %v933 = vlaneseq
      %v934 = vshrl.u32 %v933, 7
      %v935 = vsub.s32 %v932, %v934
      %v936 = vrot.slane %v922, %v935
      %v937 = vcombine.high %v900, 0.0
      %v939 = vunpack.c.l.s4 1983009808
      %v940 = vunpack.c.0.s8 %v939
      %v941 = vlaneseq
      %v942 = vshrl.u32 %v941, 7
      %v943 = vsub.s32 %v940, %v942
      %v944 = vrot.slane %v900, %v943
      %v946 = vunpack.c.l.s4 1983009808
      %v947 = vunpack.c.0.s8 %v946
      %v948 = vlaneseq
      %v949 = vshrl.u32 %v948, 7
      %v950 = vsub.s32 %v947, %v949
      %v951 = vrot.slane %v937, %v950
      %v952 = vcombine.high %v903, 0.0
      %v954 = vunpack.c.l.s4 1983009808
      %v955 = vunpack.c.0.s8 %v954
      %v956 = vlaneseq
      %v957 = vshrl.u32 %v956, 7
      %v958 = vsub.s32 %v955, %v957
      %v959 = vrot.slane %v903, %v958
      %v961 = vunpack.c.l.s4 1983009808
      %v962 = vunpack.c.0.s8 %v961
      %v963 = vlaneseq
      %v964 = vshrl.u32 %v963, 7
      %v965 = vsub.s32 %v962, %v964
      %v966 = vrot.slane %v952, %v965
      %v967 = vcombine.low %v913, %v929
      %v968 = vcombine.high %v913, %v929
      %v970 = vunpack.c.l.s4 1934713408
      %v971 = vunpack.c.0.s8 %v970
      %v972 = vlaneseq
      %v973 = vshrl.u32 %v972, 7
      %v974 = vsub.s32 %v971, %v973
      %v975 = vrot.slane %v967, %v974
      %v977 = vunpack.c.l.s4 1934713408
      %v978 = vunpack.c.0.s8 %v977
      %v979 = vlaneseq
      %v980 = vshrl.u32 %v979, 7
      %v981 = vsub.s32 %v978, %v980
      %v982 = vrot.slane %v968, %v981
      %v983 = vcombine.low %v920, %v936
      %v984 = vcombine.high %v920, %v936
      %v986 = vunpack.c.l.s4 1934713408
      %v987 = vunpack.c.0.s8 %v986
      %v988 = vlaneseq
      %v989 = vshrl.u32 %v988, 7
      %v990 = vsub.s32 %v987, %v989
      %v991 = vrot.slane %v983, %v990
      %v993 = vunpack.c.l.s4 1934713408
      %v994 = vunpack.c.0.s8 %v993
      %v995 = vlaneseq
      %v996 = vshrl.u32 %v995, 7
      %v997 = vsub.s32 %v994, %v996
      %v998 = vrot.slane %v984, %v997
      %v999 = vcombine.low %v944, %v959
      %v1000 = vcombine.high %v944, %v959
      %v1002 = vunpack.c.l.s4 1934713408
      %v1003 = vunpack.c.0.s8 %v1002
      %v1004 = vlaneseq
      %v1005 = vshrl.u32 %v1004, 7
      %v1006 = vsub.s32 %v1003, %v1005
      %v1007 = vrot.slane %v999, %v1006
      %v1009 = vunpack.c.l.s4 1934713408
      %v1010 = vunpack.c.0.s8 %v1009
      %v1011 = vlaneseq
      %v1012 = vshrl.u32 %v1011, 7
      %v1013 = vsub.s32 %v1010, %v1012
      %v1014 = vrot.slane %v1000, %v1013
      %v1015 = vcombine.low %v951, %v966
      %v1016 = vcombine.high %v951, %v966
      %v1018 = vunpack.c.l.s4 1934713408
      %v1019 = vunpack.c.0.s8 %v1018
      %v1020 = vlaneseq
      %v1021 = vshrl.u32 %v1020, 7
      %v1022 = vsub.s32 %v1019, %v1021
      %v1023 = vrot.slane %v1015, %v1022
      %v1025 = vunpack.c.l.s4 1934713408
      %v1026 = vunpack.c.0.s8 %v1025
      %v1027 = vlaneseq
      %v1028 = vshrl.u32 %v1027, 7
      %v1029 = vsub.s32 %v1026, %v1028
      %v1030 = vrot.slane %v1016, %v1029
      %v1031 = vcombine.low %v975, %v1007
      %v1032 = vcombine.high %v975, %v1007
      %v1033 = vcombine.low %v982, %v1014
      %v1034 = vcombine.high %v982, %v1014
      %v1035 = vcombine.low %v991, %v1023
      %v1036 = vcombine.high %v991, %v1023
      %v1037 = vcombine.low %v998, %v1030
      %v1038 = vcombine.high %v998, %v1030
      %v1039 = vcombine.low %v1031, %v1033
      %v1040 = vcombine.high %v1031, %v1033
      %v1042 = vunpack.c.l.s4 1983009808
      %v1043 = vunpack.c.0.s8 %v1042
      %v1044 = vlaneseq
      %v1045 = vshrl.u32 %v1044, 7
      %v1046 = vsub.s32 %v1043, %v1045
      %v1047 = vrot.slane %v1039, %v1046
      %v1049 = vunpack.c.l.s4 1983009808
      %v1050 = vunpack.c.0.s8 %v1049
      %v1051 = vlaneseq
      %v1052 = vshrl.u32 %v1051, 7
      %v1053 = vsub.s32 %v1050, %v1052
      %v1054 = vrot.slane %v1040, %v1053
      %v1055 = vcombine.low %v1032, %v1034
      %v1056 = vcombine.high %v1032, %v1034
      %v1058 = vunpack.c.l.s4 1983009808
      %v1059 = vunpack.c.0.s8 %v1058
      %v1060 = vlaneseq
      %v1061 = vshrl.u32 %v1060, 7
      %v1062 = vsub.s32 %v1059, %v1061
      %v1063 = vrot.slane %v1055, %v1062
      %v1065 = vunpack.c.l.s4 1983009808
      %v1066 = vunpack.c.0.s8 %v1065
      %v1067 = vlaneseq
      %v1068 = vshrl.u32 %v1067, 7
      %v1069 = vsub.s32 %v1066, %v1068
      %v1070 = vrot.slane %v1056, %v1069
      %v1071 = vcombine.low %v1035, %v1037
      %v1072 = vcombine.high %v1035, %v1037
      %v1074 = vunpack.c.l.s4 1983009808
      %v1075 = vunpack.c.0.s8 %v1074
      %v1076 = vlaneseq
      %v1077 = vshrl.u32 %v1076, 7
      %v1078 = vsub.s32 %v1075, %v1077
      %v1079 = vrot.slane %v1071, %v1078
      %v1081 = vunpack.c.l.s4 1983009808
      %v1082 = vunpack.c.0.s8 %v1081
      %v1083 = vlaneseq
      %v1084 = vshrl.u32 %v1083, 7
      %v1085 = vsub.s32 %v1082, %v1084
      %v1086 = vrot.slane %v1072, %v1085
      %v1087 = vcombine.low %v1036, %v1038
      %v1088 = vcombine.high %v1036, %v1038
      %v1090 = vunpack.c.l.s4 1983009808
      %v1091 = vunpack.c.0.s8 %v1090
      %v1092 = vlaneseq
      %v1093 = vshrl.u32 %v1092, 7
      %v1094 = vsub.s32 %v1091, %v1093
      %v1095 = vrot.slane %v1087, %v1094
      %v1097 = vunpack.c.l.s4 1983009808
      %v1098 = vunpack.c.0.s8 %v1097
      %v1099 = vlaneseq
      %v1100 = vshrl.u32 %v1099, 7
      %v1101 = vsub.s32 %v1098, %v1100
      %v1102 = vrot.slane %v1088, %v1101
      %v1103 = vcombine.low %v1047, %v1063
      %v1104 = vcombine.high %v1047, %v1063
      %v1106 = vunpack.c.l.s4 1934713408
      %v1107 = vunpack.c.0.s8 %v1106
      %v1108 = vlaneseq
      %v1109 = vshrl.u32 %v1108, 7
      %v1110 = vsub.s32 %v1107, %v1109
      %v1111 = vrot.slane %v1103, %v1110
      %v1113 = vunpack.c.l.s4 1934713408
      %v1114 = vunpack.c.0.s8 %v1113
      %v1115 = vlaneseq
      %v1116 = vshrl.u32 %v1115, 7
      %v1117 = vsub.s32 %v1114, %v1116
      %v1118 = vrot.slane %v1104, %v1117
      %v1119 = vcombine.low %v1054, %v1070
      %v1121 = vunpack.c.l.s4 1934713408
      %v1122 = vunpack.c.0.s8 %v1121
      %v1123 = vlaneseq
      %v1124 = vshrl.u32 %v1123, 7
      %v1125 = vsub.s32 %v1122, %v1124
      %v1126 = vrot.slane %v1119, %v1125
      %v1127 = vcombine.low %v1079, %v1095
      %v1128 = vcombine.high %v1079, %v1095
      %v1130 = vunpack.c.l.s4 1934713408
      %v1131 = vunpack.c.0.s8 %v1130
      %v1132 = vlaneseq
      %v1133 = vshrl.u32 %v1132, 7
      %v1134 = vsub.s32 %v1131, %v1133
      %v1135 = vrot.slane %v1127, %v1134
      %v1137 = vunpack.c.l.s4 1934713408
      %v1138 = vunpack.c.0.s8 %v1137
      %v1139 = vlaneseq
      %v1140 = vshrl.u32 %v1139, 7
      %v1141 = vsub.s32 %v1138, %v1140
      %v1142 = vrot.slane %v1128, %v1141
      %v1143 = vcombine.low %v1086, %v1102
      %v1145 = vunpack.c.l.s4 1934713408
      %v1146 = vunpack.c.0.s8 %v1145
      %v1147 = vlaneseq
      %v1148 = vshrl.u32 %v1147, 7
      %v1149 = vsub.s32 %v1146, %v1148
      %v1150 = vrot.slane %v1143, %v1149
      %v1151 = vcombine.low %v1111, %v1135
      %v1152 = vcombine.high %v1111, %v1135
      %v1153 = vcombine.low %v1118, %v1142
      %v1154 = vcombine.high %v1118, %v1142
      %v1155 = vcombine.low %v1126, %v1150
      %v1156 = vcombine.high %v1126, %v1150
      %v1157 = vpack.c.bf16 %v1151, %v1151
      %v1158 = vpack.c.bf16 %v1152, %v1152
      %v1159 = vpack.c.bf16 %v1153, %v1153
      %v1160 = vpack.c.bf16 %v1154, %v1154
      %v1161 = vpack.c.bf16 %v1155, %v1155
      %v1162 = vpack.c.bf16 %v1156, %v1156
      %vm1163 = vcmask 130048
      %v1165 = vsel %vm1163, %v1157, 0
      %v1168 = vsel %vm1163, %v1159, 0
      %1170 = vmatprep.subr.bf16.mxu0 0
      %1171 = vmatpush1.bf16.xpose.msra.mxu0 %v1168
      %1172 = vmatprep.subr.bf16.mxu0 0
      %1173 = vmatpush1.bf16.xpose.msra.mxu0 0
      %1174 = vmatprep.subr.bf16.mxu0 0
      %1175 = vmatpush1.bf16.xpose.msra.mxu0 0
      %1176 = vmatprep.subr.bf16.mxu0 0
      %1177 = vmatpush1.bf16.xpose.msra.mxu0 0
      %1178 = vmatprep.subr.bf16.mxu0 0
      %1179 = vmatpush1.bf16.xpose.msra.mxu0 0
      %1180 = vmatprep.subr.bf16.mxu0 0
      %1181 = vmatpush1.bf16.xpose.msra.mxu0 0
      %1182 = vmatprep.subr.bf16.mxu0 0
      %1183 = vmatpush1.bf16.xpose.msra.mxu0 0
      %1184 = vmatprep.subr.bf16.mxu0 0
      %1185 = vmatpush1.bf16.xpose.msra.mxu0 0
      %1186 = vmatprep.subr.bf16.mxu0 0
      %1187 = vmatpush1.bf16.xpose.msra.mxu0 0
      %1188 = vmatprep.subr.bf16.mxu0 0
      %1189 = vmatpush1.bf16.xpose.msra.mxu0 0
      %1190 = vmatprep.subr.bf16.mxu0 0
      %1191 = vmatpush1.bf16.xpose.msra.mxu0 0
      %1192 = vmatprep.subr.bf16.mxu0 0
      %1193 = vmatpush1.bf16.xpose.msra.mxu0 0
      %1194 = vmatprep.subr.bf16.mxu0 0
      %1195 = vmatpush1.bf16.xpose.msra.mxu0 0
      %1196 = vmatprep.subr.bf16.mxu0 0
      %1197 = vmatpush1.bf16.xpose.msra.mxu0 0
      %1198 = vmatprep.subr.bf16.mxu0 0
      %1199 = vmatpush1.bf16.xpose.msra.mxu0 0
      %1200 = vmatprep.subr.bf16.mxu0 0
      %1201 = vmatpush1.bf16.xpose.msra.mxu0 0
      %1202 = vmatprep.mubr.bf16.mxu0 0
      %1203 = vmatmul.mubr.bf16.gmra.mrb[0].mxu0 %v1165
      %v1204 = vpop.f32.mrb[0].mxu0
      %v1205 = vadd.f32 0.0, %v1204
      %v1206 = vpop.f32.mrb[0].mxu0
      %v1207 = vpop.f32.mrb[0].mxu0
      %v1208 = vpop.f32.mrb[0].mxu0
      %1209 = vdwg.mxu0
      %v1211 = vsel %vm1163, %v1158, 0
      %v1214 = vsel %vm1163, %v1160, 0
      %1216 = vmatprep.subr.bf16.mxu0 0
      %1217 = vmatpush1.bf16.xpose.msra.mxu0 %v1214
      %1218 = vmatprep.subr.bf16.mxu0 0
      %1219 = vmatpush1.bf16.xpose.msra.mxu0 0
      %1220 = vmatprep.subr.bf16.mxu0 0
      %1221 = vmatpush1.bf16.xpose.msra.mxu0 0
      %1222 = vmatprep.subr.bf16.mxu0 0
      %1223 = vmatpush1.bf16.xpose.msra.mxu0 0
      %1224 = vmatprep.subr.bf16.mxu0 0
      %1225 = vmatpush1.bf16.xpose.msra.mxu0 0
      %1226 = vmatprep.subr.bf16.mxu0 0
      %1227 = vmatpush1.bf16.xpose.msra.mxu0 0
      %1228 = vmatprep.subr.bf16.mxu0 0
      %1229 = vmatpush1.bf16.xpose.msra.mxu0 0
      %1230 = vmatprep.subr.bf16.mxu0 0
      %1231 = vmatpush1.bf16.xpose.msra.mxu0 0
      %1232 = vmatprep.subr.bf16.mxu0 0
      %1233 = vmatpush1.bf16.xpose.msra.mxu0 0
      %1234 = vmatprep.subr.bf16.mxu0 0
      %1235 = vmatpush1.bf16.xpose.msra.mxu0 0
      %1236 = vmatprep.subr.bf16.mxu0 0
      %1237 = vmatpush1.bf16.xpose.msra.mxu0 0
      %1238 = vmatprep.subr.bf16.mxu0 0
      %1239 = vmatpush1.bf16.xpose.msra.mxu0 0
      %1240 = vmatprep.subr.bf16.mxu0 0
      %1241 = vmatpush1.bf16.xpose.msra.mxu0 0
      %1242 = vmatprep.subr.bf16.mxu0 0
      %1243 = vmatpush1.bf16.xpose.msra.mxu0 0
      %1244 = vmatprep.subr.bf16.mxu0 0
      %1245 = vmatpush1.bf16.xpose.msra.mxu0 0
      %1246 = vmatprep.subr.bf16.mxu0 0
      %1247 = vmatpush1.bf16.xpose.msra.mxu0 0
      %1248 = vmatprep.mubr.bf16.mxu0 0
      %1249 = vmatmul.mubr.bf16.gmra.mrb[0].mxu0 %v1211
      %v1250 = vpop.f32.mrb[0].mxu0
      %v1251 = vadd.f32 0.0, %v1250
      %v1252 = vpop.f32.mrb[0].mxu0
      %v1253 = vpop.f32.mrb[0].mxu0
      %v1254 = vpop.f32.mrb[0].mxu0
      %1255 = vdwg.mxu0
      %vm1256 = vcmask 64512
      %v1257 = vsel %vm1256, %v1205, -inf
      %1258 = vmax.xlane.f32.xlu0 %v1257
      %v1259 = vpop.xlane.xlu0 %1258
      %v1260 = vsel %vm1256, %v1251, -inf
      %1261 = vmax.xlane.f32.xlu0 %v1260
      %v1262 = vpop.xlane.xlu0 %1261
      %v1263 = vsub.f32 %v1205, %v1259
      %v1264 = vsub.f32 %v1251, %v1262
      %v1265 = vmul.f32 %v1263, 1.442695
      %v1266 = vpow.pop %v1265
      %v1267 = vmul.f32 %v1264, 1.442695
      %v1268 = vpow.pop %v1267
      %v1269 = vsel %vm1256, %v1266, 0.0
      %1270 = vadd.xlane.f32.xlu0 %v1269
      %v1271 = vpop.xlane.xlu0 %1270
      %v1272 = vsel %vm1256, %v1268, 0.0
      %1273 = vadd.xlane.f32.xlu0 %v1272
      %v1274 = vpop.xlane.xlu0 %1273
      %v1275 = vrcp.pop %v1271
      %v1276 = vrcp.pop %v1274
      %v1277 = vmul.f32 %v1266, %v1275
      %v1278 = vmul.f32 %v1268, %v1276
      %v1279 = vpack.c.bf16 %v1277, %v1277
      %v1280 = vpack.c.bf16 %v1278, %v1278
      %v1282 = vsel %vm1256, %v1279, 0
      %vm1284 = vcmask 1043456
      %v1286 = vsel %vm1284, %v1161, 0
      %1288 = vmatprep.subr.bf16.mxu0 0
      %1289 = vmatpush1.bf16.msra.mxu0 %v1286
      %1290 = vmatprep.subr.bf16.mxu0 0
      %1291 = vmatpush1.bf16.msra.mxu0 0
      %1292 = vmatprep.subr.bf16.mxu0 0
      %1293 = vmatpush1.bf16.msra.mxu0 0
      %1294 = vmatprep.subr.bf16.mxu0 0
      %1295 = vmatpush1.bf16.msra.mxu0 0
      %1296 = vmatprep.subr.bf16.mxu0 0
      %1297 = vmatpush1.bf16.msra.mxu0 0
      %1298 = vmatprep.subr.bf16.mxu0 0
      %1299 = vmatpush1.bf16.msra.mxu0 0
      %1300 = vmatprep.subr.bf16.mxu0 0
      %1301 = vmatpush1.bf16.msra.mxu0 0
      %1302 = vmatprep.subr.bf16.mxu0 0
      %1303 = vmatpush1.bf16.msra.mxu0 0
      %1304 = vmatprep.subr.bf16.mxu0 0
      %1305 = vmatpush1.bf16.msra.mxu0 0
      %1306 = vmatprep.subr.bf16.mxu0 0
      %1307 = vmatpush1.bf16.msra.mxu0 0
      %1308 = vmatprep.subr.bf16.mxu0 0
      %1309 = vmatpush1.bf16.msra.mxu0 0
      %1310 = vmatprep.subr.bf16.mxu0 0
      %1311 = vmatpush1.bf16.msra.mxu0 0
      %1312 = vmatprep.subr.bf16.mxu0 0
      %1313 = vmatpush1.bf16.msra.mxu0 0
      %1314 = vmatprep.subr.bf16.mxu0 0
      %1315 = vmatpush1.bf16.msra.mxu0 0
      %1316 = vmatprep.subr.bf16.mxu0 0
      %1317 = vmatpush1.bf16.msra.mxu0 0
      %1318 = vmatprep.subr.bf16.mxu0 0
      %1319 = vmatpush1.bf16.msra.mxu0 0
      %1320 = vmatprep.mubr.bf16.mxu0 0
      %1321 = vmatmul.mubr.bf16.gmra.mrb[0].mxu0 %v1282
      %v1322 = vpop.f32.mrb[0].mxu0
      %v1323 = vadd.f32 0.0, %v1322
      %v1324 = vpop.f32.mrb[0].mxu0
      %v1325 = vpop.f32.mrb[0].mxu0
      %v1326 = vpop.f32.mrb[0].mxu0
      %1327 = vdwg.mxu0
      %v1329 = vsel %vm1256, %v1280, 0
      %v1332 = vsel %vm1284, %v1162, 0
      %1334 = vmatprep.subr.bf16.mxu0 0
      %1335 = vmatpush1.bf16.msra.mxu0 %v1332
      %1336 = vmatprep.subr.bf16.mxu0 0
      %1337 = vmatpush1.bf16.msra.mxu0 0
      %1338 = vmatprep.subr.bf16.mxu0 0
      %1339 = vmatpush1.bf16.msra.mxu0 0
      %1340 = vmatprep.subr.bf16.mxu0 0
      %1341 = vmatpush1.bf16.msra.mxu0 0
      %1342 = vmatprep.subr.bf16.mxu0 0
      %1343 = vmatpush1.bf16.msra.mxu0 0
      %1344 = vmatprep.subr.bf16.mxu0 0
      %1345 = vmatpush1.bf16.msra.mxu0 0
      %1346 = vmatprep.subr.bf16.mxu0 0
      %1347 = vmatpush1.bf16.msra.mxu0 0
      %1348 = vmatprep.subr.bf16.mxu0 0
      %1349 = vmatpush1.bf16.msra.mxu0 0
      %1350 = vmatprep.subr.bf16.mxu0 0
      %1351 = vmatpush1.bf16.msra.mxu0 0
      %1352 = vmatprep.subr.bf16.mxu0 0
      %1353 = vmatpush1.bf16.msra.mxu0 0
      %1354 = vmatprep.subr.bf16.mxu0 0
      %1355 = vmatpush1.bf16.msra.mxu0 0
      %1356 = vmatprep.subr.bf16.mxu0 0
      %1357 = vmatpush1.bf16.msra.mxu0 0
      %1358 = vmatprep.subr.bf16.mxu0 0
      %1359 = vmatpush1.bf16.msra.mxu0 0
      %1360 = vmatprep.subr.bf16.mxu0 0
      %1361 = vmatpush1.bf16.msra.mxu0 0
      %1362 = vmatprep.subr.bf16.mxu0 0
      %1363 = vmatpush1.bf16.msra.mxu0 0
      %1364 = vmatprep.subr.bf16.mxu0 0
      %1365 = vmatpush1.bf16.msra.mxu0 0
      %1366 = vmatprep.mubr.bf16.mxu0 0
      %1367 = vmatmul.mubr.bf16.gmra.mrb[0].mxu0 %v1329
      %v1368 = vpop.f32.mrb[0].mxu0
      %v1369 = vadd.f32 0.0, %v1368
      %v1370 = vpop.f32.mrb[0].mxu0
      %v1371 = vpop.f32.mrb[0].mxu0
      %v1372 = vpop.f32.mrb[0].mxu0
      %1373 = vdwg.mxu0
      %v1374 = vpack.c.bf16 %v1323, %v1323
      %v1375 = vpack.c.bf16 %v1369, %v1369
      %v1378 = vunpack.c.l.b16 %v804
      %v1379 = vunpack.c.l.b16 %v805
      %v1380 = vpack.c.b16 %v1379, %v1378
      %v1383 = vsel %vm1163, %v1374, 0
      %1385 = vmatprep.subr.bf16.mxu0 0
      %1386 = vmatpush1.bf16.msra.mxu0 %v1380
      %1387 = vmatprep.subr.bf16.mxu0 0
      %1388 = vmatpush1.bf16.msra.mxu0 0
      %1389 = vmatprep.subr.bf16.mxu0 0
      %1390 = vmatpush1.bf16.msra.mxu0 0
      %1391 = vmatprep.subr.bf16.mxu0 0
      %1392 = vmatpush1.bf16.msra.mxu0 0
      %1393 = vmatprep.subr.bf16.mxu0 0
      %1394 = vmatpush1.bf16.msra.mxu0 0
      %1395 = vmatprep.subr.bf16.mxu0 0
      %1396 = vmatpush1.bf16.msra.mxu0 0
      %1397 = vmatprep.subr.bf16.mxu0 0
      %1398 = vmatpush1.bf16.msra.mxu0 0
      %1399 = vmatprep.subr.bf16.mxu0 0
      %1400 = vmatpush1.bf16.msra.mxu0 0
      %1401 = vmatprep.subr.bf16.mxu0 0
      %1402 = vmatpush1.bf16.msra.mxu0 0
      %1403 = vmatprep.subr.bf16.mxu0 0
      %1404 = vmatpush1.bf16.msra.mxu0 0
      %1405 = vmatprep.subr.bf16.mxu0 0
      %1406 = vmatpush1.bf16.msra.mxu0 0
      %1407 = vmatprep.subr.bf16.mxu0 0
      %1408 = vmatpush1.bf16.msra.mxu0 0
      %1409 = vmatprep.subr.bf16.mxu0 0
      %1410 = vmatpush1.bf16.msra.mxu0 0
      %1411 = vmatprep.subr.bf16.mxu0 0
      %1412 = vmatpush1.bf16.msra.mxu0 0
      %1413 = vmatprep.subr.bf16.mxu0 0
      %1414 = vmatpush1.bf16.msra.mxu0 0
      %1415 = vmatprep.subr.bf16.mxu0 0
      %1416 = vmatpush1.bf16.msra.mxu0 0
      %1417 = vmatprep.mubr.bf16.mxu0 0
      %1418 = vmatmul.mubr.bf16.gmra.mrb[0].mxu0 %v1383
      %v1419 = vpop.f32.mrb[0].mxu0
      %v1420 = vadd.f32 0.0, %v1419
      %v1421 = vpop.f32.mrb[0].mxu0
      %v1422 = vpop.f32.mrb[0].mxu0
      %v1423 = vpop.f32.mrb[0].mxu0
      %1424 = vdwg.mxu0
      %v1427 = vunpack.c.l.b16 %v806
      %v1428 = vunpack.c.l.b16 %v807
      %v1429 = vpack.c.b16 %v1428, %v1427
      %v1432 = vsel %vm1163, %v1375, 0
      %1434 = vmatprep.subr.bf16.mxu0 0
      %1435 = vmatpush1.bf16.msra.mxu0 %v1429
      %1436 = vmatprep.subr.bf16.mxu0 0
      %1437 = vmatpush1.bf16.msra.mxu0 0
      %1438 = vmatprep.subr.bf16.mxu0 0
      %1439 = vmatpush1.bf16.msra.mxu0 0
      %1440 = vmatprep.subr.bf16.mxu0 0
      %1441 = vmatpush1.bf16.msra.mxu0 0
      %1442 = vmatprep.subr.bf16.mxu0 0
      %1443 = vmatpush1.bf16.msra.mxu0 0
      %1444 = vmatprep.subr.bf16.mxu0 0
      %1445 = vmatpush1.bf16.msra.mxu0 0
      %1446 = vmatprep.subr.bf16.mxu0 0
      %1447 = vmatpush1.bf16.msra.mxu0 0
      %1448 = vmatprep.subr.bf16.mxu0 0
      %1449 = vmatpush1.bf16.msra.mxu0 0
      %1450 = vmatprep.subr.bf16.mxu0 0
      %1451 = vmatpush1.bf16.msra.mxu0 0
      %1452 = vmatprep.subr.bf16.mxu0 0
      %1453 = vmatpush1.bf16.msra.mxu0 0
      %1454 = vmatprep.subr.bf16.mxu0 0
      %1455 = vmatpush1.bf16.msra.mxu0 0
      %1456 = vmatprep.subr.bf16.mxu0 0
      %1457 = vmatpush1.bf16.msra.mxu0 0
      %1458 = vmatprep.subr.bf16.mxu0 0
      %1459 = vmatpush1.bf16.msra.mxu0 0
      %1460 = vmatprep.subr.bf16.mxu0 0
      %1461 = vmatpush1.bf16.msra.mxu0 0
      %1462 = vmatprep.subr.bf16.mxu0 0
      %1463 = vmatpush1.bf16.msra.mxu0 0
      %1464 = vmatprep.subr.bf16.mxu0 0
      %1465 = vmatpush1.bf16.msra.mxu0 0
      %1466 = vmatprep.mubr.bf16.mxu0 0
      %1467 = vmatmul.mubr.bf16.gmra.mrb[0].mxu0 %v1432
      %v1468 = vpop.f32.mrb[0].mxu0
      %v1469 = vadd.f32 0.0, %v1468
      %v1470 = vpop.f32.mrb[0].mxu0
      %v1471 = vpop.f32.mrb[0].mxu0
      %v1472 = vpop.f32.mrb[0].mxu0
      %1473 = vdwg.mxu0
      %v1474 = vsel %vm770, %v1420, 0.0
      %v1475 = vsel %vm770, %v1469, 0.0
      %v1476 = vadd.f32 %v1474, %v1475
      %v1478 = vlaneseq
      %v1479 = vshrl.u32 %v1478, 7
      %v1480 = vsub.s32 0, %v1479
      %v1481 = vrot.slane %v808, %v1480
      %v1483 = vadd.f32 %v1476, %v1481
      %v1484 = vadd.f32 %v798, %v1483
      %v1485 = vsel %vm770, %v1484, 0.0
      %1486 = vadd.xlane.f32.xlu0 %v1485
      %v1487 = vpop.xlane.xlu0 %1486
      %v1488 = vmul.f32 %v1487, %v774
      %v1489 = vsub.f32 %v1484, %v1488
      %v1490 = vmul.f32 %v1489, %v1489
      %v1491 = vsel %vm770, %v1490, 0.0
      %1492 = vadd.xlane.f32.xlu0 %v1491
      %v1493 = vpop.xlane.xlu0 %1492
      %v1494 = vmul.f32 %v1493, %v774
      %v1495 = vadd.f32 %v1494, 1e-12
      %v1496 = vrsqrt.pop %v1495
      %v1497 = vmul.f32 %v1489, %v1496
      %v1499 = vlaneseq
      %v1500 = vshrl.u32 %v1499, 7
      %v1501 = vsub.s32 0, %v1500
      %v1502 = vrot.slane %v809, %v1501
      %v1504 = vmul.f32 %v1497, %v1502
      %v1506 = vlaneseq
      %v1507 = vshrl.u32 %v1506, 7
      %v1508 = vsub.s32 0, %v1507
      %v1509 = vrot.slane %v810, %v1508
      %v1511 = vadd.f32 %v1504, %v1509
      %v1512 = vpack.c.bf16 %v1511, %v1511
      %v1514 = vlaneseq
      %v1515 = vshrl.u32 %v1514, 7
      %v1516 = vsub.s32 0, %v1515
      %v1517 = vrot.slane %v815, %v1516
      %v1523 = vunpack.c.l.b16 %v811
      %v1524 = vunpack.c.l.b16 %v812
      %v1525 = vunpack.c.l.b16 %v813
      %v1526 = vunpack.c.l.b16 %v814
      %v1527 = vpack.c.b16 %v1524, %v1523
      %v1528 = vpack.c.b16 %v1526, %v1525
      %v1532 = vsel %vm770, %v1512, 0
      %1534 = vmatprep.subr.bf16.mxu0 0
      %1535 = vmatpush1.bf16.msra.mxu0 %v1527
      %1536 = vmatprep.subr.bf16.mxu0 0
      %1537 = vmatpush1.bf16.msra.mxu0 %v1528
      %1538 = vmatprep.subr.bf16.mxu0 0
      %1539 = vmatpush1.bf16.msra.mxu0 0
      %1540 = vmatprep.subr.bf16.mxu0 0
      %1541 = vmatpush1.bf16.msra.mxu0 0
      %1542 = vmatprep.subr.bf16.mxu0 0
      %1543 = vmatpush1.bf16.msra.mxu0 0
      %1544 = vmatprep.subr.bf16.mxu0 0
      %1545 = vmatpush1.bf16.msra.mxu0 0
      %1546 = vmatprep.subr.bf16.mxu0 0
      %1547 = vmatpush1.bf16.msra.mxu0 0
      %1548 = vmatprep.subr.bf16.mxu0 0
      %1549 = vmatpush1.bf16.msra.mxu0 0
      %1550 = vmatprep.subr.bf16.mxu0 0
      %1551 = vmatpush1.bf16.msra.mxu0 0
      %1552 = vmatprep.subr.bf16.mxu0 0
      %1553 = vmatpush1.bf16.msra.mxu0 0
      %1554 = vmatprep.subr.bf16.mxu0 0
      %1555 = vmatpush1.bf16.msra.mxu0 0
      %1556 = vmatprep.subr.bf16.mxu0 0
      %1557 = vmatpush1.bf16.msra.mxu0 0
      %1558 = vmatprep.subr.bf16.mxu0 0
      %1559 = vmatpush1.bf16.msra.mxu0 0
      %1560 = vmatprep.subr.bf16.mxu0 0
      %1561 = vmatpush1.bf16.msra.mxu0 0
      %1562 = vmatprep.subr.bf16.mxu0 0
      %1563 = vmatpush1.bf16.msra.mxu0 0
      %1564 = vmatprep.subr.bf16.mxu0 0
      %1565 = vmatpush1.bf16.msra.mxu0 0
      %1566 = vmatprep.mubr.bf16.mxu0 0
      %1567 = vmatmul.mubr.bf16.gmra.mrb[0].mxu0 %v1532
      %v1568 = vpop.f32.mrb[0].mxu0
      %v1569 = vadd.f32 %v1517, %v1568
      %v1570 = vpop.f32.mrb[0].mxu0
      %v1571 = vpop.f32.mrb[0].mxu0
      %v1572 = vpop.f32.mrb[0].mxu0
      %1573 = vdwg.mxu0
      %v1574 = vmul.f32 %v1569, 0.5
      %v1575 = vmul.f32 %v1569, 0.044715
      %v1576 = vmul.f32 %v1575, %v1569
      %v1577 = vmul.f32 %v1576, %v1569
      %v1578 = vadd.f32 %v1569, %v1577
      %v1579 = vmul.f32 %v1578, 0.7978846
      %v1580 = vtanh.pop %v1579
      %v1581 = vadd.f32 %v1580, 1.0
      %v1582 = vmul.f32 %v1574, %v1581
      %v1583 = vpack.c.bf16 %v1582, %v1582
      %v1585 = vlaneseq
      %v1586 = vshrl.u32 %v1585, 7
      %v1587 = vsub.s32 0, %v1586
      %v1588 = vrot.slane %v824, %v1587
      %v1598 = vunpack.c.l.b16 %v816
      %v1599 = vunpack.c.l.b16 %v817
      %v1600 = vunpack.c.l.b16 %v818
      %v1601 = vunpack.c.l.b16 %v819
      %v1602 = vunpack.c.l.b16 %v820
      %v1603 = vunpack.c.l.b16 %v821
      %v1604 = vunpack.c.l.b16 %v822
      %v1605 = vunpack.c.l.b16 %v823
      %v1606 = vpack.c.b16 %v1599, %v1598
      %v1607 = vpack.c.b16 %v1601, %v1600
      %v1608 = vpack.c.b16 %v1603, %v1602
      %v1609 = vpack.c.b16 %v1605, %v1604
      %vm1614 = vcmask 523264
      %v1616 = vsel %vm1614, %v1583, 0
      %1618 = vmatprep.subr.bf16.mxu0 0
      %1619 = vmatpush1.bf16.msra.mxu0 %v1606
      %1620 = vmatprep.subr.bf16.mxu0 0
      %1621 = vmatpush1.bf16.msra.mxu0 %v1607
      %1622 = vmatprep.subr.bf16.mxu0 0
      %1623 = vmatpush1.bf16.msra.mxu0 %v1608
      %1624 = vmatprep.subr.bf16.mxu0 0
      %1625 = vmatpush1.bf16.msra.mxu0 %v1609
      %1626 = vmatprep.subr.bf16.mxu0 0
      %1627 = vmatpush1.bf16.msra.mxu0 0
      %1628 = vmatprep.subr.bf16.mxu0 0
      %1629 = vmatpush1.bf16.msra.mxu0 0
      %1630 = vmatprep.subr.bf16.mxu0 0
      %1631 = vmatpush1.bf16.msra.mxu0 0
      %1632 = vmatprep.subr.bf16.mxu0 0
      %1633 = vmatpush1.bf16.msra.mxu0 0
      %1634 = vmatprep.subr.bf16.mxu0 0
      %1635 = vmatpush1.bf16.msra.mxu0 0
      %1636 = vmatprep.subr.bf16.mxu0 0
      %1637 = vmatpush1.bf16.msra.mxu0 0
      %1638 = vmatprep.subr.bf16.mxu0 0
      %1639 = vmatpush1.bf16.msra.mxu0 0
      %1640 = vmatprep.subr.bf16.mxu0 0
      %1641 = vmatpush1.bf16.msra.mxu0 0
      %1642 = vmatprep.subr.bf16.mxu0 0
      %1643 = vmatpush1.bf16.msra.mxu0 0
      %1644 = vmatprep.subr.bf16.mxu0 0
      %1645 = vmatpush1.bf16.msra.mxu0 0
      %1646 = vmatprep.subr.bf16.mxu0 0
      %1647 = vmatpush1.bf16.msra.mxu0 0
      %1648 = vmatprep.subr.bf16.mxu0 0
      %1649 = vmatpush1.bf16.msra.mxu0 0
      %1650 = vmatprep.mubr.bf16.mxu0 0
      %1651 = vmatmul.mubr.bf16.gmra.mrb[0].mxu0 %v1616
      %v1652 = vpop.f32.mrb[0].mxu0
      %v1653 = vadd.f32 %v1588, %v1652
      %v1654 = vpop.f32.mrb[0].mxu0
      %v1655 = vpop.f32.mrb[0].mxu0
      %v1656 = vpop.f32.mrb[0].mxu0
      %1657 = vdwg.mxu0
      %v1658 = vadd.f32 %v1511, %v1653
      %v1659 = vsel %vm770, %v1658, 0.0
      %1660 = vadd.xlane.f32.xlu0 %v1659
      %v1661 = vpop.xlane.xlu0 %1660
      %v1662 = vmul.f32 %v1661, %v774
      %v1663 = vsub.f32 %v1658, %v1662
      %v1664 = vmul.f32 %v1663, %v1663
      %v1665 = vsel %vm770, %v1664, 0.0
      %1666 = vadd.xlane.f32.xlu0 %v1665
      %v1667 = vpop.xlane.xlu0 %1666
      %v1668 = vmul.f32 %v1667, %v774
      %v1669 = vadd.f32 %v1668, 1e-12
      %v1670 = vrsqrt.pop %v1669
      %v1671 = vmul.f32 %v1663, %v1670
      %v1673 = vlaneseq
      %v1674 = vshrl.u32 %v1673, 7
      %v1675 = vsub.s32 0, %v1674
      %v1676 = vrot.slane %v825, %v1675
      %v1678 = vmul.f32 %v1671, %v1676
      %v1680 = vlaneseq
      %v1681 = vshrl.u32 %v1680, 7
      %v1682 = vsub.s32 0, %v1681
      %v1683 = vrot.slane %v826, %v1682
      %v1685 = vadd.f32 %v1678, %v1683
      %s1686 = scalar_lea.vmem %s5, 16
      %v1687 = vld [vmem:[%s1686] sm:$0xf]
      %v1688 = vld [vmem:[%s1686 + $0x4] sm:$0xf]
      %v1689 = vld [vmem:[%s1686 + $0x8] sm:$0xf]
      %v1690 = vld [vmem:[%s1686 + $0xc] sm:$0xf]
      %s1691 = scalar_lea.vmem %s6, 1
      %v1692 = vld [vmem:[%s1691] sm:$0x1]
      %s1693 = scalar_lea.vmem %s7, 16
      %v1694 = vld [vmem:[%s1693] sm:$0xf]
      %v1695 = vld [vmem:[%s1693 + $0x4] sm:$0xf]
      %v1696 = vld [vmem:[%s1693 + $0x8] sm:$0xf]
      %v1697 = vld [vmem:[%s1693 + $0xc] sm:$0xf]
      %s1698 = scalar_lea.vmem %s8, 1
      %v1699 = vld [vmem:[%s1698] sm:$0x1]
      %s1700 = scalar_lea.vmem %s9, 1
      %v1701 = vld [vmem:[%s1700] sm:$0x1]
      %s1702 = scalar_lea.vmem %s10, 1
      %v1703 = vld [vmem:[%s1702] sm:$0x1]
      %s1704 = scalar_lea.vmem %s11, 16
      %v1705 = vld [vmem:[%s1704] sm:$0xf]
      %v1706 = vld [vmem:[%s1704 + $0x4] sm:$0xf]
      %v1707 = vld [vmem:[%s1704 + $0x8] sm:$0xf]
      %v1708 = vld [vmem:[%s1704 + $0xc] sm:$0xf]
      %s1709 = scalar_lea.vmem %s12, 1
      %v1710 = vld [vmem:[%s1709] sm:$0x1]
      %s1711 = scalar_lea.vmem %s13, 32
      %v1712 = vld [vmem:[%s1711] sm:$0xf]
      %v1713 = vld [vmem:[%s1711 + $0x4] sm:$0xf]
      %v1714 = vld [vmem:[%s1711 + $0x8] sm:$0xf]
      %v1715 = vld [vmem:[%s1711 + $0xc] sm:$0xf]
      %v1716 = vld [vmem:[%s1711 + $0x10] sm:$0xf]
      %v1717 = vld [vmem:[%s1711 + $0x14] sm:$0xf]
      %v1718 = vld [vmem:[%s1711 + $0x18] sm:$0xf]
      %v1719 = vld [vmem:[%s1711 + $0x1c] sm:$0xf]
      %s1720 = scalar_lea.vmem %s14, 1
      %v1721 = vld [vmem:[%s1720] sm:$0x1]
      %s1722 = scalar_lea.vmem %s15, 1
      %v1723 = vld [vmem:[%s1722] sm:$0x1]
      %s1724 = scalar_lea.vmem %s16, 1
      %v1725 = vld [vmem:[%s1724] sm:$0x1]
      %v1726 = vpack.c.bf16 %v1685, %v1685
      %v1728 = vlaneseq
      %v1729 = vshrl.u32 %v1728, 7
      %v1730 = vsub.s32 0, %v1729
      %v1731 = vrot.slane %v1692, %v1730
      %v1737 = vunpack.c.l.b16 %v1687
      %v1738 = vunpack.c.l.b16 %v1688
      %v1739 = vunpack.c.l.b16 %v1689
      %v1740 = vunpack.c.l.b16 %v1690
      %v1741 = vpack.c.b16 %v1738, %v1737
      %v1742 = vpack.c.b16 %v1740, %v1739
      %v1746 = vsel %vm770, %v1726, 0
      %1748 = vmatprep.subr.bf16.mxu0 0
      %1749 = vmatpush1.bf16.msra.mxu0 %v1741
      %1750 = vmatprep.subr.bf16.mxu0 0
      %1751 = vmatpush1.bf16.msra.mxu0 %v1742
      %1752 = vmatprep.subr.bf16.mxu0 0
      %1753 = vmatpush1.bf16.msra.mxu0 0
      %1754 = vmatprep.subr.bf16.mxu0 0
      %1755 = vmatpush1.bf16.msra.mxu0 0
      %1756 = vmatprep.subr.bf16.mxu0 0
      %1757 = vmatpush1.bf16.msra.mxu0 0
      %1758 = vmatprep.subr.bf16.mxu0 0
      %1759 = vmatpush1.bf16.msra.mxu0 0
      %1760 = vmatprep.subr.bf16.mxu0 0
      %1761 = vmatpush1.bf16.msra.mxu0 0
      %1762 = vmatprep.subr.bf16.mxu0 0
      %1763 = vmatpush1.bf16.msra.mxu0 0
      %1764 = vmatprep.subr.bf16.mxu0 0
      %1765 = vmatpush1.bf16.msra.mxu0 0
      %1766 = vmatprep.subr.bf16.mxu0 0
      %1767 = vmatpush1.bf16.msra.mxu0 0
      %1768 = vmatprep.subr.bf16.mxu0 0
      %1769 = vmatpush1.bf16.msra.mxu0 0
      %1770 = vmatprep.subr.bf16.mxu0 0
      %1771 = vmatpush1.bf16.msra.mxu0 0
      %1772 = vmatprep.subr.bf16.mxu0 0
      %1773 = vmatpush1.bf16.msra.mxu0 0
      %1774 = vmatprep.subr.bf16.mxu0 0
      %1775 = vmatpush1.bf16.msra.mxu0 0
      %1776 = vmatprep.subr.bf16.mxu0 0
      %1777 = vmatpush1.bf16.msra.mxu0 0
      %1778 = vmatprep.subr.bf16.mxu0 0
      %1779 = vmatpush1.bf16.msra.mxu0 0
      %1780 = vmatprep.mubr.bf16.mxu0 0
      %1781 = vmatmul.mubr.bf16.gmra.mrb[0].mxu0 %v1746
      %v1782 = vpop.f32.mrb[0].mxu0
      %v1783 = vadd.f32 %v1731, %v1782
      %v1784 = vpop.f32.mrb[0].mxu0
      %v1785 = vpop.f32.mrb[0].mxu0
      %v1786 = vpop.f32.mrb[0].mxu0
      %1787 = vdwg.mxu0
      %1789 = vrot.lane.b32.xlu0 %v1783, 112
      %v1790 = vpop.permute.xlu0 %1789
      %1792 = vrot.lane.b32.xlu0 %v1783, 96
      %v1793 = vpop.permute.xlu0 %1792
      %1795 = vrot.lane.b32.xlu0 %v1783, 80
      %v1796 = vpop.permute.xlu0 %1795
      %1798 = vrot.lane.b32.xlu0 %v1783, 64
      %v1799 = vpop.permute.xlu0 %1798
      %1801 = vrot.lane.b32.xlu0 %v1783, 48
      %v1802 = vpop.permute.xlu0 %1801
      %v1804 = vcombine.low %v1783, %v1793
      %v1805 = vcombine.high %v1783, %v1793
      %v1807 = vunpack.c.l.s4 1983009808
      %v1808 = vunpack.c.0.s8 %v1807
      %v1809 = vlaneseq
      %v1810 = vshrl.u32 %v1809, 7
      %v1811 = vsub.s32 %v1808, %v1810
      %v1812 = vrot.slane %v1804, %v1811
      %v1814 = vunpack.c.l.s4 1983009808
      %v1815 = vunpack.c.0.s8 %v1814
      %v1816 = vlaneseq
      %v1817 = vshrl.u32 %v1816, 7
      %v1818 = vsub.s32 %v1815, %v1817
      %v1819 = vrot.slane %v1805, %v1818
      %v1820 = vcombine.low %v1790, %v1796
      %v1821 = vcombine.high %v1790, %v1796
      %v1823 = vunpack.c.l.s4 1983009808
      %v1824 = vunpack.c.0.s8 %v1823
      %v1825 = vlaneseq
      %v1826 = vshrl.u32 %v1825, 7
      %v1827 = vsub.s32 %v1824, %v1826
      %v1828 = vrot.slane %v1820, %v1827
      %v1830 = vunpack.c.l.s4 1983009808
      %v1831 = vunpack.c.0.s8 %v1830
      %v1832 = vlaneseq
      %v1833 = vshrl.u32 %v1832, 7
      %v1834 = vsub.s32 %v1831, %v1833
      %v1835 = vrot.slane %v1821, %v1834
      %v1836 = vcombine.high %v1799, 0.0
      %v1838 = vunpack.c.l.s4 1983009808
      %v1839 = vunpack.c.0.s8 %v1838
      %v1840 = vlaneseq
      %v1841 = vshrl.u32 %v1840, 7
      %v1842 = vsub.s32 %v1839, %v1841
      %v1843 = vrot.slane %v1799, %v1842
      %v1845 = vunpack.c.l.s4 1983009808
      %v1846 = vunpack.c.0.s8 %v1845
      %v1847 = vlaneseq
      %v1848 = vshrl.u32 %v1847, 7
      %v1849 = vsub.s32 %v1846, %v1848
      %v1850 = vrot.slane %v1836, %v1849
      %v1851 = vcombine.high %v1802, 0.0
      %v1853 = vunpack.c.l.s4 1983009808
      %v1854 = vunpack.c.0.s8 %v1853
      %v1855 = vlaneseq
      %v1856 = vshrl.u32 %v1855, 7
      %v1857 = vsub.s32 %v1854, %v1856
      %v1858 = vrot.slane %v1802, %v1857
      %v1860 = vunpack.c.l.s4 1983009808
      %v1861 = vunpack.c.0.s8 %v1860
      %v1862 = vlaneseq
      %v1863 = vshrl.u32 %v1862, 7
      %v1864 = vsub.s32 %v1861, %v1863
      %v1865 = vrot.slane %v1851, %v1864
      %v1866 = vcombine.low %v1812, %v1828
      %v1867 = vcombine.high %v1812, %v1828
      %v1869 = vunpack.c.l.s4 1934713408
      %v1870 = vunpack.c.0.s8 %v1869
      %v1871 = vlaneseq
      %v1872 = vshrl.u32 %v1871, 7
      %v1873 = vsub.s32 %v1870, %v1872
      %v1874 = vrot.slane %v1866, %v1873
      %v1876 = vunpack.c.l.s4 1934713408
      %v1877 = vunpack.c.0.s8 %v1876
      %v1878 = vlaneseq
      %v1879 = vshrl.u32 %v1878, 7
      %v1880 = vsub.s32 %v1877, %v1879
      %v1881 = vrot.slane %v1867, %v1880
      %v1882 = vcombine.low %v1819, %v1835
      %v1883 = vcombine.high %v1819, %v1835
      %v1885 = vunpack.c.l.s4 1934713408
      %v1886 = vunpack.c.0.s8 %v1885
      %v1887 = vlaneseq
      %v1888 = vshrl.u32 %v1887, 7
      %v1889 = vsub.s32 %v1886, %v1888
      %v1890 = vrot.slane %v1882, %v1889
      %v1892 = vunpack.c.l.s4 1934713408
      %v1893 = vunpack.c.0.s8 %v1892
      %v1894 = vlaneseq
      %v1895 = vshrl.u32 %v1894, 7
      %v1896 = vsub.s32 %v1893, %v1895
      %v1897 = vrot.slane %v1883, %v1896
      %v1898 = vcombine.low %v1843, %v1858
      %v1899 = vcombine.high %v1843, %v1858
      %v1901 = vunpack.c.l.s4 1934713408
      %v1902 = vunpack.c.0.s8 %v1901
      %v1903 = vlaneseq
      %v1904 = vshrl.u32 %v1903, 7
      %v1905 = vsub.s32 %v1902, %v1904
      %v1906 = vrot.slane %v1898, %v1905
      %v1908 = vunpack.c.l.s4 1934713408
      %v1909 = vunpack.c.0.s8 %v1908
      %v1910 = vlaneseq
      %v1911 = vshrl.u32 %v1910, 7
      %v1912 = vsub.s32 %v1909, %v1911
      %v1913 = vrot.slane %v1899, %v1912
      %v1914 = vcombine.low %v1850, %v1865
      %v1915 = vcombine.high %v1850, %v1865
      %v1917 = vunpack.c.l.s4 1934713408
      %v1918 = vunpack.c.0.s8 %v1917
      %v1919 = vlaneseq
      %v1920 = vshrl.u32 %v1919, 7
      %v1921 = vsub.s32 %v1918, %v1920
      %v1922 = vrot.slane %v1914, %v1921
      %v1924 = vunpack.c.l.s4 1934713408
      %v1925 = vunpack.c.0.s8 %v1924
      %v1926 = vlaneseq
      %v1927 = vshrl.u32 %v1926, 7
      %v1928 = vsub.s32 %v1925, %v1927
      %v1929 = vrot.slane %v1915, %v1928
      %v1930 = vcombine.low %v1874, %v1906
      %v1931 = vcombine.high %v1874, %v1906
      %v1932 = vcombine.low %v1881, %v1913
      %v1933 = vcombine.high %v1881, %v1913
      %v1934 = vcombine.low %v1890, %v1922
      %v1935 = vcombine.high %v1890, %v1922
      %v1936 = vcombine.low %v1897, %v1929
      %v1937 = vcombine.high %v1897, %v1929
      %v1938 = vcombine.low %v1930, %v1932
      %v1939 = vcombine.high %v1930, %v1932
      %v1941 = vunpack.c.l.s4 1983009808
      %v1942 = vunpack.c.0.s8 %v1941
      %v1943 = vlaneseq
      %v1944 = vshrl.u32 %v1943, 7
      %v1945 = vsub.s32 %v1942, %v1944
      %v1946 = vrot.slane %v1938, %v1945
      %v1948 = vunpack.c.l.s4 1983009808
      %v1949 = vunpack.c.0.s8 %v1948
      %v1950 = vlaneseq
      %v1951 = vshrl.u32 %v1950, 7
      %v1952 = vsub.s32 %v1949, %v1951
      %v1953 = vrot.slane %v1939, %v1952
      %v1954 = vcombine.low %v1931, %v1933
      %v1955 = vcombine.high %v1931, %v1933
      %v1957 = vunpack.c.l.s4 1983009808
      %v1958 = vunpack.c.0.s8 %v1957
      %v1959 = vlaneseq
      %v1960 = vshrl.u32 %v1959, 7
      %v1961 = vsub.s32 %v1958, %v1960
      %v1962 = vrot.slane %v1954, %v1961
      %v1964 = vunpack.c.l.s4 1983009808
      %v1965 = vunpack.c.0.s8 %v1964
      %v1966 = vlaneseq
      %v1967 = vshrl.u32 %v1966, 7
      %v1968 = vsub.s32 %v1965, %v1967
      %v1969 = vrot.slane %v1955, %v1968
      %v1970 = vcombine.low %v1934, %v1936
      %v1971 = vcombine.high %v1934, %v1936
      %v1973 = vunpack.c.l.s4 1983009808
      %v1974 = vunpack.c.0.s8 %v1973
      %v1975 = vlaneseq
      %v1976 = vshrl.u32 %v1975, 7
      %v1977 = vsub.s32 %v1974, %v1976
      %v1978 = vrot.slane %v1970, %v1977
      %v1980 = vunpack.c.l.s4 1983009808
      %v1981 = vunpack.c.0.s8 %v1980
      %v1982 = vlaneseq
      %v1983 = vshrl.u32 %v1982, 7
      %v1984 = vsub.s32 %v1981, %v1983
      %v1985 = vrot.slane %v1971, %v1984
      %v1986 = vcombine.low %v1935, %v1937
      %v1987 = vcombine.high %v1935, %v1937
      %v1989 = vunpack.c.l.s4 1983009808
      %v1990 = vunpack.c.0.s8 %v1989
      %v1991 = vlaneseq
      %v1992 = vshrl.u32 %v1991, 7
      %v1993 = vsub.s32 %v1990, %v1992
      %v1994 = vrot.slane %v1986, %v1993
      %v1996 = vunpack.c.l.s4 1983009808
      %v1997 = vunpack.c.0.s8 %v1996
      %v1998 = vlaneseq
      %v1999 = vshrl.u32 %v1998, 7
      %v2000 = vsub.s32 %v1997, %v1999
      %v2001 = vrot.slane %v1987, %v2000
      %v2002 = vcombine.low %v1946, %v1962
      %v2003 = vcombine.high %v1946, %v1962
      %v2005 = vunpack.c.l.s4 1934713408
      %v2006 = vunpack.c.0.s8 %v2005
      %v2007 = vlaneseq
      %v2008 = vshrl.u32 %v2007, 7
      %v2009 = vsub.s32 %v2006, %v2008
      %v2010 = vrot.slane %v2002, %v2009
      %v2012 = vunpack.c.l.s4 1934713408
      %v2013 = vunpack.c.0.s8 %v2012
      %v2014 = vlaneseq
      %v2015 = vshrl.u32 %v2014, 7
      %v2016 = vsub.s32 %v2013, %v2015
      %v2017 = vrot.slane %v2003, %v2016
      %v2018 = vcombine.low %v1953, %v1969
      %v2020 = vunpack.c.l.s4 1934713408
      %v2021 = vunpack.c.0.s8 %v2020
      %v2022 = vlaneseq
      %v2023 = vshrl.u32 %v2022, 7
      %v2024 = vsub.s32 %v2021, %v2023
      %v2025 = vrot.slane %v2018, %v2024
      %v2026 = vcombine.low %v1978, %v1994
      %v2027 = vcombine.high %v1978, %v1994
      %v2029 = vunpack.c.l.s4 1934713408
      %v2030 = vunpack.c.0.s8 %v2029
      %v2031 = vlaneseq
      %v2032 = vshrl.u32 %v2031, 7
      %v2033 = vsub.s32 %v2030, %v2032
      %v2034 = vrot.slane %v2026, %v2033
      %v2036 = vunpack.c.l.s4 1934713408
      %v2037 = vunpack.c.0.s8 %v2036
      %v2038 = vlaneseq
      %v2039 = vshrl.u32 %v2038, 7
      %v2040 = vsub.s32 %v2037, %v2039
      %v2041 = vrot.slane %v2027, %v2040
      %v2042 = vcombine.low %v1985, %v2001
      %v2044 = vunpack.c.l.s4 1934713408
      %v2045 = vunpack.c.0.s8 %v2044
      %v2046 = vlaneseq
      %v2047 = vshrl.u32 %v2046, 7
      %v2048 = vsub.s32 %v2045, %v2047
      %v2049 = vrot.slane %v2042, %v2048
      %v2050 = vcombine.low %v2010, %v2034
      %v2051 = vcombine.high %v2010, %v2034
      %v2052 = vcombine.low %v2017, %v2041
      %v2053 = vcombine.high %v2017, %v2041
      %v2054 = vcombine.low %v2025, %v2049
      %v2055 = vcombine.high %v2025, %v2049
      %v2056 = vpack.c.bf16 %v2050, %v2050
      %v2057 = vpack.c.bf16 %v2051, %v2051
      %v2058 = vpack.c.bf16 %v2052, %v2052
      %v2059 = vpack.c.bf16 %v2053, %v2053
      %v2060 = vpack.c.bf16 %v2054, %v2054
      %v2061 = vpack.c.bf16 %v2055, %v2055
      %v2063 = vsel %vm1163, %v2056, 0
      %v2066 = vsel %vm1163, %v2058, 0
      %2068 = vmatprep.subr.bf16.mxu0 0
      %2069 = vmatpush1.bf16.xpose.msra.mxu0 %v2066
      %2070 = vmatprep.subr.bf16.mxu0 0
      %2071 = vmatpush1.bf16.xpose.msra.mxu0 0
      %2072 = vmatprep.subr.bf16.mxu0 0
      %2073 = vmatpush1.bf16.xpose.msra.mxu0 0
      %2074 = vmatprep.subr.bf16.mxu0 0
      %2075 = vmatpush1.bf16.xpose.msra.mxu0 0
      %2076 = vmatprep.subr.bf16.mxu0 0
      %2077 = vmatpush1.bf16.xpose.msra.mxu0 0
      %2078 = vmatprep.subr.bf16.mxu0 0
      %2079 = vmatpush1.bf16.xpose.msra.mxu0 0
      %2080 = vmatprep.subr.bf16.mxu0 0
      %2081 = vmatpush1.bf16.xpose.msra.mxu0 0
      %2082 = vmatprep.subr.bf16.mxu0 0
      %2083 = vmatpush1.bf16.xpose.msra.mxu0 0
      %2084 = vmatprep.subr.bf16.mxu0 0
      %2085 = vmatpush1.bf16.xpose.msra.mxu0 0
      %2086 = vmatprep.subr.bf16.mxu0 0
      %2087 = vmatpush1.bf16.xpose.msra.mxu0 0
      %2088 = vmatprep.subr.bf16.mxu0 0
      %2089 = vmatpush1.bf16.xpose.msra.mxu0 0
      %2090 = vmatprep.subr.bf16.mxu0 0
      %2091 = vmatpush1.bf16.xpose.msra.mxu0 0
      %2092 = vmatprep.subr.bf16.mxu0 0
      %2093 = vmatpush1.bf16.xpose.msra.mxu0 0
      %2094 = vmatprep.subr.bf16.mxu0 0
      %2095 = vmatpush1.bf16.xpose.msra.mxu0 0
      %2096 = vmatprep.subr.bf16.mxu0 0
      %2097 = vmatpush1.bf16.xpose.msra.mxu0 0
      %2098 = vmatprep.subr.bf16.mxu0 0
      %2099 = vmatpush1.bf16.xpose.msra.mxu0 0
      %2100 = vmatprep.mubr.bf16.mxu0 0
      %2101 = vmatmul.mubr.bf16.gmra.mrb[0].mxu0 %v2063
      %v2102 = vpop.f32.mrb[0].mxu0
      %v2103 = vadd.f32 0.0, %v2102
      %v2104 = vpop.f32.mrb[0].mxu0
      %v2105 = vpop.f32.mrb[0].mxu0
      %v2106 = vpop.f32.mrb[0].mxu0
      %2107 = vdwg.mxu0
      %v2109 = vsel %vm1163, %v2057, 0
      %v2112 = vsel %vm1163, %v2059, 0
      %2114 = vmatprep.subr.bf16.mxu0 0
      %2115 = vmatpush1.bf16.xpose.msra.mxu0 %v2112
      %2116 = vmatprep.subr.bf16.mxu0 0
      %2117 = vmatpush1.bf16.xpose.msra.mxu0 0
      %2118 = vmatprep.subr.bf16.mxu0 0
      %2119 = vmatpush1.bf16.xpose.msra.mxu0 0
      %2120 = vmatprep.subr.bf16.mxu0 0
      %2121 = vmatpush1.bf16.xpose.msra.mxu0 0
      %2122 = vmatprep.subr.bf16.mxu0 0
      %2123 = vmatpush1.bf16.xpose.msra.mxu0 0
      %2124 = vmatprep.subr.bf16.mxu0 0
      %2125 = vmatpush1.bf16.xpose.msra.mxu0 0
      %2126 = vmatprep.subr.bf16.mxu0 0
      %2127 = vmatpush1.bf16.xpose.msra.mxu0 0
      %2128 = vmatprep.subr.bf16.mxu0 0
      %2129 = vmatpush1.bf16.xpose.msra.mxu0 0
      %2130 = vmatprep.subr.bf16.mxu0 0
      %2131 = vmatpush1.bf16.xpose.msra.mxu0 0
      %2132 = vmatprep.subr.bf16.mxu0 0
      %2133 = vmatpush1.bf16.xpose.msra.mxu0 0
      %2134 = vmatprep.subr.bf16.mxu0 0
      %2135 = vmatpush1.bf16.xpose.msra.mxu0 0
      %2136 = vmatprep.subr.bf16.mxu0 0
      %2137 = vmatpush1.bf16.xpose.msra.mxu0 0
      %2138 = vmatprep.subr.bf16.mxu0 0
      %2139 = vmatpush1.bf16.xpose.msra.mxu0 0
      %2140 = vmatprep.subr.bf16.mxu0 0
      %2141 = vmatpush1.bf16.xpose.msra.mxu0 0
      %2142 = vmatprep.subr.bf16.mxu0 0
      %2143 = vmatpush1.bf16.xpose.msra.mxu0 0
      %2144 = vmatprep.subr.bf16.mxu0 0
      %2145 = vmatpush1.bf16.xpose.msra.mxu0 0
      %2146 = vmatprep.mubr.bf16.mxu0 0
      %2147 = vmatmul.mubr.bf16.gmra.mrb[0].mxu0 %v2109
      %v2148 = vpop.f32.mrb[0].mxu0
      %v2149 = vadd.f32 0.0, %v2148
      %v2150 = vpop.f32.mrb[0].mxu0
      %v2151 = vpop.f32.mrb[0].mxu0
      %v2152 = vpop.f32.mrb[0].mxu0
      %2153 = vdwg.mxu0
      %v2154 = vsel %vm1256, %v2103, -inf
      %2155 = vmax.xlane.f32.xlu0 %v2154
      %v2156 = vpop.xlane.xlu0 %2155
      %v2157 = vsel %vm1256, %v2149, -inf
      %2158 = vmax.xlane.f32.xlu0 %v2157
      %v2159 = vpop.xlane.xlu0 %2158
      %v2160 = vsub.f32 %v2103, %v2156
      %v2161 = vsub.f32 %v2149, %v2159
      %v2162 = vmul.f32 %v2160, 1.442695
      %v2163 = vpow.pop %v2162
      %v2164 = vmul.f32 %v2161, 1.442695
      %v2165 = vpow.pop %v2164
      %v2166 = vsel %vm1256, %v2163, 0.0
      %2167 = vadd.xlane.f32.xlu0 %v2166
      %v2168 = vpop.xlane.xlu0 %2167
      %v2169 = vsel %vm1256, %v2165, 0.0
      %2170 = vadd.xlane.f32.xlu0 %v2169
      %v2171 = vpop.xlane.xlu0 %2170
      %v2172 = vrcp.pop %v2168
      %v2173 = vrcp.pop %v2171
      %v2174 = vmul.f32 %v2163, %v2172
      %v2175 = vmul.f32 %v2165, %v2173
      %v2176 = vpack.c.bf16 %v2174, %v2174
      %v2177 = vpack.c.bf16 %v2175, %v2175
      %v2179 = vsel %vm1256, %v2176, 0
      %v2182 = vsel %vm1284, %v2060, 0
      %2184 = vmatprep.subr.bf16.mxu0 0
      %2185 = vmatpush1.bf16.msra.mxu0 %v2182
      %2186 = vmatprep.subr.bf16.mxu0 0
      %2187 = vmatpush1.bf16.msra.mxu0 0
      %2188 = vmatprep.subr.bf16.mxu0 0
      %2189 = vmatpush1.bf16.msra.mxu0 0
      %2190 = vmatprep.subr.bf16.mxu0 0
      %2191 = vmatpush1.bf16.msra.mxu0 0
      %2192 = vmatprep.subr.bf16.mxu0 0
      %2193 = vmatpush1.bf16.msra.mxu0 0
      %2194 = vmatprep.subr.bf16.mxu0 0
      %2195 = vmatpush1.bf16.msra.mxu0 0
      %2196 = vmatprep.subr.bf16.mxu0 0
      %2197 = vmatpush1.bf16.msra.mxu0 0
      %2198 = vmatprep.subr.bf16.mxu0 0
      %2199 = vmatpush1.bf16.msra.mxu0 0
      %2200 = vmatprep.subr.bf16.mxu0 0
      %2201 = vmatpush1.bf16.msra.mxu0 0
      %2202 = vmatprep.subr.bf16.mxu0 0
      %2203 = vmatpush1.bf16.msra.mxu0 0
      %2204 = vmatprep.subr.bf16.mxu0 0
      %2205 = vmatpush1.bf16.msra.mxu0 0
      %2206 = vmatprep.subr.bf16.mxu0 0
      %2207 = vmatpush1.bf16.msra.mxu0 0
      %2208 = vmatprep.subr.bf16.mxu0 0
      %2209 = vmatpush1.bf16.msra.mxu0 0
      %2210 = vmatprep.subr.bf16.mxu0 0
      %2211 = vmatpush1.bf16.msra.mxu0 0
      %2212 = vmatprep.subr.bf16.mxu0 0
      %2213 = vmatpush1.bf16.msra.mxu0 0
      %2214 = vmatprep.subr.bf16.mxu0 0
      %2215 = vmatpush1.bf16.msra.mxu0 0
      %2216 = vmatprep.mubr.bf16.mxu0 0
      %2217 = vmatmul.mubr.bf16.gmra.mrb[0].mxu0 %v2179
      %v2218 = vpop.f32.mrb[0].mxu0
      %v2219 = vadd.f32 0.0, %v2218
      %v2220 = vpop.f32.mrb[0].mxu0
      %v2221 = vpop.f32.mrb[0].mxu0
      %v2222 = vpop.f32.mrb[0].mxu0
      %2223 = vdwg.mxu0
      %v2225 = vsel %vm1256, %v2177, 0
      %v2228 = vsel %vm1284, %v2061, 0
      %2230 = vmatprep.subr.bf16.mxu0 0
      %2231 = vmatpush1.bf16.msra.mxu0 %v2228
      %2232 = vmatprep.subr.bf16.mxu0 0
      %2233 = vmatpush1.bf16.msra.mxu0 0
      %2234 = vmatprep.subr.bf16.mxu0 0
      %2235 = vmatpush1.bf16.msra.mxu0 0
      %2236 = vmatprep.subr.bf16.mxu0 0
      %2237 = vmatpush1.bf16.msra.mxu0 0
      %2238 = vmatprep.subr.bf16.mxu0 0
      %2239 = vmatpush1.bf16.msra.mxu0 0
      %2240 = vmatprep.subr.bf16.mxu0 0
      %2241 = vmatpush1.bf16.msra.mxu0 0
      %2242 = vmatprep.subr.bf16.mxu0 0
      %2243 = vmatpush1.bf16.msra.mxu0 0
      %2244 = vmatprep.subr.bf16.mxu0 0
      %2245 = vmatpush1.bf16.msra.mxu0 0
      %2246 = vmatprep.subr.bf16.mxu0 0
      %2247 = vmatpush1.bf16.msra.mxu0 0
      %2248 = vmatprep.subr.bf16.mxu0 0
      %2249 = vmatpush1.bf16.msra.mxu0 0
      %2250 = vmatprep.subr.bf16.mxu0 0
      %2251 = vmatpush1.bf16.msra.mxu0 0
      %2252 = vmatprep.subr.bf16.mxu0 0
      %2253 = vmatpush1.bf16.msra.mxu0 0
      %2254 = vmatprep.subr.bf16.mxu0 0
      %2255 = vmatpush1.bf16.msra.mxu0 0
      %2256 = vmatprep.subr.bf16.mxu0 0
      %2257 = vmatpush1.bf16.msra.mxu0 0
      %2258 = vmatprep.subr.bf16.mxu0 0
      %2259 = vmatpush1.bf16.msra.mxu0 0
      %2260 = vmatprep.subr.bf16.mxu0 0
      %2261 = vmatpush1.bf16.msra.mxu0 0
      %2262 = vmatprep.mubr.bf16.mxu0 0
      %2263 = vmatmul.mubr.bf16.gmra.mrb[0].mxu0 %v2225
      %v2264 = vpop.f32.mrb[0].mxu0
      %v2265 = vadd.f32 0.0, %v2264
      %v2266 = vpop.f32.mrb[0].mxu0
      %v2267 = vpop.f32.mrb[0].mxu0
      %v2268 = vpop.f32.mrb[0].mxu0
      %2269 = vdwg.mxu0
      %v2270 = vpack.c.bf16 %v2219, %v2219
      %v2271 = vpack.c.bf16 %v2265, %v2265
      %v2274 = vunpack.c.l.b16 %v1694
      %v2275 = vunpack.c.l.b16 %v1695
      %v2276 = vpack.c.b16 %v2275, %v2274
      %v2279 = vsel %vm1163, %v2270, 0
      %2281 = vmatprep.subr.bf16.mxu0 0
      %2282 = vmatpush1.bf16.msra.mxu0 %v2276
      %2283 = vmatprep.subr.bf16.mxu0 0
      %2284 = vmatpush1.bf16.msra.mxu0 0
      %2285 = vmatprep.subr.bf16.mxu0 0
      %2286 = vmatpush1.bf16.msra.mxu0 0
      %2287 = vmatprep.subr.bf16.mxu0 0
      %2288 = vmatpush1.bf16.msra.mxu0 0
      %2289 = vmatprep.subr.bf16.mxu0 0
      %2290 = vmatpush1.bf16.msra.mxu0 0
      %2291 = vmatprep.subr.bf16.mxu0 0
      %2292 = vmatpush1.bf16.msra.mxu0 0
      %2293 = vmatprep.subr.bf16.mxu0 0
      %2294 = vmatpush1.bf16.msra.mxu0 0
      %2295 = vmatprep.subr.bf16.mxu0 0
      %2296 = vmatpush1.bf16.msra.mxu0 0
      %2297 = vmatprep.subr.bf16.mxu0 0
      %2298 = vmatpush1.bf16.msra.mxu0 0
      %2299 = vmatprep.subr.bf16.mxu0 0
      %2300 = vmatpush1.bf16.msra.mxu0 0
      %2301 = vmatprep.subr.bf16.mxu0 0
      %2302 = vmatpush1.bf16.msra.mxu0 0
      %2303 = vmatprep.subr.bf16.mxu0 0
      %2304 = vmatpush1.bf16.msra.mxu0 0
      %2305 = vmatprep.subr.bf16.mxu0 0
      %2306 = vmatpush1.bf16.msra.mxu0 0
      %2307 = vmatprep.subr.bf16.mxu0 0
      %2308 = vmatpush1.bf16.msra.mxu0 0
      %2309 = vmatprep.subr.bf16.mxu0 0
      %2310 = vmatpush1.bf16.msra.mxu0 0
      %2311 = vmatprep.subr.bf16.mxu0 0
      %2312 = vmatpush1.bf16.msra.mxu0 0
      %2313 = vmatprep.mubr.bf16.mxu0 0
      %2314 = vmatmul.mubr.bf16.gmra.mrb[0].mxu0 %v2279
      %v2315 = vpop.f32.mrb[0].mxu0
      %v2316 = vadd.f32 0.0, %v2315
      %v2317 = vpop.f32.mrb[0].mxu0
      %v2318 = vpop.f32.mrb[0].mxu0
      %v2319 = vpop.f32.mrb[0].mxu0
      %2320 = vdwg.mxu0
      %v2323 = vunpack.c.l.b16 %v1696
      %v2324 = vunpack.c.l.b16 %v1697
      %v2325 = vpack.c.b16 %v2324, %v2323
      %v2328 = vsel %vm1163, %v2271, 0
      %2330 = vmatprep.subr.bf16.mxu0 0
      %2331 = vmatpush1.bf16.msra.mxu0 %v2325
      %2332 = vmatprep.subr.bf16.mxu0 0
      %2333 = vmatpush1.bf16.msra.mxu0 0
      %2334 = vmatprep.subr.bf16.mxu0 0
      %2335 = vmatpush1.bf16.msra.mxu0 0
      %2336 = vmatprep.subr.bf16.mxu0 0
      %2337 = vmatpush1.bf16.msra.mxu0 0
      %2338 = vmatprep.subr.bf16.mxu0 0
      %2339 = vmatpush1.bf16.msra.mxu0 0
      %2340 = vmatprep.subr.bf16.mxu0 0
      %2341 = vmatpush1.bf16.msra.mxu0 0
      %2342 = vmatprep.subr.bf16.mxu0 0
      %2343 = vmatpush1.bf16.msra.mxu0 0
      %2344 = vmatprep.subr.bf16.mxu0 0
      %2345 = vmatpush1.bf16.msra.mxu0 0
      %2346 = vmatprep.subr.bf16.mxu0 0
      %2347 = vmatpush1.bf16.msra.mxu0 0
      %2348 = vmatprep.subr.bf16.mxu0 0
      %2349 = vmatpush1.bf16.msra.mxu0 0
      %2350 = vmatprep.subr.bf16.mxu0 0
      %2351 = vmatpush1.bf16.msra.mxu0 0
      %2352 = vmatprep.subr.bf16.mxu0 0
      %2353 = vmatpush1.bf16.msra.mxu0 0
      %2354 = vmatprep.subr.bf16.mxu0 0
      %2355 = vmatpush1.bf16.msra.mxu0 0
      %2356 = vmatprep.subr.bf16.mxu0 0
      %2357 = vmatpush1.bf16.msra.mxu0 0
      %2358 = vmatprep.subr.bf16.mxu0 0
      %2359 = vmatpush1.bf16.msra.mxu0 0
      %2360 = vmatprep.subr.bf16.mxu0 0
      %2361 = vmatpush1.bf16.msra.mxu0 0
      %2362 = vmatprep.mubr.bf16.mxu0 0
      %2363 = vmatmul.mubr.bf16.gmra.mrb[0].mxu0 %v2328
      %v2364 = vpop.f32.mrb[0].mxu0
      %v2365 = vadd.f32 0.0, %v2364
      %v2366 = vpop.f32.mrb[0].mxu0
      %v2367 = vpop.f32.mrb[0].mxu0
      %v2368 = vpop.f32.mrb[0].mxu0
      %2369 = vdwg.mxu0
      %v2370 = vsel %vm770, %v2316, 0.0
      %v2371 = vsel %vm770, %v2365, 0.0
      %v2372 = vadd.f32 %v2370, %v2371
      %v2374 = vlaneseq
      %v2375 = vshrl.u32 %v2374, 7
      %v2376 = vsub.s32 0, %v2375
      %v2377 = vrot.slane %v1699, %v2376
      %v2379 = vadd.f32 %v2372, %v2377
      %v2380 = vadd.f32 %v1685, %v2379
      %v2381 = vsel %vm770, %v2380, 0.0
      %2382 = vadd.xlane.f32.xlu0 %v2381
      %v2383 = vpop.xlane.xlu0 %2382
      %v2384 = vmul.f32 %v2383, %v774
      %v2385 = vsub.f32 %v2380, %v2384
      %v2386 = vmul.f32 %v2385, %v2385
      %v2387 = vsel %vm770, %v2386, 0.0
      %2388 = vadd.xlane.f32.xlu0 %v2387
      %v2389 = vpop.xlane.xlu0 %2388
      %v2390 = vmul.f32 %v2389, %v774
      %v2391 = vadd.f32 %v2390, 1e-12
      %v2392 = vrsqrt.pop %v2391
      %v2393 = vmul.f32 %v2385, %v2392
      %v2395 = vlaneseq
      %v2396 = vshrl.u32 %v2395, 7
      %v2397 = vsub.s32 0, %v2396
      %v2398 = vrot.slane %v1701, %v2397
      %v2400 = vmul.f32 %v2393, %v2398
      %v2402 = vlaneseq
      %v2403 = vshrl.u32 %v2402, 7
      %v2404 = vsub.s32 0, %v2403
      %v2405 = vrot.slane %v1703, %v2404
      %v2407 = vadd.f32 %v2400, %v2405
      %v2408 = vpack.c.bf16 %v2407, %v2407
      %v2410 = vlaneseq
      %v2411 = vshrl.u32 %v2410, 7
      %v2412 = vsub.s32 0, %v2411
      %v2413 = vrot.slane %v1710, %v2412
      %v2419 = vunpack.c.l.b16 %v1705
      %v2420 = vunpack.c.l.b16 %v1706
      %v2421 = vunpack.c.l.b16 %v1707
      %v2422 = vunpack.c.l.b16 %v1708
      %v2423 = vpack.c.b16 %v2420, %v2419
      %v2424 = vpack.c.b16 %v2422, %v2421
      %v2428 = vsel %vm770, %v2408, 0
      %2430 = vmatprep.subr.bf16.mxu0 0
      %2431 = vmatpush1.bf16.msra.mxu0 %v2423
      %2432 = vmatprep.subr.bf16.mxu0 0
      %2433 = vmatpush1.bf16.msra.mxu0 %v2424
      %2434 = vmatprep.subr.bf16.mxu0 0
      %2435 = vmatpush1.bf16.msra.mxu0 0
      %2436 = vmatprep.subr.bf16.mxu0 0
      %2437 = vmatpush1.bf16.msra.mxu0 0
      %2438 = vmatprep.subr.bf16.mxu0 0
      %2439 = vmatpush1.bf16.msra.mxu0 0
      %2440 = vmatprep.subr.bf16.mxu0 0
      %2441 = vmatpush1.bf16.msra.mxu0 0
      %2442 = vmatprep.subr.bf16.mxu0 0
      %2443 = vmatpush1.bf16.msra.mxu0 0
      %2444 = vmatprep.subr.bf16.mxu0 0
      %2445 = vmatpush1.bf16.msra.mxu0 0
      %2446 = vmatprep.subr.bf16.mxu0 0
      %2447 = vmatpush1.bf16.msra.mxu0 0
      %2448 = vmatprep.subr.bf16.mxu0 0
      %2449 = vmatpush1.bf16.msra.mxu0 0
      %2450 = vmatprep.subr.bf16.mxu0 0
      %2451 = vmatpush1.bf16.msra.mxu0 0
      %2452 = vmatprep.subr.bf16.mxu0 0
      %2453 = vmatpush1.bf16.msra.mxu0 0
      %2454 = vmatprep.subr.bf16.mxu0 0
      %2455 = vmatpush1.bf16.msra.mxu0 0
      %2456 = vmatprep.subr.bf16.mxu0 0
      %2457 = vmatpush1.bf16.msra.mxu0 0
      %2458 = vmatprep.subr.bf16.mxu0 0
      %2459 = vmatpush1.bf16.msra.mxu0 0
      %2460 = vmatprep.subr.bf16.mxu0 0
      %2461 = vmatpush1.bf16.msra.mxu0 0
      %2462 = vmatprep.mubr.bf16.mxu0 0
      %2463 = vmatmul.mubr.bf16.gmra.mrb[0].mxu0 %v2428
      %v2464 = vpop.f32.mrb[0].mxu0
      %v2465 = vadd.f32 %v2413, %v2464
      %v2466 = vpop.f32.mrb[0].mxu0
      %v2467 = vpop.f32.mrb[0].mxu0
      %v2468 = vpop.f32.mrb[0].mxu0
      %2469 = vdwg.mxu0
      %v2470 = vmul.f32 %v2465, 0.5
      %v2471 = vmul.f32 %v2465, 0.044715
      %v2472 = vmul.f32 %v2471, %v2465
      %v2473 = vmul.f32 %v2472, %v2465
      %v2474 = vadd.f32 %v2465, %v2473
      %v2475 = vmul.f32 %v2474, 0.7978846
      %v2476 = vtanh.pop %v2475
      %v2477 = vadd.f32 %v2476, 1.0
      %v2478 = vmul.f32 %v2470, %v2477
      %v2479 = vpack.c.bf16 %v2478, %v2478
      %v2481 = vlaneseq
      %v2482 = vshrl.u32 %v2481, 7
      %v2483 = vsub.s32 0, %v2482
      %v2484 = vrot.slane %v1721, %v2483
      %v2494 = vunpack.c.l.b16 %v1712
      %v2495 = vunpack.c.l.b16 %v1713
      %v2496 = vunpack.c.l.b16 %v1714
      %v2497 = vunpack.c.l.b16 %v1715
      %v2498 = vunpack.c.l.b16 %v1716
      %v2499 = vunpack.c.l.b16 %v1717
      %v2500 = vunpack.c.l.b16 %v1718
      %v2501 = vunpack.c.l.b16 %v1719
      %v2502 = vpack.c.b16 %v2495, %v2494
      %v2503 = vpack.c.b16 %v2497, %v2496
      %v2504 = vpack.c.b16 %v2499, %v2498
      %v2505 = vpack.c.b16 %v2501, %v2500
      %v2511 = vsel %vm1614, %v2479, 0
      %2513 = vmatprep.subr.bf16.mxu0 0
      %2514 = vmatpush1.bf16.msra.mxu0 %v2502
      %2515 = vmatprep.subr.bf16.mxu0 0
      %2516 = vmatpush1.bf16.msra.mxu0 %v2503
      %2517 = vmatprep.subr.bf16.mxu0 0
      %2518 = vmatpush1.bf16.msra.mxu0 %v2504
      %2519 = vmatprep.subr.bf16.mxu0 0
      %2520 = vmatpush1.bf16.msra.mxu0 %v2505
      %2521 = vmatprep.subr.bf16.mxu0 0
      %2522 = vmatpush1.bf16.msra.mxu0 0
      %2523 = vmatprep.subr.bf16.mxu0 0
      %2524 = vmatpush1.bf16.msra.mxu0 0
      %2525 = vmatprep.subr.bf16.mxu0 0
      %2526 = vmatpush1.bf16.msra.mxu0 0
      %2527 = vmatprep.subr.bf16.mxu0 0
      %2528 = vmatpush1.bf16.msra.mxu0 0
      %2529 = vmatprep.subr.bf16.mxu0 0
      %2530 = vmatpush1.bf16.msra.mxu0 0
      %2531 = vmatprep.subr.bf16.mxu0 0
      %2532 = vmatpush1.bf16.msra.mxu0 0
      %2533 = vmatprep.subr.bf16.mxu0 0
      %2534 = vmatpush1.bf16.msra.mxu0 0
      %2535 = vmatprep.subr.bf16.mxu0 0
      %2536 = vmatpush1.bf16.msra.mxu0 0
      %2537 = vmatprep.subr.bf16.mxu0 0
      %2538 = vmatpush1.bf16.msra.mxu0 0
      %2539 = vmatprep.subr.bf16.mxu0 0
      %2540 = vmatpush1.bf16.msra.mxu0 0
      %2541 = vmatprep.subr.bf16.mxu0 0
      %2542 = vmatpush1.bf16.msra.mxu0 0
      %2543 = vmatprep.subr.bf16.mxu0 0
      %2544 = vmatpush1.bf16.msra.mxu0 0
      %2545 = vmatprep.mubr.bf16.mxu0 0
      %2546 = vmatmul.mubr.bf16.gmra.mrb[0].mxu0 %v2511
      %v2547 = vpop.f32.mrb[0].mxu0
      %v2548 = vadd.f32 %v2484, %v2547
      %v2549 = vpop.f32.mrb[0].mxu0
      %v2550 = vpop.f32.mrb[0].mxu0
      %v2551 = vpop.f32.mrb[0].mxu0
      %2552 = vdwg.mxu0
      %v2553 = vadd.f32 %v2407, %v2548
      %v2554 = vsel %vm770, %v2553, 0.0
      %2555 = vadd.xlane.f32.xlu0 %v2554
      %v2556 = vpop.xlane.xlu0 %2555
      %v2557 = vmul.f32 %v2556, %v774
      %v2558 = vsub.f32 %v2553, %v2557
      %v2559 = vmul.f32 %v2558, %v2558
      %v2560 = vsel %vm770, %v2559, 0.0
      %2561 = vadd.xlane.f32.xlu0 %v2560
      %v2562 = vpop.xlane.xlu0 %2561
      %v2563 = vmul.f32 %v2562, %v774
      %v2564 = vadd.f32 %v2563, 1e-12
      %v2565 = vrsqrt.pop %v2564
      %v2566 = vmul.f32 %v2558, %v2565
      %v2568 = vlaneseq
      %v2569 = vshrl.u32 %v2568, 7
      %v2570 = vsub.s32 0, %v2569
      %v2571 = vrot.slane %v1723, %v2570
      %v2573 = vmul.f32 %v2566, %v2571
      %v2575 = vlaneseq
      %v2576 = vshrl.u32 %v2575, 7
      %v2577 = vsub.s32 0, %v2576
      %v2578 = vrot.slane %v1725, %v2577
      %v2580 = vadd.f32 %v2573, %v2578
      %v2581 = vpack.c.bf16 %v2580, %v2580
      %v2582 = vld [vmem:[%s17] sm:$0xf]
      %v2583 = vld [vmem:[%s17 + $0x4] sm:$0xf]
      %v2584 = vld [vmem:[%s17 + $0x8] sm:$0xf]
      %v2585 = vld [vmem:[%s17 + $0xc] sm:$0xf]
      %v2586 = vld [vmem:[%s18] sm:$0x1]
      %v2588 = vlaneseq
      %v2589 = vshrl.u32 %v2588, 7
      %v2590 = vsub.s32 0, %v2589
      %v2591 = vrot.slane %v2586, %v2590
      %v2597 = vunpack.c.l.b16 %v2582
      %v2598 = vunpack.c.l.b16 %v2583
      %v2599 = vunpack.c.l.b16 %v2584
      %v2600 = vunpack.c.l.b16 %v2585
      %v2601 = vpack.c.b16 %v2598, %v2597
      %v2602 = vpack.c.b16 %v2600, %v2599
      %v2606 = vsel %vm770, %v2581, 0
      %2608 = vmatprep.subr.bf16.mxu0 0
      %2609 = vmatpush1.bf16.msra.mxu0 %v2601
      %2610 = vmatprep.subr.bf16.mxu0 0
      %2611 = vmatpush1.bf16.msra.mxu0 %v2602
      %2612 = vmatprep.subr.bf16.mxu0 0
      %2613 = vmatpush1.bf16.msra.mxu0 0
      %2614 = vmatprep.subr.bf16.mxu0 0
      %2615 = vmatpush1.bf16.msra.mxu0 0
      %2616 = vmatprep.subr.bf16.mxu0 0
      %2617 = vmatpush1.bf16.msra.mxu0 0
      %2618 = vmatprep.subr.bf16.mxu0 0
      %2619 = vmatpush1.bf16.msra.mxu0 0
      %2620 = vmatprep.subr.bf16.mxu0 0
      %2621 = vmatpush1.bf16.msra.mxu0 0
      %2622 = vmatprep.subr.bf16.mxu0 0
      %2623 = vmatpush1.bf16.msra.mxu0 0
      %2624 = vmatprep.subr.bf16.mxu0 0
      %2625 = vmatpush1.bf16.msra.mxu0 0
      %2626 = vmatprep.subr.bf16.mxu0 0
      %2627 = vmatpush1.bf16.msra.mxu0 0
      %2628 = vmatprep.subr.bf16.mxu0 0
      %2629 = vmatpush1.bf16.msra.mxu0 0
      %2630 = vmatprep.subr.bf16.mxu0 0
      %2631 = vmatpush1.bf16.msra.mxu0 0
      %2632 = vmatprep.subr.bf16.mxu0 0
      %2633 = vmatpush1.bf16.msra.mxu0 0
      %2634 = vmatprep.subr.bf16.mxu0 0
      %2635 = vmatpush1.bf16.msra.mxu0 0
      %2636 = vmatprep.subr.bf16.mxu0 0
      %2637 = vmatpush1.bf16.msra.mxu0 0
      %2638 = vmatprep.subr.bf16.mxu0 0
      %2639 = vmatpush1.bf16.msra.mxu0 0
      %2640 = vmatprep.mubr.bf16.mxu0 0
      %2641 = vmatmul.mubr.bf16.gmra.mrb[0].mxu0 %v2606
      %v2642 = vpop.f32.mrb[0].mxu0
      %v2643 = vadd.f32 %v2591, %v2642
      %v2644 = vpop.f32.mrb[0].mxu0
      %v2645 = vpop.f32.mrb[0].mxu0
      %v2646 = vpop.f32.mrb[0].mxu0
      %2647 = vdwg.mxu0
      %v2648 = vtanh.pop %v2643
      %v2649 = vpack.c.bf16 %v2648, %v2648
      %v2650 = vld [vmem:[%s19] sm:$0xf]
      %v2651 = vld [vmem:[%s19 + $0x4] sm:$0xf]
      %v2652 = vld [vmem:[%s19 + $0x8] sm:$0xf]
      %v2653 = vld [vmem:[%s19 + $0xc] sm:$0xf]
      %v2654 = vld [vmem:[%s20] sm:$0x1]
      %v2656 = vlaneseq
      %v2657 = vshrl.u32 %v2656, 7
      %v2658 = vsub.s32 0, %v2657
      %v2659 = vrot.slane %v2654, %v2658
      %v2665 = vunpack.c.l.b16 %v2650
      %v2666 = vunpack.c.l.b16 %v2651
      %v2667 = vunpack.c.l.b16 %v2652
      %v2668 = vunpack.c.l.b16 %v2653
      %v2669 = vpack.c.b16 %v2666, %v2665
      %v2670 = vpack.c.b16 %v2668, %v2667
      %v2674 = vsel %vm770, %v2649, 0
      %2676 = vmatprep.subr.bf16.mxu0 0
      %2677 = vmatpush1.bf16.msra.mxu0 %v2669
      %2678 = vmatprep.subr.bf16.mxu0 0
      %2679 = vmatpush1.bf16.msra.mxu0 %v2670
      %2680 = vmatprep.subr.bf16.mxu0 0
      %2681 = vmatpush1.bf16.msra.mxu0 0
      %2682 = vmatprep.subr.bf16.mxu0 0
      %2683 = vmatpush1.bf16.msra.mxu0 0
      %2684 = vmatprep.subr.bf16.mxu0 0
      %2685 = vmatpush1.bf16.msra.mxu0 0
      %2686 = vmatprep.subr.bf16.mxu0 0
      %2687 = vmatpush1.bf16.msra.mxu0 0
      %2688 = vmatprep.subr.bf16.mxu0 0
      %2689 = vmatpush1.bf16.msra.mxu0 0
      %2690 = vmatprep.subr.bf16.mxu0 0
      %2691 = vmatpush1.bf16.msra.mxu0 0
      %2692 = vmatprep.subr.bf16.mxu0 0
      %2693 = vmatpush1.bf16.msra.mxu0 0
      %2694 = vmatprep.subr.bf16.mxu0 0
      %2695 = vmatpush1.bf16.msra.mxu0 0
      %2696 = vmatprep.subr.bf16.mxu0 0
      %2697 = vmatpush1.bf16.msra.mxu0 0
      %2698 = vmatprep.subr.bf16.mxu0 0
      %2699 = vmatpush1.bf16.msra.mxu0 0
      %2700 = vmatprep.subr.bf16.mxu0 0
      %2701 = vmatpush1.bf16.msra.mxu0 0
      %2702 = vmatprep.subr.bf16.mxu0 0
      %2703 = vmatpush1.bf16.msra.mxu0 0
      %2704 = vmatprep.subr.bf16.mxu0 0
      %2705 = vmatpush1.bf16.msra.mxu0 0
      %2706 = vmatprep.subr.bf16.mxu0 0
      %2707 = vmatpush1.bf16.msra.mxu0 0
      %2708 = vmatprep.mubr.bf16.mxu0 0
      %2709 = vmatmul.mubr.bf16.gmra.mrb[0].mxu0 %v2674
      %v2710 = vpop.f32.mrb[0].mxu0
      %v2711 = vadd.f32 %v2659, %v2710
      %v2712 = vpop.f32.mrb[0].mxu0
      %v2713 = vpop.f32.mrb[0].mxu0
      %v2714 = vpop.f32.mrb[0].mxu0
      %2715 = vdwg.mxu0
      %2716 = vst [vmem:[%s651] sm:$0xff] %v2711
      %p2717 = scmp.lt.s32.totalorder %s32, 1
      %s2718 = scalar_select %p2717, %s32, 1
      %s2719 = smul.addr %s2718, 8
      %s2720 = scalar_lea.vmem %s21, %s2719
      // Predicated region
      $region105: #{forward.1} parent=103 // pred_check
        %p2721 = pneg %p496
      $region106: #{forward.1} parent=103 // pred_check_branch
        %2723 = sbr.rel (%p2721) target = $region108
      $region107: #{forward.1} parent=103 // pred_region
        _
      $region108: #{forward.1} parent=103 // pred_fallthru
        _
    $region104: #{forward.1} parent=5 // pred_fallthru
      _
    %p2724 = scmp.le.s32.totalorder 2, %s27
    // Predicated region
    $region109: #{forward.1} parent=5 // pred_check
      %p2725 = pneg %p2724
    $region110: #{forward.1} parent=5 // pred_check_branch
      %2727 = sbr.rel (%p2725) target = $region112
    $region111: #{forward.1} parent=5 // pred_region
      %s2728 = ssub.s32 %s27, 2
      // Predicated region
      $region113: #{forward.1} parent=111 // pred_check
        %p2729 = pneg %p502
      $region114: #{forward.1} parent=111 // pred_check_branch
        %2731 = sbr.rel (%p2729) target = $region116
      $region115: #{forward.1} parent=111 // pred_region
        %p2732 = scmp.lt.s32.totalorder %s33, 1
        %s2733 = scalar_select %p2732, %s33, 1
        %s2734 = smul.addr %s2733, 8
        %s2735 = scalar_lea.vmem %s21, %s2734
      $region116: #{forward.1} parent=111 // pred_fallthru
        _
    $region112: #{forward.1} parent=5 // pred_fallthru
      _
  $region6: #{forward.1} parent=0 // loop_footer
    %s31 = sadd.s32 1, %s27
  $region7: #{forward.1} parent=0 // loop_footer_branch
    %26 = sbr.rel target = $region3
  $region8: #{forward.1} parent=0 // loop_exit
    _

</llo_original>
